<compile_context>
chip_gen: v7x
topology: tpu7x:2x2x1
jax: 0.10.0
libtpu: 0.0.40
codegen_flags: <defaults>
</compile_context>

<pallas_src>
import math

import jax
import jax.numpy as jnp
from jax.experimental import pallas as pl
from jax.experimental.pallas import tpu as pltpu

# ---------------- model hyperparameters (small, synthetic) ----------------
B = 2          # batch
S = 8          # sequence length
D_MODEL = 32   # d_model
D_K = 8        # per-head query/key dim
D_V = 8        # per-head value dim
N_HEADS = 4    # n_heads
D_HIDDEN = 64  # FFN hidden dim (d_hidden)
N_LAYERS = 2   # N encoder layers
LN_EPS = 1e-5  # PyTorch nn.LayerNorm default

BS = B * S
HDK = N_HEADS * D_K            # 32
HDV = N_HEADS * D_V            # 32
QKV_W = 3 * HDK                # 96  (fused QKV output width)

# Offsets inside the fused per-layer "vector" parameter blob.
OFF_BQKV = 0
OFF_BO = OFF_BQKV + QKV_W          # 96
OFF_LN1G = OFF_BO + D_MODEL        # 128
OFF_LN1B = OFF_LN1G + D_MODEL      # 160
OFF_B1 = OFF_LN1B + D_MODEL        # 192
OFF_B2 = OFF_B1 + D_HIDDEN         # 256
OFF_LN2G = OFF_B2 + D_MODEL        # 288
OFF_LN2B = OFF_LN2G + D_MODEL      # 320
VEC_LEN = OFF_LN2B + D_MODEL       # 352


# --------------------------- Pallas kernel --------------------------------
def encoder_kernel(x_ref, bias_ref, wqkv_ref, wo_ref, w1_ref, w2_ref, vec_ref,
                   out_ref, qkv_s, ctx_s):
    """Whole encoder (all layers, whole batch) in one invocation.

    Shapes seen by the kernel (all VMEM, full arrays, no grid):
      x_ref    : (B*S, D_MODEL)
      bias_ref : (B*S, B*S)  additive attention bias (0 keep / -1e9 masked,
                             block-diagonal over the batch)
      wqkv_ref : (N_LAYERS, D_MODEL, 3*N_HEADS*D_K)
      wo_ref   : (N_LAYERS, N_HEADS*D_V, D_MODEL)
      w1_ref   : (N_LAYERS, D_MODEL, D_HIDDEN)
      w2_ref   : (N_LAYERS, D_HIDDEN, D_MODEL)
      vec_ref  : (N_LAYERS, 1, VEC_LEN)   fused biases + LayerNorm params
      out_ref  : (B*S, D_MODEL)
      qkv_s    : VMEM scratch (B*S, 3*N_HEADS*D_K)
      ctx_s    : VMEM scratch (B*S, N_HEADS*D_V)
    """
    x = x_ref[...]                 # (BS, D_MODEL) running activation
    bias = bias_ref[...]           # (BS, BS)
    scale = jnp.float32(1.0 / math.sqrt(D_K))

    for l in range(N_LAYERS):      # static unroll (N_LAYERS = 2)
        # fused bias / LayerNorm parameter slices (static ref slices -> cheap)
        bqkv = vec_ref[l, :, OFF_BQKV:OFF_BQKV + QKV_W]     # (1, 96)
        bo = vec_ref[l, :, OFF_BO:OFF_BO + D_MODEL]         # (1, 32)
        ln1g = vec_ref[l, :, OFF_LN1G:OFF_LN1G + D_MODEL]
        ln1b = vec_ref[l, :, OFF_LN1B:OFF_LN1B + D_MODEL]
        b1 = vec_ref[l, :, OFF_B1:OFF_B1 + D_HIDDEN]        # (1, 64)
        b2 = vec_ref[l, :, OFF_B2:OFF_B2 + D_MODEL]
        ln2g = vec_ref[l, :, OFF_LN2G:OFF_LN2G + D_MODEL]
        ln2b = vec_ref[l, :, OFF_LN2B:OFF_LN2B + D_MODEL]

        # ---------------- multi-head self-attention -----------------------
        # fused Q/K/V projection: ONE GEMM (BS, D) @ (D, 3*H*D_K)
        qkv_s[...] = (jnp.dot(x, wqkv_ref[l],
                              preferred_element_type=jnp.float32) + bqkv)

        for hd in range(N_HEADS):  # static unroll over heads (scores only)
            q = qkv_s[:, hd * D_K:(hd + 1) * D_K]                       # (BS, D_K)
            k = qkv_s[:, HDK + hd * D_K:HDK + (hd + 1) * D_K]           # (BS, D_K)
            v = qkv_s[:, 2 * HDK + hd * D_V:2 * HDK + (hd + 1) * D_V]   # (BS, D_V)

            s = jnp.dot(q, k.T, preferred_element_type=jnp.float32) * scale
            s = s + bias                                                # (BS, BS)

            m = jnp.max(s, axis=-1, keepdims=True)
            p = jnp.exp(s - m)
            p = p * pl.reciprocal(jnp.sum(p, axis=-1, keepdims=True),
                                  approx=True)

            # concatenated-heads context lives in VMEM scratch
            ctx_s[:, hd * D_V:(hd + 1) * D_V] = jnp.dot(
                p, v, preferred_element_type=jnp.float32)

        # output projection: ONE GEMM over the concatenated heads
        attn = jnp.dot(ctx_s[...], wo_ref[l],
                       preferred_element_type=jnp.float32) + bo

        # residual + LayerNorm 1 (dropout == identity in eval)
        y = x + attn
        mu1 = jnp.mean(y, axis=-1, keepdims=True)
        var1 = jnp.mean(jnp.square(y - mu1), axis=-1, keepdims=True)
        y = (y - mu1) * jax.lax.rsqrt(var1 + LN_EPS) * ln1g + ln1b

        # ---------------- position-wise feed-forward ----------------------
        h1 = jnp.dot(y, w1_ref[l], preferred_element_type=jnp.float32) + b1
        h1 = jnp.maximum(h1, 0.0)  # ReLU
        ffn = jnp.dot(h1, w2_ref[l], preferred_element_type=jnp.float32) + b2

        # residual + LayerNorm 2
        z = y + ffn
        mu2 = jnp.mean(z, axis=-1, keepdims=True)
        var2 = jnp.mean(jnp.square(z - mu2), axis=-1, keepdims=True)
        x = (z - mu2) * jax.lax.rsqrt(var2 + LN_EPS) * ln2g + ln2b

    out_ref[...] = x.astype(out_ref.dtype)


# ----------------------------- wrapper -------------------------------------
def build_attn_bias(src_mask):
    """(B,S,S) 1/0 mask -> (B*S, B*S) additive bias, block-diagonal over batch."""
    same_batch = (jnp.arange(B)[:, None, None, None]
                  == jnp.arange(B)[None, None, :, None])          # (B,1,B,1)
    keep = jnp.logical_and(same_batch, src_mask[:, :, None, :] > 0)  # (B,S,B,S)
    bias = jnp.where(keep, 0.0, -1e9).astype(jnp.float32)
    return bias.reshape(BS, BS)


def encoder_forward(x, src_mask, fused):
    """Full Encoder.forward (all N layers) in a single pallas_call."""
    x2 = x.reshape(BS, D_MODEL).astype(jnp.float32)
    bias = build_attn_bias(src_mask)

    vmem = pltpu.MemorySpace.VMEM
    out = pl.pallas_call(
        encoder_kernel,
        out_shape=jax.ShapeDtypeStruct((BS, D_MODEL), jnp.float32),
        in_specs=[pl.BlockSpec(memory_space=vmem)] * 7,
        out_specs=pl.BlockSpec(memory_space=vmem),
        scratch_shapes=[
            pltpu.VMEM((BS, QKV_W), jnp.float32),   # fused QKV activations
            pltpu.VMEM((BS, HDV), jnp.float32),     # concatenated head contexts
        ],
    )(x2, bias, fused["wqkv"], fused["wo"], fused["w1"], fused["w2"],
      fused["vec"])
    return out.reshape(B, S, D_MODEL)


# --------------------- deterministic parameter init ------------------------
def init_layer_params(key):
    ks = jax.random.split(key, 8)

    def lin(k, fan_in, shape):
        bound = 1.0 / math.sqrt(fan_in)
        return jax.random.uniform(k, shape, jnp.float32, -bound, bound)

    return {
        # per-head projection weights (head-major), same init scheme as before
        "wq": lin(ks[0], D_MODEL, (N_HEADS, D_MODEL, D_K)),
        "bq": lin(ks[0], D_MODEL, (N_HEADS, 1, D_K)),
        "wk": lin(ks[1], D_MODEL, (N_HEADS, D_MODEL, D_K)),
        "bk": lin(ks[1], D_MODEL, (N_HEADS, 1, D_K)),
        "wv": lin(ks[2], D_MODEL, (N_HEADS, D_MODEL, D_V)),
        "bv": lin(ks[2], D_MODEL, (N_HEADS, 1, D_V)),
        "wo": lin(ks[3], N_HEADS * D_V, (N_HEADS, D_V, D_MODEL)),
        "bo": lin(ks[3], N_HEADS * D_V, (1, D_MODEL)),
        # LayerNorms (PyTorch default: weight=1, bias=0)
        "ln1_g": jnp.ones((1, D_MODEL), jnp.float32),
        "ln1_b": jnp.zeros((1, D_MODEL), jnp.float32),
        "ln2_g": jnp.ones((1, D_MODEL), jnp.float32),
        "ln2_b": jnp.zeros((1, D_MODEL), jnp.float32),
        # FFN
        "w1": lin(ks[4], D_MODEL, (D_MODEL, D_HIDDEN)),
        "b1": lin(ks[5], D_MODEL, (1, D_HIDDEN)),
        "w2": lin(ks[6], D_HIDDEN, (D_HIDDEN, D_MODEL)),
        "b2": lin(ks[7], D_HIDDEN, (1, D_MODEL)),
    }


def fuse_params(per_layer):
    """Concatenate per-head weights & all small vectors, stack over layers."""
    def fuse_one(p):
        wq = jnp.concatenate([p["wq"][h] for h in range(N_HEADS)], axis=-1)
        wk = jnp.concatenate([p["wk"][h] for h in range(N_HEADS)], axis=-1)
        wv = jnp.concatenate([p["wv"][h] for h in range(N_HEADS)], axis=-1)
        wqkv = jnp.concatenate([wq, wk, wv], axis=-1)              # (D, 3*H*D_K)

        bq = jnp.concatenate([p["bq"][h] for h in range(N_HEADS)], axis=-1)
        bk = jnp.concatenate([p["bk"][h] for h in range(N_HEADS)], axis=-1)
        bv = jnp.concatenate([p["bv"][h] for h in range(N_HEADS)], axis=-1)
        bqkv = jnp.concatenate([bq, bk, bv], axis=-1)              # (1, 96)

        wo = jnp.concatenate([p["wo"][h] for h in range(N_HEADS)], axis=0)  # (H*D_V, D)

        vec = jnp.concatenate(
            [bqkv, p["bo"], p["ln1_g"], p["ln1_b"], p["b1"], p["b2"],
             p["ln2_g"], p["ln2_b"]], axis=-1)                     # (1, VEC_LEN)
        assert vec.shape == (1, VEC_LEN)
        return wqkv, wo, p["w1"], p["w2"], vec

    parts = [fuse_one(p) for p in per_layer]
    return {
        "wqkv": jnp.stack([q[0] for q in parts]),   # (L, 32, 96)
        "wo":   jnp.stack([q[1] for q in parts]),   # (L, 32, 32)
        "w1":   jnp.stack([q[2] for q in parts]),   # (L, 32, 64)
        "w2":   jnp.stack([q[3] for q in parts]),   # (L, 64, 32)
        "vec":  jnp.stack([q[4] for q in parts]),   # (L, 1, 352)
    }


if __name__ == "__main__":
    key = jax.random.PRNGKey(0)
    k_x, k_p = jax.random.split(key)

    # input activations [B, S, D_MODEL]
    x = jax.random.normal(k_x, (B, S, D_MODEL), jnp.float32)

    # src_mask [B, S, S]: batch 0 attends to all 8 keys, batch 1 to first 6.
    valid_len = jnp.array([8, 6], jnp.int32)
    key_idx = jnp.arange(S)[None, None, :]                      # (1,1,S)
    src_mask = (key_idx < valid_len[:, None, None]).astype(jnp.float32)
    src_mask = jnp.broadcast_to(src_mask, (B, S, S))

    # N deterministic encoder layers (PyTorch deepcopies one layer, so all
    # layers share initial weights — replicate by reusing one key).
    layer_key = jax.random.fold_in(k_p, 0)
    per_layer = [init_layer_params(layer_key) for _ in range(N_LAYERS)]
    fused = fuse_params(per_layer)

    out = encoder_forward(x, src_mask, fused)
    jax.block_until_ready(out)
    assert out.shape == (B, S, D_MODEL)
    assert bool(jnp.all(jnp.isfinite(out)))
    print("KERNEL_OK")
</pallas_src>

<mosaic_0001>
module attributes {stable_mosaic.version = 11 : i64} {
  func.func @encoder_kernel(%arg0: memref<16x32xf32, #tpu.memory_space<vmem>>, %arg1: memref<16x16xf32, #tpu.memory_space<vmem>>, %arg2: memref<2x32x96xf32, #tpu.memory_space<vmem>>, %arg3: memref<2x32x32xf32, #tpu.memory_space<vmem>>, %arg4: memref<2x32x64xf32, #tpu.memory_space<vmem>>, %arg5: memref<2x64x32xf32, #tpu.memory_space<vmem>>, %arg6: memref<2x1x352xf32, #tpu.memory_space<vmem>>, %arg7: memref<16x32xf32, #tpu.memory_space<vmem>>, %arg8: memref<16x96xf32, #tpu.memory_space<vmem>>, %arg9: memref<16x32xf32, #tpu.memory_space<vmem>>) attributes {dimension_semantics = [], scalar_prefetch = 0 : i64, scratch_operands = 2 : i64, tpu.core_type = #tpu.core_type<tc>} {
    %c0 = arith.constant 0 : index
    %c0_0 = arith.constant 0 : index
    %0 = vector.load %arg0[%c0, %c0_0] : memref<16x32xf32, #tpu.memory_space<vmem>>, vector<16x32xf32>
    %c0_1 = arith.constant 0 : index
    %c0_2 = arith.constant 0 : index
    %1 = vector.load %arg1[%c0_1, %c0_2] : memref<16x16xf32, #tpu.memory_space<vmem>>, vector<16x16xf32>
    %c0_3 = arith.constant 0 : index
    %c0_4 = arith.constant 0 : index
    %c0_5 = arith.constant 0 : index
    %2 = vector.load %arg6[%c0_3, %c0_4, %c0_5] : memref<2x1x352xf32, #tpu.memory_space<vmem>>, vector<1x1x96xf32>
    %3 = vector.shape_cast %2 : vector<1x1x96xf32> to vector<1x96xf32>
    %c0_6 = arith.constant 0 : index
    %c0_7 = arith.constant 0 : index
    %c96 = arith.constant 96 : index
    %4 = vector.load %arg6[%c0_6, %c0_7, %c96] : memref<2x1x352xf32, #tpu.memory_space<vmem>>, vector<1x1x32xf32>
    %5 = vector.shape_cast %4 : vector<1x1x32xf32> to vector<1x32xf32>
    %c0_8 = arith.constant 0 : index
    %c0_9 = arith.constant 0 : index
    %c128 = arith.constant 128 : index
    %6 = vector.load %arg6[%c0_8, %c0_9, %c128] : memref<2x1x352xf32, #tpu.memory_space<vmem>>, vector<1x1x32xf32>
    %7 = vector.shape_cast %6 : vector<1x1x32xf32> to vector<1x32xf32>
    %c0_10 = arith.constant 0 : index
    %c0_11 = arith.constant 0 : index
    %c160 = arith.constant 160 : index
    %8 = vector.load %arg6[%c0_10, %c0_11, %c160] : memref<2x1x352xf32, #tpu.memory_space<vmem>>, vector<1x1x32xf32>
    %9 = vector.shape_cast %8 : vector<1x1x32xf32> to vector<1x32xf32>
    %c0_12 = arith.constant 0 : index
    %c0_13 = arith.constant 0 : index
    %c192 = arith.constant 192 : index
    %10 = vector.load %arg6[%c0_12, %c0_13, %c192] : memref<2x1x352xf32, #tpu.memory_space<vmem>>, vector<1x1x64xf32>
    %11 = vector.shape_cast %10 : vector<1x1x64xf32> to vector<1x64xf32>
    %c0_14 = arith.constant 0 : index
    %c0_15 = arith.constant 0 : index
    %c256 = arith.constant 256 : index
    %12 = vector.load %arg6[%c0_14, %c0_15, %c256] : memref<2x1x352xf32, #tpu.memory_space<vmem>>, vector<1x1x32xf32>
    %13 = vector.shape_cast %12 : vector<1x1x32xf32> to vector<1x32xf32>
    %c0_16 = arith.constant 0 : index
    %c0_17 = arith.constant 0 : index
    %c288 = arith.constant 288 : index
    %14 = vector.load %arg6[%c0_16, %c0_17, %c288] : memref<2x1x352xf32, #tpu.memory_space<vmem>>, vector<1x1x32xf32>
    %15 = vector.shape_cast %14 : vector<1x1x32xf32> to vector<1x32xf32>
    %c0_18 = arith.constant 0 : index
    %c0_19 = arith.constant 0 : index
    %c320 = arith.constant 320 : index
    %16 = vector.load %arg6[%c0_18, %c0_19, %c320] : memref<2x1x352xf32, #tpu.memory_space<vmem>>, vector<1x1x32xf32>
    %17 = vector.shape_cast %16 : vector<1x1x32xf32> to vector<1x32xf32>
    %c0_20 = arith.constant 0 : index
    %c0_21 = arith.constant 0 : index
    %c0_22 = arith.constant 0 : index
    %18 = vector.load %arg2[%c0_20, %c0_21, %c0_22] : memref<2x32x96xf32, #tpu.memory_space<vmem>>, vector<1x32x96xf32>
    %19 = vector.shape_cast %18 : vector<1x32x96xf32> to vector<32x96xf32>
    %cst = arith.constant dense<0.000000e+00> : vector<16x96xf32>
    %20 = tpu.matmul %0, %19, %cst {dimension_numbers = #tpu.dot_dimension_numbers<[1], [0], [0], [1], [0, 0, 1, 1], [], []>} : vector<16x32xf32>, vector<32x96xf32>, vector<16x96xf32> -> vector<16x96xf32>
    %21 = vector.broadcast %3 : vector<1x96xf32> to vector<16x96xf32>
    %22 = arith.addf %20, %21 : vector<16x96xf32>
    %c0_23 = arith.constant 0 : index
    %c0_24 = arith.constant 0 : index
    %23 = vector.load %arg8[%c0_23, %c0_24] : memref<16x96xf32, #tpu.memory_space<vmem>>, vector<16x96xf32>
    tpu.vector_store %arg8[%c0_23, %c0_24], %22 {strides = array<i32>} : memref<16x96xf32, #tpu.memory_space<vmem>>, vector<16x96xf32>,
    %c0_25 = arith.constant 0 : index
    %c0_26 = arith.constant 0 : index
    %24 = vector.load %arg8[%c0_25, %c0_26] : memref<16x96xf32, #tpu.memory_space<vmem>>, vector<16x8xf32>
    %c0_27 = arith.constant 0 : index
    %c32 = arith.constant 32 : index
    %25 = vector.load %arg8[%c0_27, %c32] : memref<16x96xf32, #tpu.memory_space<vmem>>, vector<16x8xf32>
    %c0_28 = arith.constant 0 : index
    %c64 = arith.constant 64 : index
    %26 = vector.load %arg8[%c0_28, %c64] : memref<16x96xf32, #tpu.memory_space<vmem>>, vector<16x8xf32>
    %27 = tpu.transpose %25, [1, 0] : vector<16x8xf32> -> vector<8x16xf32>
    %cst_29 = arith.constant dense<0.000000e+00> : vector<16x16xf32>
    %28 = tpu.matmul %24, %27, %cst_29 {dimension_numbers = #tpu.dot_dimension_numbers<[1], [0], [0], [1], [0, 0, 1, 1], [], []>} : vector<16x8xf32>, vector<8x16xf32>, vector<16x16xf32> -> vector<16x16xf32>
    %cst_30 = arith.constant 0.353553385 : f32
    %29 = vector.broadcast %cst_30 : f32 to vector<16x16xf32>
    %30 = arith.mulf %28, %29 : vector<16x16xf32>
    %31 = arith.addf %30, %1 : vector<16x16xf32>
    %cst_31 = arith.constant dense<0xFF800000> : vector<16xf32>
    %32 = vector.multi_reduction <maximumf>, %31, %cst_31 [1] : vector<16x16xf32> to vector<16xf32>
    %33 = vector.shape_cast %32 : vector<16xf32> to vector<16x1xf32>
    %34 = vector.broadcast %33 : vector<16x1xf32> to vector<16x16xf32>
    %35 = arith.subf %31, %34 : vector<16x16xf32>
    %36 = math.exp %35 : vector<16x16xf32>
    %cst_32 = arith.constant dense<0.000000e+00> : vector<16xf32>
    %37 = vector.multi_reduction <add>, %36, %cst_32 [1] : vector<16x16xf32> to vector<16xf32>
    %38 = vector.shape_cast %37 : vector<16xf32> to vector<16x1xf32>
    %39 = tpu.reciprocal %38 {approx = true} : vector<16x1xf32> -> vector<16x1xf32>
    %40 = vector.broadcast %39 : vector<16x1xf32> to vector<16x16xf32>
    %41 = arith.mulf %36, %40 : vector<16x16xf32>
    %cst_33 = arith.constant dense<0.000000e+00> : vector<16x8xf32>
    %42 = tpu.matmul %41, %26, %cst_33 {dimension_numbers = #tpu.dot_dimension_numbers<[1], [0], [0], [1], [0, 0, 1, 1], [], []>} : vector<16x16xf32>, vector<16x8xf32>, vector<16x8xf32> -> vector<16x8xf32>
    %c0_34 = arith.constant 0 : index
    %c0_35 = arith.constant 0 : index
    %43 = vector.load %arg9[%c0_34, %c0_35] : memref<16x32xf32, #tpu.memory_space<vmem>>, vector<16x8xf32>
    tpu.vector_store %arg9[%c0_34, %c0_35], %42 {strides = array<i32>} : memref<16x32xf32, #tpu.memory_space<vmem>>, vector<16x8xf32>,
    %c0_36 = arith.constant 0 : index
    %c8 = arith.constant 8 : index
    %44 = vector.load %arg8[%c0_36, %c8] : memref<16x96xf32, #tpu.memory_space<vmem>>, vector<16x8xf32>
    %c0_37 = arith.constant 0 : index
    %c40 = arith.constant 40 : index
    %45 = vector.load %arg8[%c0_37, %c40] : memref<16x96xf32, #tpu.memory_space<vmem>>, vector<16x8xf32>
    %c0_38 = arith.constant 0 : index
    %c72 = arith.constant 72 : index
    %46 = vector.load %arg8[%c0_38, %c72] : memref<16x96xf32, #tpu.memory_space<vmem>>, vector<16x8xf32>
    %47 = tpu.transpose %45, [1, 0] : vector<16x8xf32> -> vector<8x16xf32>
    %cst_39 = arith.constant dense<0.000000e+00> : vector<16x16xf32>
    %48 = tpu.matmul %44, %47, %cst_39 {dimension_numbers = #tpu.dot_dimension_numbers<[1], [0], [0], [1], [0, 0, 1, 1], [], []>} : vector<16x8xf32>, vector<8x16xf32>, vector<16x16xf32> -> vector<16x16xf32>
    %cst_40 = arith.constant 0.353553385 : f32
    %49 = vector.broadcast %cst_40 : f32 to vector<16x16xf32>
    %50 = arith.mulf %48, %49 : vector<16x16xf32>
    %51 = arith.addf %50, %1 : vector<16x16xf32>
    %cst_41 = arith.constant dense<0xFF800000> : vector<16xf32>
    %52 = vector.multi_reduction <maximumf>, %51, %cst_41 [1] : vector<16x16xf32> to vector<16xf32>
    %53 = vector.shape_cast %52 : vector<16xf32> to vector<16x1xf32>
    %54 = vector.broadcast %53 : vector<16x1xf32> to vector<16x16xf32>
    %55 = arith.subf %51, %54 : vector<16x16xf32>
    %56 = math.exp %55 : vector<16x16xf32>
    %cst_42 = arith.constant dense<0.000000e+00> : vector<16xf32>
    %57 = vector.multi_reduction <add>, %56, %cst_42 [1] : vector<16x16xf32> to vector<16xf32>
    %58 = vector.shape_cast %57 : vector<16xf32> to vector<16x1xf32>
    %59 = tpu.reciprocal %58 {approx = true} : vector<16x1xf32> -> vector<16x1xf32>
    %60 = vector.broadcast %59 : vector<16x1xf32> to vector<16x16xf32>
    %61 = arith.mulf %56, %60 : vector<16x16xf32>
    %cst_43 = arith.constant dense<0.000000e+00> : vector<16x8xf32>
    %62 = tpu.matmul %61, %46, %cst_43 {dimension_numbers = #tpu.dot_dimension_numbers<[1], [0], [0], [1], [0, 0, 1, 1], [], []>} : vector<16x16xf32>, vector<16x8xf32>, vector<16x8xf32> -> vector<16x8xf32>
    %c0_44 = arith.constant 0 : index
    %c8_45 = arith.constant 8 : index
    %63 = vector.load %arg9[%c0_44, %c8_45] : memref<16x32xf32, #tpu.memory_space<vmem>>, vector<16x8xf32>
    tpu.vector_store %arg9[%c0_44, %c8_45], %62 {strides = array<i32>} : memref<16x32xf32, #tpu.memory_space<vmem>>, vector<16x8xf32>,
    %c0_46 = arith.constant 0 : index
    %c16 = arith.constant 16 : index
    %64 = vector.load %arg8[%c0_46, %c16] : memref<16x96xf32, #tpu.memory_space<vmem>>, vector<16x8xf32>
    %c0_47 = arith.constant 0 : index
    %c48 = arith.constant 48 : index
    %65 = vector.load %arg8[%c0_47, %c48] : memref<16x96xf32, #tpu.memory_space<vmem>>, vector<16x8xf32>
    %c0_48 = arith.constant 0 : index
    %c80 = arith.constant 80 : index
    %66 = vector.load %arg8[%c0_48, %c80] : memref<16x96xf32, #tpu.memory_space<vmem>>, vector<16x8xf32>
    %67 = tpu.transpose %65, [1, 0] : vector<16x8xf32> -> vector<8x16xf32>
    %cst_49 = arith.constant dense<0.000000e+00> : vector<16x16xf32>
    %68 = tpu.matmul %64, %67, %cst_49 {dimension_numbers = #tpu.dot_dimension_numbers<[1], [0], [0], [1], [0, 0, 1, 1], [], []>} : vector<16x8xf32>, vector<8x16xf32>, vector<16x16xf32> -> vector<16x16xf32>
    %cst_50 = arith.constant 0.353553385 : f32
    %69 = vector.broadcast %cst_50 : f32 to vector<16x16xf32>
    %70 = arith.mulf %68, %69 : vector<16x16xf32>
    %71 = arith.addf %70, %1 : vector<16x16xf32>
    %cst_51 = arith.constant dense<0xFF800000> : vector<16xf32>
    %72 = vector.multi_reduction <maximumf>, %71, %cst_51 [1] : vector<16x16xf32> to vector<16xf32>
    %73 = vector.shape_cast %72 : vector<16xf32> to vector<16x1xf32>
    %74 = vector.broadcast %73 : vector<16x1xf32> to vector<16x16xf32>
    %75 = arith.subf %71, %74 : vector<16x16xf32>
    %76 = math.exp %75 : vector<16x16xf32>
    %cst_52 = arith.constant dense<0.000000e+00> : vector<16xf32>
    %77 = vector.multi_reduction <add>, %76, %cst_52 [1] : vector<16x16xf32> to vector<16xf32>
    %78 = vector.shape_cast %77 : vector<16xf32> to vector<16x1xf32>
    %79 = tpu.reciprocal %78 {approx = true} : vector<16x1xf32> -> vector<16x1xf32>
    %80 = vector.broadcast %79 : vector<16x1xf32> to vector<16x16xf32>
    %81 = arith.mulf %76, %80 : vector<16x16xf32>
    %cst_53 = arith.constant dense<0.000000e+00> : vector<16x8xf32>
    %82 = tpu.matmul %81, %66, %cst_53 {dimension_numbers = #tpu.dot_dimension_numbers<[1], [0], [0], [1], [0, 0, 1, 1], [], []>} : vector<16x16xf32>, vector<16x8xf32>, vector<16x8xf32> -> vector<16x8xf32>
    %c0_54 = arith.constant 0 : index
    %c16_55 = arith.constant 16 : index
    %83 = vector.load %arg9[%c0_54, %c16_55] : memref<16x32xf32, #tpu.memory_space<vmem>>, vector<16x8xf32>
    tpu.vector_store %arg9[%c0_54, %c16_55], %82 {strides = array<i32>} : memref<16x32xf32, #tpu.memory_space<vmem>>, vector<16x8xf32>,
    %c0_56 = arith.constant 0 : index
    %c24 = arith.constant 24 : index
    %84 = vector.load %arg8[%c0_56, %c24] : memref<16x96xf32, #tpu.memory_space<vmem>>, vector<16x8xf32>
    %c0_57 = arith.constant 0 : index
    %c56 = arith.constant 56 : index
    %85 = vector.load %arg8[%c0_57, %c56] : memref<16x96xf32, #tpu.memory_space<vmem>>, vector<16x8xf32>
    %c0_58 = arith.constant 0 : index
    %c88 = arith.constant 88 : index
    %86 = vector.load %arg8[%c0_58, %c88] : memref<16x96xf32, #tpu.memory_space<vmem>>, vector<16x8xf32>
    %87 = tpu.transpose %85, [1, 0] : vector<16x8xf32> -> vector<8x16xf32>
    %cst_59 = arith.constant dense<0.000000e+00> : vector<16x16xf32>
    %88 = tpu.matmul %84, %87, %cst_59 {dimension_numbers = #tpu.dot_dimension_numbers<[1], [0], [0], [1], [0, 0, 1, 1], [], []>} : vector<16x8xf32>, vector<8x16xf32>, vector<16x16xf32> -> vector<16x16xf32>
    %cst_60 = arith.constant 0.353553385 : f32
    %89 = vector.broadcast %cst_60 : f32 to vector<16x16xf32>
    %90 = arith.mulf %88, %89 : vector<16x16xf32>
    %91 = arith.addf %90, %1 : vector<16x16xf32>
    %cst_61 = arith.constant dense<0xFF800000> : vector<16xf32>
    %92 = vector.multi_reduction <maximumf>, %91, %cst_61 [1] : vector<16x16xf32> to vector<16xf32>
    %93 = vector.shape_cast %92 : vector<16xf32> to vector<16x1xf32>
    %94 = vector.broadcast %93 : vector<16x1xf32> to vector<16x16xf32>
    %95 = arith.subf %91, %94 : vector<16x16xf32>
    %96 = math.exp %95 : vector<16x16xf32>
    %cst_62 = arith.constant dense<0.000000e+00> : vector<16xf32>
    %97 = vector.multi_reduction <add>, %96, %cst_62 [1] : vector<16x16xf32> to vector<16xf32>
    %98 = vector.shape_cast %97 : vector<16xf32> to vector<16x1xf32>
    %99 = tpu.reciprocal %98 {approx = true} : vector<16x1xf32> -> vector<16x1xf32>
    %100 = vector.broadcast %99 : vector<16x1xf32> to vector<16x16xf32>
    %101 = arith.mulf %96, %100 : vector<16x16xf32>
    %cst_63 = arith.constant dense<0.000000e+00> : vector<16x8xf32>
    %102 = tpu.matmul %101, %86, %cst_63 {dimension_numbers = #tpu.dot_dimension_numbers<[1], [0], [0], [1], [0, 0, 1, 1], [], []>} : vector<16x16xf32>, vector<16x8xf32>, vector<16x8xf32> -> vector<16x8xf32>
    %c0_64 = arith.constant 0 : index
    %c24_65 = arith.constant 24 : index
    %103 = vector.load %arg9[%c0_64, %c24_65] : memref<16x32xf32, #tpu.memory_space<vmem>>, vector<16x8xf32>
    tpu.vector_store %arg9[%c0_64, %c24_65], %102 {strides = array<i32>} : memref<16x32xf32, #tpu.memory_space<vmem>>, vector<16x8xf32>,
    %c0_66 = arith.constant 0 : index
    %c0_67 = arith.constant 0 : index
    %104 = vector.load %arg9[%c0_66, %c0_67] : memref<16x32xf32, #tpu.memory_space<vmem>>, vector<16x32xf32>
    %c0_68 = arith.constant 0 : index
    %c0_69 = arith.constant 0 : index
    %c0_70 = arith.constant 0 : index
    %105 = vector.load %arg3[%c0_68, %c0_69, %c0_70] : memref<2x32x32xf32, #tpu.memory_space<vmem>>, vector<1x32x32xf32>
    %106 = vector.shape_cast %105 : vector<1x32x32xf32> to vector<32x32xf32>
    %cst_71 = arith.constant dense<0.000000e+00> : vector<16x32xf32>
    %107 = tpu.matmul %104, %106, %cst_71 {dimension_numbers = #tpu.dot_dimension_numbers<[1], [0], [0], [1], [0, 0, 1, 1], [], []>} : vector<16x32xf32>, vector<32x32xf32>, vector<16x32xf32> -> vector<16x32xf32>
    %108 = vector.broadcast %5 : vector<1x32xf32> to vector<16x32xf32>
    %109 = arith.addf %107, %108 : vector<16x32xf32>
    %110 = arith.addf %0, %109 : vector<16x32xf32>
    %cst_72 = arith.constant dense<0.000000e+00> : vector<16xf32>
    %111 = vector.multi_reduction <add>, %110, %cst_72 [1] : vector<16x32xf32> to vector<16xf32>
    %112 = vector.shape_cast %111 : vector<16xf32> to vector<16x1xf32>
    %cst_73 = arith.constant 3.200000e+01 : f32
    %113 = vector.broadcast %cst_73 : f32 to vector<16x1xf32>
    %114 = arith.divf %112, %113 : vector<16x1xf32>
    %115 = vector.broadcast %114 : vector<16x1xf32> to vector<16x32xf32>
    %116 = arith.subf %110, %115 : vector<16x32xf32>
    %117 = arith.mulf %116, %116 : vector<16x32xf32>
    %cst_74 = arith.constant dense<0.000000e+00> : vector<16xf32>
    %118 = vector.multi_reduction <add>, %117, %cst_74 [1] : vector<16x32xf32> to vector<16xf32>
    %119 = vector.shape_cast %118 : vector<16xf32> to vector<16x1xf32>
    %cst_75 = arith.constant 3.200000e+01 : f32
    %120 = vector.broadcast %cst_75 : f32 to vector<16x1xf32>
    %121 = arith.divf %119, %120 : vector<16x1xf32>
    %122 = vector.broadcast %114 : vector<16x1xf32> to vector<16x32xf32>
    %123 = arith.subf %110, %122 : vector<16x32xf32>
    %cst_76 = arith.constant 9.99999974E-6 : f32
    %124 = vector.broadcast %cst_76 : f32 to vector<16x1xf32>
    %125 = arith.addf %121, %124 : vector<16x1xf32>
    %126 = math.rsqrt %125 : vector<16x1xf32>
    %127 = vector.broadcast %126 : vector<16x1xf32> to vector<16x32xf32>
    %128 = arith.mulf %123, %127 : vector<16x32xf32>
    %129 = vector.broadcast %7 : vector<1x32xf32> to vector<16x32xf32>
    %130 = arith.mulf %128, %129 : vector<16x32xf32>
    %131 = vector.broadcast %9 : vector<1x32xf32> to vector<16x32xf32>
    %132 = arith.addf %130, %131 : vector<16x32xf32>
    %c0_77 = arith.constant 0 : index
    %c0_78 = arith.constant 0 : index
    %c0_79 = arith.constant 0 : index
    %133 = vector.load %arg4[%c0_77, %c0_78, %c0_79] : memref<2x32x64xf32, #tpu.memory_space<vmem>>, vector<1x32x64xf32>
    %134 = vector.shape_cast %133 : vector<1x32x64xf32> to vector<32x64xf32>
    %cst_80 = arith.constant dense<0.000000e+00> : vector<16x64xf32>
    %135 = tpu.matmul %132, %134, %cst_80 {dimension_numbers = #tpu.dot_dimension_numbers<[1], [0], [0], [1], [0, 0, 1, 1], [], []>} : vector<16x32xf32>, vector<32x64xf32>, vector<16x64xf32> -> vector<16x64xf32>
    %136 = vector.broadcast %11 : vector<1x64xf32> to vector<16x64xf32>
    %137 = arith.addf %135, %136 : vector<16x64xf32>
    %cst_81 = arith.constant 0.000000e+00 : f32
    %138 = vector.broadcast %cst_81 : f32 to vector<16x64xf32>
    %139 = arith.maximumf %137, %138 : vector<16x64xf32>
    %c0_82 = arith.constant 0 : index
    %c0_83 = arith.constant 0 : index
    %c0_84 = arith.constant 0 : index
    %140 = vector.load %arg5[%c0_82, %c0_83, %c0_84] : memref<2x64x32xf32, #tpu.memory_space<vmem>>, vector<1x64x32xf32>
    %141 = vector.shape_cast %140 : vector<1x64x32xf32> to vector<64x32xf32>
    %cst_85 = arith.constant dense<0.000000e+00> : vector<16x32xf32>
    %142 = tpu.matmul %139, %141, %cst_85 {dimension_numbers = #tpu.dot_dimension_numbers<[1], [0], [0], [1], [0, 0, 1, 1], [], []>} : vector<16x64xf32>, vector<64x32xf32>, vector<16x32xf32> -> vector<16x32xf32>
    %143 = vector.broadcast %13 : vector<1x32xf32> to vector<16x32xf32>
    %144 = arith.addf %142, %143 : vector<16x32xf32>
    %145 = arith.addf %132, %144 : vector<16x32xf32>
    %cst_86 = arith.constant dense<0.000000e+00> : vector<16xf32>
    %146 = vector.multi_reduction <add>, %145, %cst_86 [1] : vector<16x32xf32> to vector<16xf32>
    %147 = vector.shape_cast %146 : vector<16xf32> to vector<16x1xf32>
    %cst_87 = arith.constant 3.200000e+01 : f32
    %148 = vector.broadcast %cst_87 : f32 to vector<16x1xf32>
    %149 = arith.divf %147, %148 : vector<16x1xf32>
    %150 = vector.broadcast %149 : vector<16x1xf32> to vector<16x32xf32>
    %151 = arith.subf %145, %150 : vector<16x32xf32>
    %152 = arith.mulf %151, %151 : vector<16x32xf32>
    %cst_88 = arith.constant dense<0.000000e+00> : vector<16xf32>
    %153 = vector.multi_reduction <add>, %152, %cst_88 [1] : vector<16x32xf32> to vector<16xf32>
    %154 = vector.shape_cast %153 : vector<16xf32> to vector<16x1xf32>
    %cst_89 = arith.constant 3.200000e+01 : f32
    %155 = vector.broadcast %cst_89 : f32 to vector<16x1xf32>
    %156 = arith.divf %154, %155 : vector<16x1xf32>
    %157 = vector.broadcast %149 : vector<16x1xf32> to vector<16x32xf32>
    %158 = arith.subf %145, %157 : vector<16x32xf32>
    %cst_90 = arith.constant 9.99999974E-6 : f32
    %159 = vector.broadcast %cst_90 : f32 to vector<16x1xf32>
    %160 = arith.addf %156, %159 : vector<16x1xf32>
    %161 = math.rsqrt %160 : vector<16x1xf32>
    %162 = vector.broadcast %161 : vector<16x1xf32> to vector<16x32xf32>
    %163 = arith.mulf %158, %162 : vector<16x32xf32>
    %164 = vector.broadcast %15 : vector<1x32xf32> to vector<16x32xf32>
    %165 = arith.mulf %163, %164 : vector<16x32xf32>
    %166 = vector.broadcast %17 : vector<1x32xf32> to vector<16x32xf32>
    %167 = arith.addf %165, %166 : vector<16x32xf32>
    %c1 = arith.constant 1 : index
    %c0_91 = arith.constant 0 : index
    %c0_92 = arith.constant 0 : index
    %168 = vector.load %arg6[%c1, %c0_91, %c0_92] : memref<2x1x352xf32, #tpu.memory_space<vmem>>, vector<1x1x96xf32>
    %169 = vector.shape_cast %168 : vector<1x1x96xf32> to vector<1x96xf32>
    %c1_93 = arith.constant 1 : index
    %c0_94 = arith.constant 0 : index
    %c96_95 = arith.constant 96 : index
    %170 = vector.load %arg6[%c1_93, %c0_94, %c96_95] : memref<2x1x352xf32, #tpu.memory_space<vmem>>, vector<1x1x32xf32>
    %171 = vector.shape_cast %170 : vector<1x1x32xf32> to vector<1x32xf32>
    %c1_96 = arith.constant 1 : index
    %c0_97 = arith.constant 0 : index
    %c128_98 = arith.constant 128 : index
    %172 = vector.load %arg6[%c1_96, %c0_97, %c128_98] : memref<2x1x352xf32, #tpu.memory_space<vmem>>, vector<1x1x32xf32>
    %173 = vector.shape_cast %172 : vector<1x1x32xf32> to vector<1x32xf32>
    %c1_99 = arith.constant 1 : index
    %c0_100 = arith.constant 0 : index
    %c160_101 = arith.constant 160 : index
    %174 = vector.load %arg6[%c1_99, %c0_100, %c160_101] : memref<2x1x352xf32, #tpu.memory_space<vmem>>, vector<1x1x32xf32>
    %175 = vector.shape_cast %174 : vector<1x1x32xf32> to vector<1x32xf32>
    %c1_102 = arith.constant 1 : index
    %c0_103 = arith.constant 0 : index
    %c192_104 = arith.constant 192 : index
    %176 = vector.load %arg6[%c1_102, %c0_103, %c192_104] : memref<2x1x352xf32, #tpu.memory_space<vmem>>, vector<1x1x64xf32>
    %177 = vector.shape_cast %176 : vector<1x1x64xf32> to vector<1x64xf32>
    %c1_105 = arith.constant 1 : index
    %c0_106 = arith.constant 0 : index
    %c256_107 = arith.constant 256 : index
    %178 = vector.load %arg6[%c1_105, %c0_106, %c256_107] : memref<2x1x352xf32, #tpu.memory_space<vmem>>, vector<1x1x32xf32>
    %179 = vector.shape_cast %178 : vector<1x1x32xf32> to vector<1x32xf32>
    %c1_108 = arith.constant 1 : index
    %c0_109 = arith.constant 0 : index
    %c288_110 = arith.constant 288 : index
    %180 = vector.load %arg6[%c1_108, %c0_109, %c288_110] : memref<2x1x352xf32, #tpu.memory_space<vmem>>, vector<1x1x32xf32>
    %181 = vector.shape_cast %180 : vector<1x1x32xf32> to vector<1x32xf32>
    %c1_111 = arith.constant 1 : index
    %c0_112 = arith.constant 0 : index
    %c320_113 = arith.constant 320 : index
    %182 = vector.load %arg6[%c1_111, %c0_112, %c320_113] : memref<2x1x352xf32, #tpu.memory_space<vmem>>, vector<1x1x32xf32>
    %183 = vector.shape_cast %182 : vector<1x1x32xf32> to vector<1x32xf32>
    %c1_114 = arith.constant 1 : index
    %c0_115 = arith.constant 0 : index
    %c0_116 = arith.constant 0 : index
    %184 = vector.load %arg2[%c1_114, %c0_115, %c0_116] : memref<2x32x96xf32, #tpu.memory_space<vmem>>, vector<1x32x96xf32>
    %185 = vector.shape_cast %184 : vector<1x32x96xf32> to vector<32x96xf32>
    %cst_117 = arith.constant dense<0.000000e+00> : vector<16x96xf32>
    %186 = tpu.matmul %167, %185, %cst_117 {dimension_numbers = #tpu.dot_dimension_numbers<[1], [0], [0], [1], [0, 0, 1, 1], [], []>} : vector<16x32xf32>, vector<32x96xf32>, vector<16x96xf32> -> vector<16x96xf32>
    %187 = vector.broadcast %169 : vector<1x96xf32> to vector<16x96xf32>
    %188 = arith.addf %186, %187 : vector<16x96xf32>
    %c0_118 = arith.constant 0 : index
    %c0_119 = arith.constant 0 : index
    %189 = vector.load %arg8[%c0_118, %c0_119] : memref<16x96xf32, #tpu.memory_space<vmem>>, vector<16x96xf32>
    tpu.vector_store %arg8[%c0_118, %c0_119], %188 {strides = array<i32>} : memref<16x96xf32, #tpu.memory_space<vmem>>, vector<16x96xf32>,
    %c0_120 = arith.constant 0 : index
    %c0_121 = arith.constant 0 : index
    %190 = vector.load %arg8[%c0_120, %c0_121] : memref<16x96xf32, #tpu.memory_space<vmem>>, vector<16x8xf32>
    %c0_122 = arith.constant 0 : index
    %c32_123 = arith.constant 32 : index
    %191 = vector.load %arg8[%c0_122, %c32_123] : memref<16x96xf32, #tpu.memory_space<vmem>>, vector<16x8xf32>
    %c0_124 = arith.constant 0 : index
    %c64_125 = arith.constant 64 : index
    %192 = vector.load %arg8[%c0_124, %c64_125] : memref<16x96xf32, #tpu.memory_space<vmem>>, vector<16x8xf32>
    %193 = tpu.transpose %191, [1, 0] : vector<16x8xf32> -> vector<8x16xf32>
    %cst_126 = arith.constant dense<0.000000e+00> : vector<16x16xf32>
    %194 = tpu.matmul %190, %193, %cst_126 {dimension_numbers = #tpu.dot_dimension_numbers<[1], [0], [0], [1], [0, 0, 1, 1], [], []>} : vector<16x8xf32>, vector<8x16xf32>, vector<16x16xf32> -> vector<16x16xf32>
    %cst_127 = arith.constant 0.353553385 : f32
    %195 = vector.broadcast %cst_127 : f32 to vector<16x16xf32>
    %196 = arith.mulf %194, %195 : vector<16x16xf32>
    %197 = arith.addf %196, %1 : vector<16x16xf32>
    %cst_128 = arith.constant dense<0xFF800000> : vector<16xf32>
    %198 = vector.multi_reduction <maximumf>, %197, %cst_128 [1] : vector<16x16xf32> to vector<16xf32>
    %199 = vector.shape_cast %198 : vector<16xf32> to vector<16x1xf32>
    %200 = vector.broadcast %199 : vector<16x1xf32> to vector<16x16xf32>
    %201 = arith.subf %197, %200 : vector<16x16xf32>
    %202 = math.exp %201 : vector<16x16xf32>
    %cst_129 = arith.constant dense<0.000000e+00> : vector<16xf32>
    %203 = vector.multi_reduction <add>, %202, %cst_129 [1] : vector<16x16xf32> to vector<16xf32>
    %204 = vector.shape_cast %203 : vector<16xf32> to vector<16x1xf32>
    %205 = tpu.reciprocal %204 {approx = true} : vector<16x1xf32> -> vector<16x1xf32>
    %206 = vector.broadcast %205 : vector<16x1xf32> to vector<16x16xf32>
    %207 = arith.mulf %202, %206 : vector<16x16xf32>
    %cst_130 = arith.constant dense<0.000000e+00> : vector<16x8xf32>
    %208 = tpu.matmul %207, %192, %cst_130 {dimension_numbers = #tpu.dot_dimension_numbers<[1], [0], [0], [1], [0, 0, 1, 1], [], []>} : vector<16x16xf32>, vector<16x8xf32>, vector<16x8xf32> -> vector<16x8xf32>
    %c0_131 = arith.constant 0 : index
    %c0_132 = arith.constant 0 : index
    %209 = vector.load %arg9[%c0_131, %c0_132] : memref<16x32xf32, #tpu.memory_space<vmem>>, vector<16x8xf32>
    tpu.vector_store %arg9[%c0_131, %c0_132], %208 {strides = array<i32>} : memref<16x32xf32, #tpu.memory_space<vmem>>, vector<16x8xf32>,
    %c0_133 = arith.constant 0 : index
    %c8_134 = arith.constant 8 : index
    %210 = vector.load %arg8[%c0_133, %c8_134] : memref<16x96xf32, #tpu.memory_space<vmem>>, vector<16x8xf32>
    %c0_135 = arith.constant 0 : index
    %c40_136 = arith.constant 40 : index
    %211 = vector.load %arg8[%c0_135, %c40_136] : memref<16x96xf32, #tpu.memory_space<vmem>>, vector<16x8xf32>
    %c0_137 = arith.constant 0 : index
    %c72_138 = arith.constant 72 : index
    %212 = vector.load %arg8[%c0_137, %c72_138] : memref<16x96xf32, #tpu.memory_space<vmem>>, vector<16x8xf32>
    %213 = tpu.transpose %211, [1, 0] : vector<16x8xf32> -> vector<8x16xf32>
    %cst_139 = arith.constant dense<0.000000e+00> : vector<16x16xf32>
    %214 = tpu.matmul %210, %213, %cst_139 {dimension_numbers = #tpu.dot_dimension_numbers<[1], [0], [0], [1], [0, 0, 1, 1], [], []>} : vector<16x8xf32>, vector<8x16xf32>, vector<16x16xf32> -> vector<16x16xf32>
    %cst_140 = arith.constant 0.353553385 : f32
    %215 = vector.broadcast %cst_140 : f32 to vector<16x16xf32>
    %216 = arith.mulf %214, %215 : vector<16x16xf32>
    %217 = arith.addf %216, %1 : vector<16x16xf32>
    %cst_141 = arith.constant dense<0xFF800000> : vector<16xf32>
    %218 = vector.multi_reduction <maximumf>, %217, %cst_141 [1] : vector<16x16xf32> to vector<16xf32>
    %219 = vector.shape_cast %218 : vector<16xf32> to vector<16x1xf32>
    %220 = vector.broadcast %219 : vector<16x1xf32> to vector<16x16xf32>
    %221 = arith.subf %217, %220 : vector<16x16xf32>
    %222 = math.exp %221 : vector<16x16xf32>
    %cst_142 = arith.constant dense<0.000000e+00> : vector<16xf32>
    %223 = vector.multi_reduction <add>, %222, %cst_142 [1] : vector<16x16xf32> to vector<16xf32>
    %224 = vector.shape_cast %223 : vector<16xf32> to vector<16x1xf32>
    %225 = tpu.reciprocal %224 {approx = true} : vector<16x1xf32> -> vector<16x1xf32>
    %226 = vector.broadcast %225 : vector<16x1xf32> to vector<16x16xf32>
    %227 = arith.mulf %222, %226 : vector<16x16xf32>
    %cst_143 = arith.constant dense<0.000000e+00> : vector<16x8xf32>
    %228 = tpu.matmul %227, %212, %cst_143 {dimension_numbers = #tpu.dot_dimension_numbers<[1], [0], [0], [1], [0, 0, 1, 1], [], []>} : vector<16x16xf32>, vector<16x8xf32>, vector<16x8xf32> -> vector<16x8xf32>
    %c0_144 = arith.constant 0 : index
    %c8_145 = arith.constant 8 : index
    %229 = vector.load %arg9[%c0_144, %c8_145] : memref<16x32xf32, #tpu.memory_space<vmem>>, vector<16x8xf32>
    tpu.vector_store %arg9[%c0_144, %c8_145], %228 {strides = array<i32>} : memref<16x32xf32, #tpu.memory_space<vmem>>, vector<16x8xf32>,
    %c0_146 = arith.constant 0 : index
    %c16_147 = arith.constant 16 : index
    %230 = vector.load %arg8[%c0_146, %c16_147] : memref<16x96xf32, #tpu.memory_space<vmem>>, vector<16x8xf32>
    %c0_148 = arith.constant 0 : index
    %c48_149 = arith.constant 48 : index
    %231 = vector.load %arg8[%c0_148, %c48_149] : memref<16x96xf32, #tpu.memory_space<vmem>>, vector<16x8xf32>
    %c0_150 = arith.constant 0 : index
    %c80_151 = arith.constant 80 : index
    %232 = vector.load %arg8[%c0_150, %c80_151] : memref<16x96xf32, #tpu.memory_space<vmem>>, vector<16x8xf32>
    %233 = tpu.transpose %231, [1, 0] : vector<16x8xf32> -> vector<8x16xf32>
    %cst_152 = arith.constant dense<0.000000e+00> : vector<16x16xf32>
    %234 = tpu.matmul %230, %233, %cst_152 {dimension_numbers = #tpu.dot_dimension_numbers<[1], [0], [0], [1], [0, 0, 1, 1], [], []>} : vector<16x8xf32>, vector<8x16xf32>, vector<16x16xf32> -> vector<16x16xf32>
    %cst_153 = arith.constant 0.353553385 : f32
    %235 = vector.broadcast %cst_153 : f32 to vector<16x16xf32>
    %236 = arith.mulf %234, %235 : vector<16x16xf32>
    %237 = arith.addf %236, %1 : vector<16x16xf32>
    %cst_154 = arith.constant dense<0xFF800000> : vector<16xf32>
    %238 = vector.multi_reduction <maximumf>, %237, %cst_154 [1] : vector<16x16xf32> to vector<16xf32>
    %239 = vector.shape_cast %238 : vector<16xf32> to vector<16x1xf32>
    %240 = vector.broadcast %239 : vector<16x1xf32> to vector<16x16xf32>
    %241 = arith.subf %237, %240 : vector<16x16xf32>
    %242 = math.exp %241 : vector<16x16xf32>
    %cst_155 = arith.constant dense<0.000000e+00> : vector<16xf32>
    %243 = vector.multi_reduction <add>, %242, %cst_155 [1] : vector<16x16xf32> to vector<16xf32>
    %244 = vector.shape_cast %243 : vector<16xf32> to vector<16x1xf32>
    %245 = tpu.reciprocal %244 {approx = true} : vector<16x1xf32> -> vector<16x1xf32>
    %246 = vector.broadcast %245 : vector<16x1xf32> to vector<16x16xf32>
    %247 = arith.mulf %242, %246 : vector<16x16xf32>
    %cst_156 = arith.constant dense<0.000000e+00> : vector<16x8xf32>
    %248 = tpu.matmul %247, %232, %cst_156 {dimension_numbers = #tpu.dot_dimension_numbers<[1], [0], [0], [1], [0, 0, 1, 1], [], []>} : vector<16x16xf32>, vector<16x8xf32>, vector<16x8xf32> -> vector<16x8xf32>
    %c0_157 = arith.constant 0 : index
    %c16_158 = arith.constant 16 : index
    %249 = vector.load %arg9[%c0_157, %c16_158] : memref<16x32xf32, #tpu.memory_space<vmem>>, vector<16x8xf32>
    tpu.vector_store %arg9[%c0_157, %c16_158], %248 {strides = array<i32>} : memref<16x32xf32, #tpu.memory_space<vmem>>, vector<16x8xf32>,
    %c0_159 = arith.constant 0 : index
    %c24_160 = arith.constant 24 : index
    %250 = vector.load %arg8[%c0_159, %c24_160] : memref<16x96xf32, #tpu.memory_space<vmem>>, vector<16x8xf32>
    %c0_161 = arith.constant 0 : index
    %c56_162 = arith.constant 56 : index
    %251 = vector.load %arg8[%c0_161, %c56_162] : memref<16x96xf32, #tpu.memory_space<vmem>>, vector<16x8xf32>
    %c0_163 = arith.constant 0 : index
    %c88_164 = arith.constant 88 : index
    %252 = vector.load %arg8[%c0_163, %c88_164] : memref<16x96xf32, #tpu.memory_space<vmem>>, vector<16x8xf32>
    %253 = tpu.transpose %251, [1, 0] : vector<16x8xf32> -> vector<8x16xf32>
    %cst_165 = arith.constant dense<0.000000e+00> : vector<16x16xf32>
    %254 = tpu.matmul %250, %253, %cst_165 {dimension_numbers = #tpu.dot_dimension_numbers<[1], [0], [0], [1], [0, 0, 1, 1], [], []>} : vector<16x8xf32>, vector<8x16xf32>, vector<16x16xf32> -> vector<16x16xf32>
    %cst_166 = arith.constant 0.353553385 : f32
    %255 = vector.broadcast %cst_166 : f32 to vector<16x16xf32>
    %256 = arith.mulf %254, %255 : vector<16x16xf32>
    %257 = arith.addf %256, %1 : vector<16x16xf32>
    %cst_167 = arith.constant dense<0xFF800000> : vector<16xf32>
    %258 = vector.multi_reduction <maximumf>, %257, %cst_167 [1] : vector<16x16xf32> to vector<16xf32>
    %259 = vector.shape_cast %258 : vector<16xf32> to vector<16x1xf32>
    %260 = vector.broadcast %259 : vector<16x1xf32> to vector<16x16xf32>
    %261 = arith.subf %257, %260 : vector<16x16xf32>
    %262 = math.exp %261 : vector<16x16xf32>
    %cst_168 = arith.constant dense<0.000000e+00> : vector<16xf32>
    %263 = vector.multi_reduction <add>, %262, %cst_168 [1] : vector<16x16xf32> to vector<16xf32>
    %264 = vector.shape_cast %263 : vector<16xf32> to vector<16x1xf32>
    %265 = tpu.reciprocal %264 {approx = true} : vector<16x1xf32> -> vector<16x1xf32>
    %266 = vector.broadcast %265 : vector<16x1xf32> to vector<16x16xf32>
    %267 = arith.mulf %262, %266 : vector<16x16xf32>
    %cst_169 = arith.constant dense<0.000000e+00> : vector<16x8xf32>
    %268 = tpu.matmul %267, %252, %cst_169 {dimension_numbers = #tpu.dot_dimension_numbers<[1], [0], [0], [1], [0, 0, 1, 1], [], []>} : vector<16x16xf32>, vector<16x8xf32>, vector<16x8xf32> -> vector<16x8xf32>
    %c0_170 = arith.constant 0 : index
    %c24_171 = arith.constant 24 : index
    %269 = vector.load %arg9[%c0_170, %c24_171] : memref<16x32xf32, #tpu.memory_space<vmem>>, vector<16x8xf32>
    tpu.vector_store %arg9[%c0_170, %c24_171], %268 {strides = array<i32>} : memref<16x32xf32, #tpu.memory_space<vmem>>, vector<16x8xf32>,
    %c0_172 = arith.constant 0 : index
    %c0_173 = arith.constant 0 : index
    %270 = vector.load %arg9[%c0_172, %c0_173] : memref<16x32xf32, #tpu.memory_space<vmem>>, vector<16x32xf32>
    %c1_174 = arith.constant 1 : index
    %c0_175 = arith.constant 0 : index
    %c0_176 = arith.constant 0 : index
    %271 = vector.load %arg3[%c1_174, %c0_175, %c0_176] : memref<2x32x32xf32, #tpu.memory_space<vmem>>, vector<1x32x32xf32>
    %272 = vector.shape_cast %271 : vector<1x32x32xf32> to vector<32x32xf32>
    %cst_177 = arith.constant dense<0.000000e+00> : vector<16x32xf32>
    %273 = tpu.matmul %270, %272, %cst_177 {dimension_numbers = #tpu.dot_dimension_numbers<[1], [0], [0], [1], [0, 0, 1, 1], [], []>} : vector<16x32xf32>, vector<32x32xf32>, vector<16x32xf32> -> vector<16x32xf32>
    %274 = vector.broadcast %171 : vector<1x32xf32> to vector<16x32xf32>
    %275 = arith.addf %273, %274 : vector<16x32xf32>
    %276 = arith.addf %167, %275 : vector<16x32xf32>
    %cst_178 = arith.constant dense<0.000000e+00> : vector<16xf32>
    %277 = vector.multi_reduction <add>, %276, %cst_178 [1] : vector<16x32xf32> to vector<16xf32>
    %278 = vector.shape_cast %277 : vector<16xf32> to vector<16x1xf32>
    %cst_179 = arith.constant 3.200000e+01 : f32
    %279 = vector.broadcast %cst_179 : f32 to vector<16x1xf32>
    %280 = arith.divf %278, %279 : vector<16x1xf32>
    %281 = vector.broadcast %280 : vector<16x1xf32> to vector<16x32xf32>
    %282 = arith.subf %276, %281 : vector<16x32xf32>
    %283 = arith.mulf %282, %282 : vector<16x32xf32>
    %cst_180 = arith.constant dense<0.000000e+00> : vector<16xf32>
    %284 = vector.multi_reduction <add>, %283, %cst_180 [1] : vector<16x32xf32> to vector<16xf32>
    %285 = vector.shape_cast %284 : vector<16xf32> to vector<16x1xf32>
    %cst_181 = arith.constant 3.200000e+01 : f32
    %286 = vector.broadcast %cst_181 : f32 to vector<16x1xf32>
    %287 = arith.divf %285, %286 : vector<16x1xf32>
    %288 = vector.broadcast %280 : vector<16x1xf32> to vector<16x32xf32>
    %289 = arith.subf %276, %288 : vector<16x32xf32>
    %cst_182 = arith.constant 9.99999974E-6 : f32
    %290 = vector.broadcast %cst_182 : f32 to vector<16x1xf32>
    %291 = arith.addf %287, %290 : vector<16x1xf32>
    %292 = math.rsqrt %291 : vector<16x1xf32>
    %293 = vector.broadcast %292 : vector<16x1xf32> to vector<16x32xf32>
    %294 = arith.mulf %289, %293 : vector<16x32xf32>
    %295 = vector.broadcast %173 : vector<1x32xf32> to vector<16x32xf32>
    %296 = arith.mulf %294, %295 : vector<16x32xf32>
    %297 = vector.broadcast %175 : vector<1x32xf32> to vector<16x32xf32>
    %298 = arith.addf %296, %297 : vector<16x32xf32>
    %c1_183 = arith.constant 1 : index
    %c0_184 = arith.constant 0 : index
    %c0_185 = arith.constant 0 : index
    %299 = vector.load %arg4[%c1_183, %c0_184, %c0_185] : memref<2x32x64xf32, #tpu.memory_space<vmem>>, vector<1x32x64xf32>
    %300 = vector.shape_cast %299 : vector<1x32x64xf32> to vector<32x64xf32>
    %cst_186 = arith.constant dense<0.000000e+00> : vector<16x64xf32>
    %301 = tpu.matmul %298, %300, %cst_186 {dimension_numbers = #tpu.dot_dimension_numbers<[1], [0], [0], [1], [0, 0, 1, 1], [], []>} : vector<16x32xf32>, vector<32x64xf32>, vector<16x64xf32> -> vector<16x64xf32>
    %302 = vector.broadcast %177 : vector<1x64xf32> to vector<16x64xf32>
    %303 = arith.addf %301, %302 : vector<16x64xf32>
    %cst_187 = arith.constant 0.000000e+00 : f32
    %304 = vector.broadcast %cst_187 : f32 to vector<16x64xf32>
    %305 = arith.maximumf %303, %304 : vector<16x64xf32>
    %c1_188 = arith.constant 1 : index
    %c0_189 = arith.constant 0 : index
    %c0_190 = arith.constant 0 : index
    %306 = vector.load %arg5[%c1_188, %c0_189, %c0_190] : memref<2x64x32xf32, #tpu.memory_space<vmem>>, vector<1x64x32xf32>
    %307 = vector.shape_cast %306 : vector<1x64x32xf32> to vector<64x32xf32>
    %cst_191 = arith.constant dense<0.000000e+00> : vector<16x32xf32>
    %308 = tpu.matmul %305, %307, %cst_191 {dimension_numbers = #tpu.dot_dimension_numbers<[1], [0], [0], [1], [0, 0, 1, 1], [], []>} : vector<16x64xf32>, vector<64x32xf32>, vector<16x32xf32> -> vector<16x32xf32>
    %309 = vector.broadcast %179 : vector<1x32xf32> to vector<16x32xf32>
    %310 = arith.addf %308, %309 : vector<16x32xf32>
    %311 = arith.addf %298, %310 : vector<16x32xf32>
    %cst_192 = arith.constant dense<0.000000e+00> : vector<16xf32>
    %312 = vector.multi_reduction <add>, %311, %cst_192 [1] : vector<16x32xf32> to vector<16xf32>
    %313 = vector.shape_cast %312 : vector<16xf32> to vector<16x1xf32>
    %cst_193 = arith.constant 3.200000e+01 : f32
    %314 = vector.broadcast %cst_193 : f32 to vector<16x1xf32>
    %315 = arith.divf %313, %314 : vector<16x1xf32>
    %316 = vector.broadcast %315 : vector<16x1xf32> to vector<16x32xf32>
    %317 = arith.subf %311, %316 : vector<16x32xf32>
    %318 = arith.mulf %317, %317 : vector<16x32xf32>
    %cst_194 = arith.constant dense<0.000000e+00> : vector<16xf32>
    %319 = vector.multi_reduction <add>, %318, %cst_194 [1] : vector<16x32xf32> to vector<16xf32>
    %320 = vector.shape_cast %319 : vector<16xf32> to vector<16x1xf32>
    %cst_195 = arith.constant 3.200000e+01 : f32
    %321 = vector.broadcast %cst_195 : f32 to vector<16x1xf32>
    %322 = arith.divf %320, %321 : vector<16x1xf32>
    %323 = vector.broadcast %315 : vector<16x1xf32> to vector<16x32xf32>
    %324 = arith.subf %311, %323 : vector<16x32xf32>
    %cst_196 = arith.constant 9.99999974E-6 : f32
    %325 = vector.broadcast %cst_196 : f32 to vector<16x1xf32>
    %326 = arith.addf %322, %325 : vector<16x1xf32>
    %327 = math.rsqrt %326 : vector<16x1xf32>
    %328 = vector.broadcast %327 : vector<16x1xf32> to vector<16x32xf32>
    %329 = arith.mulf %324, %328 : vector<16x32xf32>
    %330 = vector.broadcast %181 : vector<1x32xf32> to vector<16x32xf32>
    %331 = arith.mulf %329, %330 : vector<16x32xf32>
    %332 = vector.broadcast %183 : vector<1x32xf32> to vector<16x32xf32>
    %333 = arith.addf %331, %332 : vector<16x32xf32>
    %c0_197 = arith.constant 0 : index
    %c0_198 = arith.constant 0 : index
    %334 = vector.load %arg7[%c0_197, %c0_198] : memref<16x32xf32, #tpu.memory_space<vmem>>, vector<16x32xf32>
    tpu.vector_store %arg7[%c0_197, %c0_198], %333 {strides = array<i32>} : memref<16x32xf32, #tpu.memory_space<vmem>>, vector<16x32xf32>,
    return
  }
}

</mosaic_0001>

<llo_original>
// kernel: tpu_custom_call.1
$region0: #{tpu_custom_call.1}
  #allocation0 [shape = 'u32[]', space=smem, size = 0x4, offset = 0x4, fixed_abs, tag = 'smem constant byte address 0x4 - core index']
  #allocation1 [shape = 'u32[144,128]{1,0:T(1,128)}', space=vmem, size = 0x12000, scoped, tag = 'internal scratch']
  #allocation2 [shape = 'f32[16,96]{1,0:T(8,128)}', space=vmem, size = 0x2000, scoped, tag = 'scratch operand']
  #allocation3 [shape = 'f32[16,32]{1,0:T(8,128)}', space=vmem, size = 0x2000, scoped, tag = 'scratch operand']
  %s0 = inlined_call_operand.hbm [shape: f32[16,32], index: 0, kind: input, shape index: {}]
  %s1 = inlined_call_operand.hbm [shape: f32[16,16], index: 1, kind: input, shape index: {}]
  %s2 = inlined_call_operand.vmem [shape: f32[2,32,96], index: 2, kind: input, shape index: {}]
  %s3 = inlined_call_operand.vmem [shape: f32[2,32,32], index: 3, kind: input, shape index: {}]
  %s4 = inlined_call_operand.vmem [shape: f32[2,32,64], index: 4, kind: input, shape index: {}]
  %s5 = inlined_call_operand.vmem [shape: f32[2,64,32], index: 5, kind: input, shape index: {}]
  %s6 = inlined_call_operand.vmem [shape: f32[2,1,352], index: 6, kind: input, shape index: {}]
  %s7 = inlined_call_operand.hbm [shape: f32[16,32], index: 7, kind: output, shape index: {}]
  %s8 = sld [smem:[#allocation0]]
  $region46: #{tpu_custom_call.1} parent=0
    _
  %s10 = ssub.s32 1, %s8
  %s11 = scalar_select 0, %s10, %s8
  $region1: #{tpu_custom_call.1} parent=0
    #allocation4 [shape = 'u8[8192]{0}', space=vmem, size = 0x2000, scoped, tag = 'input window, operand 0, single buffered']
    #allocation5 [shape = 's32[1]{0}', space=sflag, size = 0x4, scoped, tag = 'scoped memory for tpu_custom_call.1']
    #allocation6 [shape = 's32[1]{0}', space=sflag, size = 0x4, scoped, tag = 'scoped memory for tpu_custom_call.1']
    #allocation7 [shape = 'u8[8192]{0}', space=vmem, size = 0x2000, scoped, tag = 'input window, operand 1, single buffered']
    #allocation8 [shape = 's32[1]{0}', space=sflag, size = 0x4, scoped, tag = 'scoped memory for tpu_custom_call.1']
    #allocation9 [shape = 'u8[8192]{0}', space=vmem, size = 0x2000, scoped, tag = 'output window, operand 0, single buffered']
    %12 = vsyncpa [#allocation5], 0
    %13 = vsyncpa [#allocation8], 0
    %14 = vsyncpa [#allocation6], 0
    // Predicated region
    $region2: #{tpu_custom_call.1} parent=1 // pred_check
      _
    $region3: #{tpu_custom_call.1} parent=1 // pred_check_branch
      %16 = sbr.rel (0) target = $region5
    $region4: #{tpu_custom_call.1} parent=1 // pred_region
      %s18 = ssub.s32 256, 256
      %19 = vsyncadd [#allocation5], %s18
      %s20 = sshll.u32 [#allocation4], 4
      %s21 = int_to_ptr.vmem [resolvable:$true] %s20
      %26 = dma.hbm_to_vmem [thread:$0]  %s0, 256, %s21, [#allocation5], 128, 128, 8
    $region5: #{tpu_custom_call.1} parent=1 // pred_fallthru
      _
    // Predicated region
    $region6: #{tpu_custom_call.1} parent=1 // pred_check
      _
    $region7: #{tpu_custom_call.1} parent=1 // pred_check_branch
      %28 = sbr.rel (0) target = $region9
    $region8: #{tpu_custom_call.1} parent=1 // pred_region
      %s30 = ssub.s32 256, 256
      %31 = vsyncadd [#allocation8], %s30
      %s32 = sshll.u32 [#allocation7], 4
      %s33 = int_to_ptr.vmem [resolvable:$true] %s32
      %38 = dma.hbm_to_vmem [thread:$0]  %s1, 256, %s33, [#allocation8], 128, 128, 8
    $region9: #{tpu_custom_call.1} parent=1 // pred_fallthru
      _
    // Predicated region
    $region10: #{tpu_custom_call.1} parent=1 // pred_check
      _
    $region11: #{tpu_custom_call.1} parent=1 // pred_check_branch
      %40 = sbr.rel (0) target = $region13
    $region12: #{tpu_custom_call.1} parent=1 // pred_region
      _
    $region13: #{tpu_custom_call.1} parent=1 // pred_fallthru
      _
    // Predicated region
    $region14: #{tpu_custom_call.1} parent=1 // pred_check
      _
    $region15: #{tpu_custom_call.1} parent=1 // pred_check_branch
      %42 = sbr.rel (0) target = $region17
    $region16: #{tpu_custom_call.1} parent=1 // pred_region
      _
    $region17: #{tpu_custom_call.1} parent=1 // pred_fallthru
      _
    // Predicated region
    $region18: #{tpu_custom_call.1} parent=1 // pred_check
      _
    $region19: #{tpu_custom_call.1} parent=1 // pred_check_branch
      %44 = sbr.rel (0) target = $region21
    $region20: #{tpu_custom_call.1} parent=1 // pred_region
      _
    $region21: #{tpu_custom_call.1} parent=1 // pred_fallthru
      _
    // Predicated region
    $region22: #{tpu_custom_call.1} parent=1 // pred_check
      _
    $region23: #{tpu_custom_call.1} parent=1 // pred_check_branch
      %46 = sbr.rel (0) target = $region25
    $region24: #{tpu_custom_call.1} parent=1 // pred_region
      _
    $region25: #{tpu_custom_call.1} parent=1 // pred_fallthru
      _
    // Predicated region
    $region26: #{tpu_custom_call.1} parent=1 // pred_check
      _
    $region27: #{tpu_custom_call.1} parent=1 // pred_check_branch
      %48 = sbr.rel (0) target = $region29
    $region28: #{tpu_custom_call.1} parent=1 // pred_region
      _
    $region29: #{tpu_custom_call.1} parent=1 // pred_fallthru
      _
    // Predicated region
    $region30: #{tpu_custom_call.1} parent=1 // pred_check
      _
    $region31: #{tpu_custom_call.1} parent=1 // pred_check_branch
      %50 = sbr.rel (0) target = $region33
    $region32: #{tpu_custom_call.1} parent=1 // pred_region
      %51 = dma.done [#allocation5], 256
    $region33: #{tpu_custom_call.1} parent=1 // pred_fallthru
      _
    // Predicated region
    $region34: #{tpu_custom_call.1} parent=1 // pred_check
      _
    $region35: #{tpu_custom_call.1} parent=1 // pred_check_branch
      %53 = sbr.rel (0) target = $region37
    $region36: #{tpu_custom_call.1} parent=1 // pred_region
      %54 = dma.done [#allocation8], 256
    $region37: #{tpu_custom_call.1} parent=1 // pred_fallthru
      _
    %v55 = vld [vmem:[#allocation4] sm:$0xff]
    %v56 = vld [vmem:[#allocation4 + $0x8] sm:$0xff]
    %v57 = vld [vmem:[#allocation7] sm:$0xff]
    %v58 = vld [vmem:[#allocation7 + $0x8] sm:$0xff]
    %v59 = vld [vmem:[%s6] sm:$0x1]
    %v60 = vld [vmem:[%s6 + $0x1] sm:$0x1]
    %v61 = vld [vmem:[%s6 + $0x2] sm:$0x1]
    %v62 = vld [vmem:[%s2] sm:$0xff]
    %v63 = vld [vmem:[%s2 + $0x8] sm:$0xff]
    %v64 = vld [vmem:[%s2 + $0x10] sm:$0xff]
    %v65 = vld [vmem:[%s2 + $0x18] sm:$0xff]
    %v67 = vlaneseq
    %v68 = vshrl.u32 %v67, 7
    %v69 = vsub.s32 0, %v68
    %v70 = vrot.slane %v59, %v69
    %vm72 = vcmask 261120
    %v74 = vsel %vm72, %v55, 0
    %v77 = vsel %vm72, %v56, 0
    %79 = vmatprep.subr.mxu0 0.0
    %80 = vmatpush1.msra.mxu0 %v62
    %81 = vmatprep.subr.mxu0 0.0
    %82 = vmatpush1.msra.mxu0 %v63
    %83 = vmatprep.subr.mxu0 0.0
    %84 = vmatpush1.msra.mxu0 %v64
    %85 = vmatprep.subr.mxu0 0.0
    %86 = vmatpush1.msra.mxu0 %v65
    %87 = vmatprep.subr.mxu0 0.0
    %88 = vmatpush1.msra.mxu0 0.0
    %89 = vmatprep.subr.mxu0 0.0
    %90 = vmatpush1.msra.mxu0 0.0
    %91 = vmatprep.subr.mxu0 0.0
    %92 = vmatpush1.msra.mxu0 0.0
    %93 = vmatprep.subr.mxu0 0.0
    %94 = vmatpush1.msra.mxu0 0.0
    %95 = vmatprep.subr.mxu0 0.0
    %96 = vmatpush1.msra.mxu0 0.0
    %97 = vmatprep.subr.mxu0 0.0
    %98 = vmatpush1.msra.mxu0 0.0
    %99 = vmatprep.subr.mxu0 0.0
    %100 = vmatpush1.msra.mxu0 0.0
    %101 = vmatprep.subr.mxu0 0.0
    %102 = vmatpush1.msra.mxu0 0.0
    %103 = vmatprep.subr.mxu0 0.0
    %104 = vmatpush1.msra.mxu0 0.0
    %105 = vmatprep.subr.mxu0 0.0
    %106 = vmatpush1.msra.mxu0 0.0
    %107 = vmatprep.subr.mxu0 0.0
    %108 = vmatpush1.msra.mxu0 0.0
    %109 = vmatprep.subr.mxu0 0.0
    %110 = vmatpush1.msra.mxu0 0.0
    %111 = vmatprep.subr.mxu0 0.0
    %112 = vmatpush1.msra.mxu0 0.0
    %113 = vmatprep.subr.mxu0 0.0
    %114 = vmatpush1.msra.mxu0 0.0
    %115 = vmatprep.subr.mxu0 0.0
    %116 = vmatpush1.msra.mxu0 0.0
    %117 = vmatprep.subr.mxu0 0.0
    %118 = vmatpush1.msra.mxu0 0.0
    %119 = vmatprep.subr.mxu0 0.0
    %120 = vmatpush1.msra.mxu0 0.0
    %121 = vmatprep.subr.mxu0 0.0
    %122 = vmatpush1.msra.mxu0 0.0
    %123 = vmatprep.subr.mxu0 0.0
    %124 = vmatpush1.msra.mxu0 0.0
    %125 = vmatprep.subr.mxu0 0.0
    %126 = vmatpush1.msra.mxu0 0.0
    %127 = vmatprep.subr.mxu0 0.0
    %128 = vmatpush1.msra.mxu0 0.0
    %129 = vmatprep.subr.mxu0 0.0
    %130 = vmatpush1.msra.mxu0 0.0
    %131 = vmatprep.subr.mxu0 0.0
    %132 = vmatpush1.msra.mxu0 0.0
    %133 = vmatprep.subr.mxu0 0.0
    %134 = vmatpush1.msra.mxu0 0.0
    %135 = vmatprep.subr.mxu0 0.0
    %136 = vmatpush1.msra.mxu0 0.0
    %137 = vmatprep.subr.mxu0 0.0
    %138 = vmatpush1.msra.mxu0 0.0
    %139 = vmatprep.subr.mxu0 0.0
    %140 = vmatpush1.msra.mxu0 0.0
    %141 = vmatprep.subr.mxu0 0.0
    %142 = vmatpush1.msra.mxu0 0.0
    %143 = vmatprep.mubr.f32.mxu0 0.0
    %144 = vmatmul.mubr.f32.gmra.mrb[0].mxu0 %v74
    %v145 = vpop.f32.mrb[0].mxu0
    %v146 = vadd.f32 %v70, %v145
    %v147 = vpop.f32.mrb[0].mxu0
    %148 = vmatprep.mubr.f32.mxu0 0.0
    %149 = vmatmul.mubr.f32.gmra.mrb[0].mxu0 %v77
    %v150 = vpop.f32.mrb[0].mxu0
    %v151 = vadd.f32 %v70, %v150
    %v152 = vpop.f32.mrb[0].mxu0
    %153 = vdwg.mxu0
    %vm154 = vcmask 785408
    %155 = vst.msk [vmem:[#allocation2] sm:$0xff] %vm154, %v146
    %156 = vst.msk [vmem:[#allocation2 + $0x8] sm:$0xff] %vm154, %v151
    %v157 = vld [vmem:[#allocation2] sm:$0xff]
    %v158 = vld [vmem:[#allocation2 + $0x8] sm:$0xff]
    %161 = vrot.lane.b32.xlu0 %v157, 96
    %v162 = vpop.permute.xlu0 %161
    %163 = vrot.lane.b32.xlu0 %v158, 96
    %v164 = vpop.permute.xlu0 %163
    %vm165 = vcmask 64512
    %v166 = vsel %vm165, %v157, 0
    %v168 = vsel %vm165, %v158, 0
    %v170 = vsel %vm165, %v162, 0
    %v172 = vsel %vm165, %v164, 0
    %174 = vmatprep.subr.mxu0 0.0
    %175 = vmatpush1.xpose.msra.mxu0 %v170
    %176 = vmatprep.subr.mxu0 0.0
    %177 = vmatpush1.xpose.msra.mxu0 %v172
    %178 = vmatprep.subr.mxu0 0.0
    %179 = vmatpush1.xpose.msra.mxu0 0.0
    %180 = vmatprep.subr.mxu0 0.0
    %181 = vmatpush1.xpose.msra.mxu0 0.0
    %182 = vmatprep.subr.mxu0 0.0
    %183 = vmatpush1.xpose.msra.mxu0 0.0
    %184 = vmatprep.subr.mxu0 0.0
    %185 = vmatpush1.xpose.msra.mxu0 0.0
    %186 = vmatprep.subr.mxu0 0.0
    %187 = vmatpush1.xpose.msra.mxu0 0.0
    %188 = vmatprep.subr.mxu0 0.0
    %189 = vmatpush1.xpose.msra.mxu0 0.0
    %190 = vmatprep.subr.mxu0 0.0
    %191 = vmatpush1.xpose.msra.mxu0 0.0
    %192 = vmatprep.subr.mxu0 0.0
    %193 = vmatpush1.xpose.msra.mxu0 0.0
    %194 = vmatprep.subr.mxu0 0.0
    %195 = vmatpush1.xpose.msra.mxu0 0.0
    %196 = vmatprep.subr.mxu0 0.0
    %197 = vmatpush1.xpose.msra.mxu0 0.0
    %198 = vmatprep.subr.mxu0 0.0
    %199 = vmatpush1.xpose.msra.mxu0 0.0
    %200 = vmatprep.subr.mxu0 0.0
    %201 = vmatpush1.xpose.msra.mxu0 0.0
    %202 = vmatprep.subr.mxu0 0.0
    %203 = vmatpush1.xpose.msra.mxu0 0.0
    %204 = vmatprep.subr.mxu0 0.0
    %205 = vmatpush1.xpose.msra.mxu0 0.0
    %206 = vmatprep.subr.mxu0 0.0
    %207 = vmatpush1.xpose.msra.mxu0 0.0
    %208 = vmatprep.subr.mxu0 0.0
    %209 = vmatpush1.xpose.msra.mxu0 0.0
    %210 = vmatprep.subr.mxu0 0.0
    %211 = vmatpush1.xpose.msra.mxu0 0.0
    %212 = vmatprep.subr.mxu0 0.0
    %213 = vmatpush1.xpose.msra.mxu0 0.0
    %214 = vmatprep.subr.mxu0 0.0
    %215 = vmatpush1.xpose.msra.mxu0 0.0
    %216 = vmatprep.subr.mxu0 0.0
    %217 = vmatpush1.xpose.msra.mxu0 0.0
    %218 = vmatprep.subr.mxu0 0.0
    %219 = vmatpush1.xpose.msra.mxu0 0.0
    %220 = vmatprep.subr.mxu0 0.0
    %221 = vmatpush1.xpose.msra.mxu0 0.0
    %222 = vmatprep.subr.mxu0 0.0
    %223 = vmatpush1.xpose.msra.mxu0 0.0
    %224 = vmatprep.subr.mxu0 0.0
    %225 = vmatpush1.xpose.msra.mxu0 0.0
    %226 = vmatprep.subr.mxu0 0.0
    %227 = vmatpush1.xpose.msra.mxu0 0.0
    %228 = vmatprep.subr.mxu0 0.0
    %229 = vmatpush1.xpose.msra.mxu0 0.0
    %230 = vmatprep.subr.mxu0 0.0
    %231 = vmatpush1.xpose.msra.mxu0 0.0
    %232 = vmatprep.subr.mxu0 0.0
    %233 = vmatpush1.xpose.msra.mxu0 0.0
    %234 = vmatprep.subr.mxu0 0.0
    %235 = vmatpush1.xpose.msra.mxu0 0.0
    %236 = vmatprep.subr.mxu0 0.0
    %237 = vmatpush1.xpose.msra.mxu0 0.0
    %238 = vmatprep.mubr.f32.mxu0 0.0
    %239 = vmatmul.mubr.f32.gmra.mrb[0].mxu0 %v166
    %v240 = vpop.f32.mrb[0].mxu0
    %v241 = vadd.f32 0.0, %v240
    %v242 = vpop.f32.mrb[0].mxu0
    %243 = vmatprep.mubr.f32.mxu0 0.0
    %244 = vmatmul.mubr.f32.gmra.mrb[0].mxu0 %v168
    %v245 = vpop.f32.mrb[0].mxu0
    %v246 = vadd.f32 0.0, %v245
    %v247 = vpop.f32.mrb[0].mxu0
    %248 = vdwg.mxu0
    %v249 = vmul.f32 %v241, 0.35355338
    %v250 = vmul.f32 %v246, 0.35355338
    %v251 = vadd.f32 %v249, %v57
    %v252 = vadd.f32 %v250, %v58
    %vm253 = vcmask 130048
    %v254 = vsel %vm253, %v251, -inf
    %255 = vmax.xlane.f32.xlu0 %v254
    %v256 = vpop.xlane.xlu0 %255
    %v257 = vsel %vm253, %v252, -inf
    %258 = vmax.xlane.f32.xlu0 %v257
    %v259 = vpop.xlane.xlu0 %258
    %v260 = vsub.f32 %v251, %v256
    %v261 = vsub.f32 %v252, %v259
    %v262 = vmul.f32 %v260, 1.442695
    %v263 = vpow.pop %v262
    %v264 = vmul.f32 %v261, 1.442695
    %v265 = vpow.pop %v264
    %v266 = vsel %vm253, %v263, 0.0
    %267 = vadd.xlane.f32.xlu0 %v266
    %v268 = vpop.xlane.xlu0 %267
    %v269 = vsel %vm253, %v265, 0.0
    %270 = vadd.xlane.f32.xlu0 %v269
    %v271 = vpop.xlane.xlu0 %270
    %v272 = vrcp.pop %v268
    %v273 = vrcp.pop %v271
    %v274 = vmul.f32 %v263, %v272
    %v275 = vmul.f32 %v265, %v273
    %276 = vrot.lane.b32.xlu0 %v157, 64
    %v277 = vpop.permute.xlu0 %276
    %278 = vrot.lane.b32.xlu0 %v158, 64
    %v279 = vpop.permute.xlu0 %278
    %v283 = vsel %vm253, %v274, 0
    %v286 = vsel %vm253, %v275, 0
    %288 = vmatprep.subr.mxu0 0.0
    %289 = vmatpush1.msra.mxu0 %v277
    %290 = vmatprep.subr.mxu0 0.0
    %291 = vmatpush1.msra.mxu0 %v279
    %292 = vmatprep.subr.mxu0 0.0
    %293 = vmatpush1.msra.mxu0 0.0
    %294 = vmatprep.subr.mxu0 0.0
    %295 = vmatpush1.msra.mxu0 0.0
    %296 = vmatprep.subr.mxu0 0.0
    %297 = vmatpush1.msra.mxu0 0.0
    %298 = vmatprep.subr.mxu0 0.0
    %299 = vmatpush1.msra.mxu0 0.0
    %300 = vmatprep.subr.mxu0 0.0
    %301 = vmatpush1.msra.mxu0 0.0
    %302 = vmatprep.subr.mxu0 0.0
    %303 = vmatpush1.msra.mxu0 0.0
    %304 = vmatprep.subr.mxu0 0.0
    %305 = vmatpush1.msra.mxu0 0.0
    %306 = vmatprep.subr.mxu0 0.0
    %307 = vmatpush1.msra.mxu0 0.0
    %308 = vmatprep.subr.mxu0 0.0
    %309 = vmatpush1.msra.mxu0 0.0
    %310 = vmatprep.subr.mxu0 0.0
    %311 = vmatpush1.msra.mxu0 0.0
    %312 = vmatprep.subr.mxu0 0.0
    %313 = vmatpush1.msra.mxu0 0.0
    %314 = vmatprep.subr.mxu0 0.0
    %315 = vmatpush1.msra.mxu0 0.0
    %316 = vmatprep.subr.mxu0 0.0
    %317 = vmatpush1.msra.mxu0 0.0
    %318 = vmatprep.subr.mxu0 0.0
    %319 = vmatpush1.msra.mxu0 0.0
    %320 = vmatprep.subr.mxu0 0.0
    %321 = vmatpush1.msra.mxu0 0.0
    %322 = vmatprep.subr.mxu0 0.0
    %323 = vmatpush1.msra.mxu0 0.0
    %324 = vmatprep.subr.mxu0 0.0
    %325 = vmatpush1.msra.mxu0 0.0
    %326 = vmatprep.subr.mxu0 0.0
    %327 = vmatpush1.msra.mxu0 0.0
    %328 = vmatprep.subr.mxu0 0.0
    %329 = vmatpush1.msra.mxu0 0.0
    %330 = vmatprep.subr.mxu0 0.0
    %331 = vmatpush1.msra.mxu0 0.0
    %332 = vmatprep.subr.mxu0 0.0
    %333 = vmatpush1.msra.mxu0 0.0
    %334 = vmatprep.subr.mxu0 0.0
    %335 = vmatpush1.msra.mxu0 0.0
    %336 = vmatprep.subr.mxu0 0.0
    %337 = vmatpush1.msra.mxu0 0.0
    %338 = vmatprep.subr.mxu0 0.0
    %339 = vmatpush1.msra.mxu0 0.0
    %340 = vmatprep.subr.mxu0 0.0
    %341 = vmatpush1.msra.mxu0 0.0
    %342 = vmatprep.subr.mxu0 0.0
    %343 = vmatpush1.msra.mxu0 0.0
    %344 = vmatprep.subr.mxu0 0.0
    %345 = vmatpush1.msra.mxu0 0.0
    %346 = vmatprep.subr.mxu0 0.0
    %347 = vmatpush1.msra.mxu0 0.0
    %348 = vmatprep.subr.mxu0 0.0
    %349 = vmatpush1.msra.mxu0 0.0
    %350 = vmatprep.subr.mxu0 0.0
    %351 = vmatpush1.msra.mxu0 0.0
    %352 = vmatprep.mubr.f32.mxu0 0.0
    %353 = vmatmul.mubr.f32.gmra.mrb[0].mxu0 %v283
    %v354 = vpop.f32.mrb[0].mxu0
    %v355 = vadd.f32 0.0, %v354
    %v356 = vpop.f32.mrb[0].mxu0
    %357 = vmatprep.mubr.f32.mxu0 0.0
    %358 = vmatmul.mubr.f32.gmra.mrb[0].mxu0 %v286
    %v359 = vpop.f32.mrb[0].mxu0
    %v360 = vadd.f32 0.0, %v359
    %v361 = vpop.f32.mrb[0].mxu0
    %362 = vdwg.mxu0
    %363 = vst.msk [vmem:[#allocation3] sm:$0xff] %vm165, %v355
    %364 = vst.msk [vmem:[#allocation3 + $0x8] sm:$0xff] %vm165, %v360
    %v365 = vld [vmem:[#allocation2] sm:$0xff]
    %v366 = vld [vmem:[#allocation2 + $0x8] sm:$0xff]
    %369 = vrot.lane.b32.xlu0 %v365, 120
    %v370 = vpop.permute.xlu0 %369
    %371 = vrot.lane.b32.xlu0 %v366, 120
    %v372 = vpop.permute.xlu0 %371
    %373 = vrot.lane.b32.xlu0 %v365, 88
    %v374 = vpop.permute.xlu0 %373
    %375 = vrot.lane.b32.xlu0 %v366, 88
    %v376 = vpop.permute.xlu0 %375
    %v377 = vsel %vm165, %v370, 0
    %v379 = vsel %vm165, %v372, 0
    %v381 = vsel %vm165, %v374, 0
    %v383 = vsel %vm165, %v376, 0
    %385 = vmatprep.subr.mxu0 0.0
    %386 = vmatpush1.xpose.msra.mxu0 %v381
    %387 = vmatprep.subr.mxu0 0.0
    %388 = vmatpush1.xpose.msra.mxu0 %v383
    %389 = vmatprep.subr.mxu0 0.0
    %390 = vmatpush1.xpose.msra.mxu0 0.0
    %391 = vmatprep.subr.mxu0 0.0
    %392 = vmatpush1.xpose.msra.mxu0 0.0
    %393 = vmatprep.subr.mxu0 0.0
    %394 = vmatpush1.xpose.msra.mxu0 0.0
    %395 = vmatprep.subr.mxu0 0.0
    %396 = vmatpush1.xpose.msra.mxu0 0.0
    %397 = vmatprep.subr.mxu0 0.0
    %398 = vmatpush1.xpose.msra.mxu0 0.0
    %399 = vmatprep.subr.mxu0 0.0
    %400 = vmatpush1.xpose.msra.mxu0 0.0
    %401 = vmatprep.subr.mxu0 0.0
    %402 = vmatpush1.xpose.msra.mxu0 0.0
    %403 = vmatprep.subr.mxu0 0.0
    %404 = vmatpush1.xpose.msra.mxu0 0.0
    %405 = vmatprep.subr.mxu0 0.0
    %406 = vmatpush1.xpose.msra.mxu0 0.0
    %407 = vmatprep.subr.mxu0 0.0
    %408 = vmatpush1.xpose.msra.mxu0 0.0
    %409 = vmatprep.subr.mxu0 0.0
    %410 = vmatpush1.xpose.msra.mxu0 0.0
    %411 = vmatprep.subr.mxu0 0.0
    %412 = vmatpush1.xpose.msra.mxu0 0.0
    %413 = vmatprep.subr.mxu0 0.0
    %414 = vmatpush1.xpose.msra.mxu0 0.0
    %415 = vmatprep.subr.mxu0 0.0
    %416 = vmatpush1.xpose.msra.mxu0 0.0
    %417 = vmatprep.subr.mxu0 0.0
    %418 = vmatpush1.xpose.msra.mxu0 0.0
    %419 = vmatprep.subr.mxu0 0.0
    %420 = vmatpush1.xpose.msra.mxu0 0.0
    %421 = vmatprep.subr.mxu0 0.0
    %422 = vmatpush1.xpose.msra.mxu0 0.0
    %423 = vmatprep.subr.mxu0 0.0
    %424 = vmatpush1.xpose.msra.mxu0 0.0
    %425 = vmatprep.subr.mxu0 0.0
    %426 = vmatpush1.xpose.msra.mxu0 0.0
    %427 = vmatprep.subr.mxu0 0.0
    %428 = vmatpush1.xpose.msra.mxu0 0.0
    %429 = vmatprep.subr.mxu0 0.0
    %430 = vmatpush1.xpose.msra.mxu0 0.0
    %431 = vmatprep.subr.mxu0 0.0
    %432 = vmatpush1.xpose.msra.mxu0 0.0
    %433 = vmatprep.subr.mxu0 0.0
    %434 = vmatpush1.xpose.msra.mxu0 0.0
    %435 = vmatprep.subr.mxu0 0.0
    %436 = vmatpush1.xpose.msra.mxu0 0.0
    %437 = vmatprep.subr.mxu0 0.0
    %438 = vmatpush1.xpose.msra.mxu0 0.0
    %439 = vmatprep.subr.mxu0 0.0
    %440 = vmatpush1.xpose.msra.mxu0 0.0
    %441 = vmatprep.subr.mxu0 0.0
    %442 = vmatpush1.xpose.msra.mxu0 0.0
    %443 = vmatprep.subr.mxu0 0.0
    %444 = vmatpush1.xpose.msra.mxu0 0.0
    %445 = vmatprep.subr.mxu0 0.0
    %446 = vmatpush1.xpose.msra.mxu0 0.0
    %447 = vmatprep.subr.mxu0 0.0
    %448 = vmatpush1.xpose.msra.mxu0 0.0
    %449 = vmatprep.mubr.f32.mxu0 0.0
    %450 = vmatmul.mubr.f32.gmra.mrb[0].mxu0 %v377
    %v451 = vpop.f32.mrb[0].mxu0
    %v452 = vadd.f32 0.0, %v451
    %v453 = vpop.f32.mrb[0].mxu0
    %454 = vmatprep.mubr.f32.mxu0 0.0
    %455 = vmatmul.mubr.f32.gmra.mrb[0].mxu0 %v379
    %v456 = vpop.f32.mrb[0].mxu0
    %v457 = vadd.f32 0.0, %v456
    %v458 = vpop.f32.mrb[0].mxu0
    %459 = vdwg.mxu0
    %v460 = vmul.f32 %v452, 0.35355338
    %v461 = vmul.f32 %v457, 0.35355338
    %v462 = vadd.f32 %v460, %v57
    %v463 = vadd.f32 %v461, %v58
    %v464 = vsel %vm253, %v462, -inf
    %465 = vmax.xlane.f32.xlu0 %v464
    %v466 = vpop.xlane.xlu0 %465
    %v467 = vsel %vm253, %v463, -inf
    %468 = vmax.xlane.f32.xlu0 %v467
    %v469 = vpop.xlane.xlu0 %468
    %v470 = vsub.f32 %v462, %v466
    %v471 = vsub.f32 %v463, %v469
    %v472 = vmul.f32 %v470, 1.442695
    %v473 = vpow.pop %v472
    %v474 = vmul.f32 %v471, 1.442695
    %v475 = vpow.pop %v474
    %v476 = vsel %vm253, %v473, 0.0
    %477 = vadd.xlane.f32.xlu0 %v476
    %v478 = vpop.xlane.xlu0 %477
    %v479 = vsel %vm253, %v475, 0.0
    %480 = vadd.xlane.f32.xlu0 %v479
    %v481 = vpop.xlane.xlu0 %480
    %v482 = vrcp.pop %v478
    %v483 = vrcp.pop %v481
    %v484 = vmul.f32 %v473, %v482
    %v485 = vmul.f32 %v475, %v483
    %486 = vrot.lane.b32.xlu0 %v365, 56
    %v487 = vpop.permute.xlu0 %486
    %488 = vrot.lane.b32.xlu0 %v366, 56
    %v489 = vpop.permute.xlu0 %488
    %v493 = vsel %vm253, %v484, 0
    %v496 = vsel %vm253, %v485, 0
    %498 = vmatprep.subr.mxu0 0.0
    %499 = vmatpush1.msra.mxu0 %v487
    %500 = vmatprep.subr.mxu0 0.0
    %501 = vmatpush1.msra.mxu0 %v489
    %502 = vmatprep.subr.mxu0 0.0
    %503 = vmatpush1.msra.mxu0 0.0
    %504 = vmatprep.subr.mxu0 0.0
    %505 = vmatpush1.msra.mxu0 0.0
    %506 = vmatprep.subr.mxu0 0.0
    %507 = vmatpush1.msra.mxu0 0.0
    %508 = vmatprep.subr.mxu0 0.0
    %509 = vmatpush1.msra.mxu0 0.0
    %510 = vmatprep.subr.mxu0 0.0
    %511 = vmatpush1.msra.mxu0 0.0
    %512 = vmatprep.subr.mxu0 0.0
    %513 = vmatpush1.msra.mxu0 0.0
    %514 = vmatprep.subr.mxu0 0.0
    %515 = vmatpush1.msra.mxu0 0.0
    %516 = vmatprep.subr.mxu0 0.0
    %517 = vmatpush1.msra.mxu0 0.0
    %518 = vmatprep.subr.mxu0 0.0
    %519 = vmatpush1.msra.mxu0 0.0
    %520 = vmatprep.subr.mxu0 0.0
    %521 = vmatpush1.msra.mxu0 0.0
    %522 = vmatprep.subr.mxu0 0.0
    %523 = vmatpush1.msra.mxu0 0.0
    %524 = vmatprep.subr.mxu0 0.0
    %525 = vmatpush1.msra.mxu0 0.0
    %526 = vmatprep.subr.mxu0 0.0
    %527 = vmatpush1.msra.mxu0 0.0
    %528 = vmatprep.subr.mxu0 0.0
    %529 = vmatpush1.msra.mxu0 0.0
    %530 = vmatprep.subr.mxu0 0.0
    %531 = vmatpush1.msra.mxu0 0.0
    %532 = vmatprep.subr.mxu0 0.0
    %533 = vmatpush1.msra.mxu0 0.0
    %534 = vmatprep.subr.mxu0 0.0
    %535 = vmatpush1.msra.mxu0 0.0
    %536 = vmatprep.subr.mxu0 0.0
    %537 = vmatpush1.msra.mxu0 0.0
    %538 = vmatprep.subr.mxu0 0.0
    %539 = vmatpush1.msra.mxu0 0.0
    %540 = vmatprep.subr.mxu0 0.0
    %541 = vmatpush1.msra.mxu0 0.0
    %542 = vmatprep.subr.mxu0 0.0
    %543 = vmatpush1.msra.mxu0 0.0
    %544 = vmatprep.subr.mxu0 0.0
    %545 = vmatpush1.msra.mxu0 0.0
    %546 = vmatprep.subr.mxu0 0.0
    %547 = vmatpush1.msra.mxu0 0.0
    %548 = vmatprep.subr.mxu0 0.0
    %549 = vmatpush1.msra.mxu0 0.0
    %550 = vmatprep.subr.mxu0 0.0
    %551 = vmatpush1.msra.mxu0 0.0
    %552 = vmatprep.subr.mxu0 0.0
    %553 = vmatpush1.msra.mxu0 0.0
    %554 = vmatprep.subr.mxu0 0.0
    %555 = vmatpush1.msra.mxu0 0.0
    %556 = vmatprep.subr.mxu0 0.0
    %557 = vmatpush1.msra.mxu0 0.0
    %558 = vmatprep.subr.mxu0 0.0
    %559 = vmatpush1.msra.mxu0 0.0
    %560 = vmatprep.subr.mxu0 0.0
    %561 = vmatpush1.msra.mxu0 0.0
    %562 = vmatprep.mubr.f32.mxu0 0.0
    %563 = vmatmul.mubr.f32.gmra.mrb[0].mxu0 %v493
    %v564 = vpop.f32.mrb[0].mxu0
    %v565 = vadd.f32 0.0, %v564
    %v566 = vpop.f32.mrb[0].mxu0
    %567 = vmatprep.mubr.f32.mxu0 0.0
    %568 = vmatmul.mubr.f32.gmra.mrb[0].mxu0 %v496
    %v569 = vpop.f32.mrb[0].mxu0
    %v570 = vadd.f32 0.0, %v569
    %v571 = vpop.f32.mrb[0].mxu0
    %572 = vdwg.mxu0
    %575 = vrot.lane.b32.xlu0 %v565, 8
    %v576 = vpop.permute.xlu0 %575
    %577 = vrot.lane.b32.xlu0 %v570, 8
    %v578 = vpop.permute.xlu0 %577
    %vm581 = vcmask 130112
    %582 = vst.msk [vmem:[#allocation3] sm:$0xff] %vm581, %v576
    %583 = vst.msk [vmem:[#allocation3 + $0x8] sm:$0xff] %vm581, %v578
    %v584 = vld [vmem:[#allocation2] sm:$0xff]
    %v585 = vld [vmem:[#allocation2 + $0x8] sm:$0xff]
    %588 = vrot.lane.b32.xlu0 %v584, 112
    %v589 = vpop.permute.xlu0 %588
    %590 = vrot.lane.b32.xlu0 %v585, 112
    %v591 = vpop.permute.xlu0 %590
    %592 = vrot.lane.b32.xlu0 %v584, 80
    %v593 = vpop.permute.xlu0 %592
    %594 = vrot.lane.b32.xlu0 %v585, 80
    %v595 = vpop.permute.xlu0 %594
    %v596 = vsel %vm165, %v589, 0
    %v598 = vsel %vm165, %v591, 0
    %v600 = vsel %vm165, %v593, 0
    %v602 = vsel %vm165, %v595, 0
    %604 = vmatprep.subr.mxu0 0.0
    %605 = vmatpush1.xpose.msra.mxu0 %v600
    %606 = vmatprep.subr.mxu0 0.0
    %607 = vmatpush1.xpose.msra.mxu0 %v602
    %608 = vmatprep.subr.mxu0 0.0
    %609 = vmatpush1.xpose.msra.mxu0 0.0
    %610 = vmatprep.subr.mxu0 0.0
    %611 = vmatpush1.xpose.msra.mxu0 0.0
    %612 = vmatprep.subr.mxu0 0.0
    %613 = vmatpush1.xpose.msra.mxu0 0.0
    %614 = vmatprep.subr.mxu0 0.0
    %615 = vmatpush1.xpose.msra.mxu0 0.0
    %616 = vmatprep.subr.mxu0 0.0
    %617 = vmatpush1.xpose.msra.mxu0 0.0
    %618 = vmatprep.subr.mxu0 0.0
    %619 = vmatpush1.xpose.msra.mxu0 0.0
    %620 = vmatprep.subr.mxu0 0.0
    %621 = vmatpush1.xpose.msra.mxu0 0.0
    %622 = vmatprep.subr.mxu0 0.0
    %623 = vmatpush1.xpose.msra.mxu0 0.0
    %624 = vmatprep.subr.mxu0 0.0
    %625 = vmatpush1.xpose.msra.mxu0 0.0
    %626 = vmatprep.subr.mxu0 0.0
    %627 = vmatpush1.xpose.msra.mxu0 0.0
    %628 = vmatprep.subr.mxu0 0.0
    %629 = vmatpush1.xpose.msra.mxu0 0.0
    %630 = vmatprep.subr.mxu0 0.0
    %631 = vmatpush1.xpose.msra.mxu0 0.0
    %632 = vmatprep.subr.mxu0 0.0
    %633 = vmatpush1.xpose.msra.mxu0 0.0
    %634 = vmatprep.subr.mxu0 0.0
    %635 = vmatpush1.xpose.msra.mxu0 0.0
    %636 = vmatprep.subr.mxu0 0.0
    %637 = vmatpush1.xpose.msra.mxu0 0.0
    %638 = vmatprep.subr.mxu0 0.0
    %639 = vmatpush1.xpose.msra.mxu0 0.0
    %640 = vmatprep.subr.mxu0 0.0
    %641 = vmatpush1.xpose.msra.mxu0 0.0
    %642 = vmatprep.subr.mxu0 0.0
    %643 = vmatpush1.xpose.msra.mxu0 0.0
    %644 = vmatprep.subr.mxu0 0.0
    %645 = vmatpush1.xpose.msra.mxu0 0.0
    %646 = vmatprep.subr.mxu0 0.0
    %647 = vmatpush1.xpose.msra.mxu0 0.0
    %648 = vmatprep.subr.mxu0 0.0
    %649 = vmatpush1.xpose.msra.mxu0 0.0
    %650 = vmatprep.subr.mxu0 0.0
    %651 = vmatpush1.xpose.msra.mxu0 0.0
    %652 = vmatprep.subr.mxu0 0.0
    %653 = vmatpush1.xpose.msra.mxu0 0.0
    %654 = vmatprep.subr.mxu0 0.0
    %655 = vmatpush1.xpose.msra.mxu0 0.0
    %656 = vmatprep.subr.mxu0 0.0
    %657 = vmatpush1.xpose.msra.mxu0 0.0
    %658 = vmatprep.subr.mxu0 0.0
    %659 = vmatpush1.xpose.msra.mxu0 0.0
    %660 = vmatprep.subr.mxu0 0.0
    %661 = vmatpush1.xpose.msra.mxu0 0.0
    %662 = vmatprep.subr.mxu0 0.0
    %663 = vmatpush1.xpose.msra.mxu0 0.0
    %664 = vmatprep.subr.mxu0 0.0
    %665 = vmatpush1.xpose.msra.mxu0 0.0
    %666 = vmatprep.subr.mxu0 0.0
    %667 = vmatpush1.xpose.msra.mxu0 0.0
    %668 = vmatprep.mubr.f32.mxu0 0.0
    %669 = vmatmul.mubr.f32.gmra.mrb[0].mxu0 %v596
    %v670 = vpop.f32.mrb[0].mxu0
    %v671 = vadd.f32 0.0, %v670
    %v672 = vpop.f32.mrb[0].mxu0
    %673 = vmatprep.mubr.f32.mxu0 0.0
    %674 = vmatmul.mubr.f32.gmra.mrb[0].mxu0 %v598
    %v675 = vpop.f32.mrb[0].mxu0
    %v676 = vadd.f32 0.0, %v675
    %v677 = vpop.f32.mrb[0].mxu0
    %678 = vdwg.mxu0
    %v679 = vmul.f32 %v671, 0.35355338
    %v680 = vmul.f32 %v676, 0.35355338
    %v681 = vadd.f32 %v679, %v57
    %v682 = vadd.f32 %v680, %v58
    %v683 = vsel %vm253, %v681, -inf
    %684 = vmax.xlane.f32.xlu0 %v683
    %v685 = vpop.xlane.xlu0 %684
    %v686 = vsel %vm253, %v682, -inf
    %687 = vmax.xlane.f32.xlu0 %v686
    %v688 = vpop.xlane.xlu0 %687
    %v689 = vsub.f32 %v681, %v685
    %v690 = vsub.f32 %v682, %v688
    %v691 = vmul.f32 %v689, 1.442695
    %v692 = vpow.pop %v691
    %v693 = vmul.f32 %v690, 1.442695
    %v694 = vpow.pop %v693
    %v695 = vsel %vm253, %v692, 0.0
    %696 = vadd.xlane.f32.xlu0 %v695
    %v697 = vpop.xlane.xlu0 %696
    %v698 = vsel %vm253, %v694, 0.0
    %699 = vadd.xlane.f32.xlu0 %v698
    %v700 = vpop.xlane.xlu0 %699
    %v701 = vrcp.pop %v697
    %v702 = vrcp.pop %v700
    %v703 = vmul.f32 %v692, %v701
    %v704 = vmul.f32 %v694, %v702
    %705 = vrot.lane.b32.xlu0 %v584, 48
    %v706 = vpop.permute.xlu0 %705
    %707 = vrot.lane.b32.xlu0 %v585, 48
    %v708 = vpop.permute.xlu0 %707
    %v712 = vsel %vm253, %v703, 0
    %v715 = vsel %vm253, %v704, 0
    %717 = vmatprep.subr.mxu0 0.0
    %718 = vmatpush1.msra.mxu0 %v706
    %719 = vmatprep.subr.mxu0 0.0
    %720 = vmatpush1.msra.mxu0 %v708
    %721 = vmatprep.subr.mxu0 0.0
    %722 = vmatpush1.msra.mxu0 0.0
    %723 = vmatprep.subr.mxu0 0.0
    %724 = vmatpush1.msra.mxu0 0.0
    %725 = vmatprep.subr.mxu0 0.0
    %726 = vmatpush1.msra.mxu0 0.0
    %727 = vmatprep.subr.mxu0 0.0
    %728 = vmatpush1.msra.mxu0 0.0
    %729 = vmatprep.subr.mxu0 0.0
    %730 = vmatpush1.msra.mxu0 0.0
    %731 = vmatprep.subr.mxu0 0.0
    %732 = vmatpush1.msra.mxu0 0.0
    %733 = vmatprep.subr.mxu0 0.0
    %734 = vmatpush1.msra.mxu0 0.0
    %735 = vmatprep.subr.mxu0 0.0
    %736 = vmatpush1.msra.mxu0 0.0
    %737 = vmatprep.subr.mxu0 0.0
    %738 = vmatpush1.msra.mxu0 0.0
    %739 = vmatprep.subr.mxu0 0.0
    %740 = vmatpush1.msra.mxu0 0.0
    %741 = vmatprep.subr.mxu0 0.0
    %742 = vmatpush1.msra.mxu0 0.0
    %743 = vmatprep.subr.mxu0 0.0
    %744 = vmatpush1.msra.mxu0 0.0
    %745 = vmatprep.subr.mxu0 0.0
    %746 = vmatpush1.msra.mxu0 0.0
    %747 = vmatprep.subr.mxu0 0.0
    %748 = vmatpush1.msra.mxu0 0.0
    %749 = vmatprep.subr.mxu0 0.0
    %750 = vmatpush1.msra.mxu0 0.0
    %751 = vmatprep.subr.mxu0 0.0
    %752 = vmatpush1.msra.mxu0 0.0
    %753 = vmatprep.subr.mxu0 0.0
    %754 = vmatpush1.msra.mxu0 0.0
    %755 = vmatprep.subr.mxu0 0.0
    %756 = vmatpush1.msra.mxu0 0.0
    %757 = vmatprep.subr.mxu0 0.0
    %758 = vmatpush1.msra.mxu0 0.0
    %759 = vmatprep.subr.mxu0 0.0
    %760 = vmatpush1.msra.mxu0 0.0
    %761 = vmatprep.subr.mxu0 0.0
    %762 = vmatpush1.msra.mxu0 0.0
    %763 = vmatprep.subr.mxu0 0.0
    %764 = vmatpush1.msra.mxu0 0.0
    %765 = vmatprep.subr.mxu0 0.0
    %766 = vmatpush1.msra.mxu0 0.0
    %767 = vmatprep.subr.mxu0 0.0
    %768 = vmatpush1.msra.mxu0 0.0
    %769 = vmatprep.subr.mxu0 0.0
    %770 = vmatpush1.msra.mxu0 0.0
    %771 = vmatprep.subr.mxu0 0.0
    %772 = vmatpush1.msra.mxu0 0.0
    %773 = vmatprep.subr.mxu0 0.0
    %774 = vmatpush1.msra.mxu0 0.0
    %775 = vmatprep.subr.mxu0 0.0
    %776 = vmatpush1.msra.mxu0 0.0
    %777 = vmatprep.subr.mxu0 0.0
    %778 = vmatpush1.msra.mxu0 0.0
    %779 = vmatprep.subr.mxu0 0.0
    %780 = vmatpush1.msra.mxu0 0.0
    %781 = vmatprep.mubr.f32.mxu0 0.0
    %782 = vmatmul.mubr.f32.gmra.mrb[0].mxu0 %v712
    %v783 = vpop.f32.mrb[0].mxu0
    %v784 = vadd.f32 0.0, %v783
    %v785 = vpop.f32.mrb[0].mxu0
    %786 = vmatprep.mubr.f32.mxu0 0.0
    %787 = vmatmul.mubr.f32.gmra.mrb[0].mxu0 %v715
    %v788 = vpop.f32.mrb[0].mxu0
    %v789 = vadd.f32 0.0, %v788
    %v790 = vpop.f32.mrb[0].mxu0
    %791 = vdwg.mxu0
    %794 = vrot.lane.b32.xlu0 %v784, 16
    %v795 = vpop.permute.xlu0 %794
    %796 = vrot.lane.b32.xlu0 %v789, 16
    %v797 = vpop.permute.xlu0 %796
    %vm800 = vcmask 195712
    %801 = vst.msk [vmem:[#allocation3] sm:$0xff] %vm800, %v795
    %802 = vst.msk [vmem:[#allocation3 + $0x8] sm:$0xff] %vm800, %v797
    %v803 = vld [vmem:[#allocation2] sm:$0xff]
    %v804 = vld [vmem:[#allocation2 + $0x8] sm:$0xff]
    %807 = vrot.lane.b32.xlu0 %v803, 104
    %v808 = vpop.permute.xlu0 %807
    %809 = vrot.lane.b32.xlu0 %v804, 104
    %v810 = vpop.permute.xlu0 %809
    %811 = vrot.lane.b32.xlu0 %v803, 72
    %v812 = vpop.permute.xlu0 %811
    %813 = vrot.lane.b32.xlu0 %v804, 72
    %v814 = vpop.permute.xlu0 %813
    %v815 = vsel %vm165, %v808, 0
    %v817 = vsel %vm165, %v810, 0
    %v819 = vsel %vm165, %v812, 0
    %v821 = vsel %vm165, %v814, 0
    %823 = vmatprep.subr.mxu0 0.0
    %824 = vmatpush1.xpose.msra.mxu0 %v819
    %825 = vmatprep.subr.mxu0 0.0
    %826 = vmatpush1.xpose.msra.mxu0 %v821
    %827 = vmatprep.subr.mxu0 0.0
    %828 = vmatpush1.xpose.msra.mxu0 0.0
    %829 = vmatprep.subr.mxu0 0.0
    %830 = vmatpush1.xpose.msra.mxu0 0.0
    %831 = vmatprep.subr.mxu0 0.0
    %832 = vmatpush1.xpose.msra.mxu0 0.0
    %833 = vmatprep.subr.mxu0 0.0
    %834 = vmatpush1.xpose.msra.mxu0 0.0
    %835 = vmatprep.subr.mxu0 0.0
    %836 = vmatpush1.xpose.msra.mxu0 0.0
    %837 = vmatprep.subr.mxu0 0.0
    %838 = vmatpush1.xpose.msra.mxu0 0.0
    %839 = vmatprep.subr.mxu0 0.0
    %840 = vmatpush1.xpose.msra.mxu0 0.0
    %841 = vmatprep.subr.mxu0 0.0
    %842 = vmatpush1.xpose.msra.mxu0 0.0
    %843 = vmatprep.subr.mxu0 0.0
    %844 = vmatpush1.xpose.msra.mxu0 0.0
    %845 = vmatprep.subr.mxu0 0.0
    %846 = vmatpush1.xpose.msra.mxu0 0.0
    %847 = vmatprep.subr.mxu0 0.0
    %848 = vmatpush1.xpose.msra.mxu0 0.0
    %849 = vmatprep.subr.mxu0 0.0
    %850 = vmatpush1.xpose.msra.mxu0 0.0
    %851 = vmatprep.subr.mxu0 0.0
    %852 = vmatpush1.xpose.msra.mxu0 0.0
    %853 = vmatprep.subr.mxu0 0.0
    %854 = vmatpush1.xpose.msra.mxu0 0.0
    %855 = vmatprep.subr.mxu0 0.0
    %856 = vmatpush1.xpose.msra.mxu0 0.0
    %857 = vmatprep.subr.mxu0 0.0
    %858 = vmatpush1.xpose.msra.mxu0 0.0
    %859 = vmatprep.subr.mxu0 0.0
    %860 = vmatpush1.xpose.msra.mxu0 0.0
    %861 = vmatprep.subr.mxu0 0.0
    %862 = vmatpush1.xpose.msra.mxu0 0.0
    %863 = vmatprep.subr.mxu0 0.0
    %864 = vmatpush1.xpose.msra.mxu0 0.0
    %865 = vmatprep.subr.mxu0 0.0
    %866 = vmatpush1.xpose.msra.mxu0 0.0
    %867 = vmatprep.subr.mxu0 0.0
    %868 = vmatpush1.xpose.msra.mxu0 0.0
    %869 = vmatprep.subr.mxu0 0.0
    %870 = vmatpush1.xpose.msra.mxu0 0.0
    %871 = vmatprep.subr.mxu0 0.0
    %872 = vmatpush1.xpose.msra.mxu0 0.0
    %873 = vmatprep.subr.mxu0 0.0
    %874 = vmatpush1.xpose.msra.mxu0 0.0
    %875 = vmatprep.subr.mxu0 0.0
    %876 = vmatpush1.xpose.msra.mxu0 0.0
    %877 = vmatprep.subr.mxu0 0.0
    %878 = vmatpush1.xpose.msra.mxu0 0.0
    %879 = vmatprep.subr.mxu0 0.0
    %880 = vmatpush1.xpose.msra.mxu0 0.0
    %881 = vmatprep.subr.mxu0 0.0
    %882 = vmatpush1.xpose.msra.mxu0 0.0
    %883 = vmatprep.subr.mxu0 0.0
    %884 = vmatpush1.xpose.msra.mxu0 0.0
    %885 = vmatprep.subr.mxu0 0.0
    %886 = vmatpush1.xpose.msra.mxu0 0.0
    %887 = vmatprep.mubr.f32.mxu0 0.0
    %888 = vmatmul.mubr.f32.gmra.mrb[0].mxu0 %v815
    %v889 = vpop.f32.mrb[0].mxu0
    %v890 = vadd.f32 0.0, %v889
    %v891 = vpop.f32.mrb[0].mxu0
    %892 = vmatprep.mubr.f32.mxu0 0.0
    %893 = vmatmul.mubr.f32.gmra.mrb[0].mxu0 %v817
    %v894 = vpop.f32.mrb[0].mxu0
    %v895 = vadd.f32 0.0, %v894
    %v896 = vpop.f32.mrb[0].mxu0
    %897 = vdwg.mxu0
    %v898 = vmul.f32 %v890, 0.35355338
    %v899 = vmul.f32 %v895, 0.35355338
    %v900 = vadd.f32 %v898, %v57
    %v901 = vadd.f32 %v899, %v58
    %v902 = vsel %vm253, %v900, -inf
    %903 = vmax.xlane.f32.xlu0 %v902
    %v904 = vpop.xlane.xlu0 %903
    %v905 = vsel %vm253, %v901, -inf
    %906 = vmax.xlane.f32.xlu0 %v905
    %v907 = vpop.xlane.xlu0 %906
    %v908 = vsub.f32 %v900, %v904
    %v909 = vsub.f32 %v901, %v907
    %v910 = vmul.f32 %v908, 1.442695
    %v911 = vpow.pop %v910
    %v912 = vmul.f32 %v909, 1.442695
    %v913 = vpow.pop %v912
    %v914 = vsel %vm253, %v911, 0.0
    %915 = vadd.xlane.f32.xlu0 %v914
    %v916 = vpop.xlane.xlu0 %915
    %v917 = vsel %vm253, %v913, 0.0
    %918 = vadd.xlane.f32.xlu0 %v917
    %v919 = vpop.xlane.xlu0 %918
    %v920 = vrcp.pop %v916
    %v921 = vrcp.pop %v919
    %v922 = vmul.f32 %v911, %v920
    %v923 = vmul.f32 %v913, %v921
    %924 = vrot.lane.b32.xlu0 %v803, 40
    %v925 = vpop.permute.xlu0 %924
    %926 = vrot.lane.b32.xlu0 %v804, 40
    %v927 = vpop.permute.xlu0 %926
    %v931 = vsel %vm253, %v922, 0
    %v934 = vsel %vm253, %v923, 0
    %936 = vmatprep.subr.mxu0 0.0
    %937 = vmatpush1.msra.mxu0 %v925
    %938 = vmatprep.subr.mxu0 0.0
    %939 = vmatpush1.msra.mxu0 %v927
    %940 = vmatprep.subr.mxu0 0.0
    %941 = vmatpush1.msra.mxu0 0.0
    %942 = vmatprep.subr.mxu0 0.0
    %943 = vmatpush1.msra.mxu0 0.0
    %944 = vmatprep.subr.mxu0 0.0
    %945 = vmatpush1.msra.mxu0 0.0
    %946 = vmatprep.subr.mxu0 0.0
    %947 = vmatpush1.msra.mxu0 0.0
    %948 = vmatprep.subr.mxu0 0.0
    %949 = vmatpush1.msra.mxu0 0.0
    %950 = vmatprep.subr.mxu0 0.0
    %951 = vmatpush1.msra.mxu0 0.0
    %952 = vmatprep.subr.mxu0 0.0
    %953 = vmatpush1.msra.mxu0 0.0
    %954 = vmatprep.subr.mxu0 0.0
    %955 = vmatpush1.msra.mxu0 0.0
    %956 = vmatprep.subr.mxu0 0.0
    %957 = vmatpush1.msra.mxu0 0.0
    %958 = vmatprep.subr.mxu0 0.0
    %959 = vmatpush1.msra.mxu0 0.0
    %960 = vmatprep.subr.mxu0 0.0
    %961 = vmatpush1.msra.mxu0 0.0
    %962 = vmatprep.subr.mxu0 0.0
    %963 = vmatpush1.msra.mxu0 0.0
    %964 = vmatprep.subr.mxu0 0.0
    %965 = vmatpush1.msra.mxu0 0.0
    %966 = vmatprep.subr.mxu0 0.0
    %967 = vmatpush1.msra.mxu0 0.0
    %968 = vmatprep.subr.mxu0 0.0
    %969 = vmatpush1.msra.mxu0 0.0
    %970 = vmatprep.subr.mxu0 0.0
    %971 = vmatpush1.msra.mxu0 0.0
    %972 = vmatprep.subr.mxu0 0.0
    %973 = vmatpush1.msra.mxu0 0.0
    %974 = vmatprep.subr.mxu0 0.0
    %975 = vmatpush1.msra.mxu0 0.0
    %976 = vmatprep.subr.mxu0 0.0
    %977 = vmatpush1.msra.mxu0 0.0
    %978 = vmatprep.subr.mxu0 0.0
    %979 = vmatpush1.msra.mxu0 0.0
    %980 = vmatprep.subr.mxu0 0.0
    %981 = vmatpush1.msra.mxu0 0.0
    %982 = vmatprep.subr.mxu0 0.0
    %983 = vmatpush1.msra.mxu0 0.0
    %984 = vmatprep.subr.mxu0 0.0
    %985 = vmatpush1.msra.mxu0 0.0
    %986 = vmatprep.subr.mxu0 0.0
    %987 = vmatpush1.msra.mxu0 0.0
    %988 = vmatprep.subr.mxu0 0.0
    %989 = vmatpush1.msra.mxu0 0.0
    %990 = vmatprep.subr.mxu0 0.0
    %991 = vmatpush1.msra.mxu0 0.0
    %992 = vmatprep.subr.mxu0 0.0
    %993 = vmatpush1.msra.mxu0 0.0
    %994 = vmatprep.subr.mxu0 0.0
    %995 = vmatpush1.msra.mxu0 0.0
    %996 = vmatprep.subr.mxu0 0.0
    %997 = vmatpush1.msra.mxu0 0.0
    %998 = vmatprep.subr.mxu0 0.0
    %999 = vmatpush1.msra.mxu0 0.0
    %1000 = vmatprep.mubr.f32.mxu0 0.0
    %1001 = vmatmul.mubr.f32.gmra.mrb[0].mxu0 %v931
    %v1002 = vpop.f32.mrb[0].mxu0
    %v1003 = vadd.f32 0.0, %v1002
    %v1004 = vpop.f32.mrb[0].mxu0
    %1005 = vmatprep.mubr.f32.mxu0 0.0
    %1006 = vmatmul.mubr.f32.gmra.mrb[0].mxu0 %v934
    %v1007 = vpop.f32.mrb[0].mxu0
    %v1008 = vadd.f32 0.0, %v1007
    %v1009 = vpop.f32.mrb[0].mxu0
    %1010 = vdwg.mxu0
    %1013 = vrot.lane.b32.xlu0 %v1003, 24
    %v1014 = vpop.permute.xlu0 %1013
    %1015 = vrot.lane.b32.xlu0 %v1008, 24
    %v1016 = vpop.permute.xlu0 %1015
    %vm1019 = vcmask 261312
    %1020 = vst.msk [vmem:[#allocation3] sm:$0xff] %vm1019, %v1014
    %1021 = vst.msk [vmem:[#allocation3 + $0x8] sm:$0xff] %vm1019, %v1016
    %v1022 = vld [vmem:[#allocation3] sm:$0xff]
    %v1023 = vld [vmem:[#allocation3 + $0x8] sm:$0xff]
    %v1024 = vld [vmem:[%s3] sm:$0xff]
    %v1025 = vld [vmem:[%s3 + $0x8] sm:$0xff]
    %v1026 = vld [vmem:[%s3 + $0x10] sm:$0xff]
    %v1027 = vld [vmem:[%s3 + $0x18] sm:$0xff]
    %1028 = vrot.lane.b32.xlu0 %v70, 32
    %v1029 = vpop.permute.xlu0 %1028
    %v1032 = vsel %vm72, %v1022, 0
    %v1035 = vsel %vm72, %v1023, 0
    %1037 = vmatprep.subr.mxu0 0.0
    %1038 = vmatpush1.msra.mxu0 %v1024
    %1039 = vmatprep.subr.mxu0 0.0
    %1040 = vmatpush1.msra.mxu0 %v1025
    %1041 = vmatprep.subr.mxu0 0.0
    %1042 = vmatpush1.msra.mxu0 %v1026
    %1043 = vmatprep.subr.mxu0 0.0
    %1044 = vmatpush1.msra.mxu0 %v1027
    %1045 = vmatprep.subr.mxu0 0.0
    %1046 = vmatpush1.msra.mxu0 0.0
    %1047 = vmatprep.subr.mxu0 0.0
    %1048 = vmatpush1.msra.mxu0 0.0
    %1049 = vmatprep.subr.mxu0 0.0
    %1050 = vmatpush1.msra.mxu0 0.0
    %1051 = vmatprep.subr.mxu0 0.0
    %1052 = vmatpush1.msra.mxu0 0.0
    %1053 = vmatprep.subr.mxu0 0.0
    %1054 = vmatpush1.msra.mxu0 0.0
    %1055 = vmatprep.subr.mxu0 0.0
    %1056 = vmatpush1.msra.mxu0 0.0
    %1057 = vmatprep.subr.mxu0 0.0
    %1058 = vmatpush1.msra.mxu0 0.0
    %1059 = vmatprep.subr.mxu0 0.0
    %1060 = vmatpush1.msra.mxu0 0.0
    %1061 = vmatprep.subr.mxu0 0.0
    %1062 = vmatpush1.msra.mxu0 0.0
    %1063 = vmatprep.subr.mxu0 0.0
    %1064 = vmatpush1.msra.mxu0 0.0
    %1065 = vmatprep.subr.mxu0 0.0
    %1066 = vmatpush1.msra.mxu0 0.0
    %1067 = vmatprep.subr.mxu0 0.0
    %1068 = vmatpush1.msra.mxu0 0.0
    %1069 = vmatprep.subr.mxu0 0.0
    %1070 = vmatpush1.msra.mxu0 0.0
    %1071 = vmatprep.subr.mxu0 0.0
    %1072 = vmatpush1.msra.mxu0 0.0
    %1073 = vmatprep.subr.mxu0 0.0
    %1074 = vmatpush1.msra.mxu0 0.0
    %1075 = vmatprep.subr.mxu0 0.0
    %1076 = vmatpush1.msra.mxu0 0.0
    %1077 = vmatprep.subr.mxu0 0.0
    %1078 = vmatpush1.msra.mxu0 0.0
    %1079 = vmatprep.subr.mxu0 0.0
    %1080 = vmatpush1.msra.mxu0 0.0
    %1081 = vmatprep.subr.mxu0 0.0
    %1082 = vmatpush1.msra.mxu0 0.0
    %1083 = vmatprep.subr.mxu0 0.0
    %1084 = vmatpush1.msra.mxu0 0.0
    %1085 = vmatprep.subr.mxu0 0.0
    %1086 = vmatpush1.msra.mxu0 0.0
    %1087 = vmatprep.subr.mxu0 0.0
    %1088 = vmatpush1.msra.mxu0 0.0
    %1089 = vmatprep.subr.mxu0 0.0
    %1090 = vmatpush1.msra.mxu0 0.0
    %1091 = vmatprep.subr.mxu0 0.0
    %1092 = vmatpush1.msra.mxu0 0.0
    %1093 = vmatprep.subr.mxu0 0.0
    %1094 = vmatpush1.msra.mxu0 0.0
    %1095 = vmatprep.subr.mxu0 0.0
    %1096 = vmatpush1.msra.mxu0 0.0
    %1097 = vmatprep.subr.mxu0 0.0
    %1098 = vmatpush1.msra.mxu0 0.0
    %1099 = vmatprep.subr.mxu0 0.0
    %1100 = vmatpush1.msra.mxu0 0.0
    %1101 = vmatprep.mubr.f32.mxu0 0.0
    %1102 = vmatmul.mubr.f32.gmra.mrb[0].mxu0 %v1032
    %v1103 = vpop.f32.mrb[0].mxu0
    %v1104 = vadd.f32 %v1029, %v1103
    %v1105 = vpop.f32.mrb[0].mxu0
    %1106 = vmatprep.mubr.f32.mxu0 0.0
    %1107 = vmatmul.mubr.f32.gmra.mrb[0].mxu0 %v1035
    %v1108 = vpop.f32.mrb[0].mxu0
    %v1109 = vadd.f32 %v1029, %v1108
    %v1110 = vpop.f32.mrb[0].mxu0
    %1111 = vdwg.mxu0
    %v1112 = vadd.f32 %v55, %v1104
    %v1113 = vadd.f32 %v56, %v1109
    %v1114 = vsel %vm72, %v1112, 0.0
    %1115 = vadd.xlane.f32.xlu0 %v1114
    %v1116 = vpop.xlane.xlu0 %1115
    %v1117 = vsel %vm72, %v1113, 0.0
    %1118 = vadd.xlane.f32.xlu0 %v1117
    %v1119 = vpop.xlane.xlu0 %1118
    %v1120 = vrcp.pop 32.0
    %v1121 = vmul.f32 %v1116, %v1120
    %v1122 = vmul.f32 %v1119, %v1120
    %v1123 = vsub.f32 %v1112, %v1121
    %v1124 = vsub.f32 %v1113, %v1122
    %v1125 = vmul.f32 %v1123, %v1123
    %v1126 = vmul.f32 %v1124, %v1124
    %v1127 = vsel %vm72, %v1125, 0.0
    %1128 = vadd.xlane.f32.xlu0 %v1127
    %v1129 = vpop.xlane.xlu0 %1128
    %v1130 = vsel %vm72, %v1126, 0.0
    %1131 = vadd.xlane.f32.xlu0 %v1130
    %v1132 = vpop.xlane.xlu0 %1131
    %v1133 = vmul.f32 %v1129, %v1120
    %v1134 = vmul.f32 %v1132, %v1120
    %v1135 = vadd.f32 %v1133, 1e-05
    %v1136 = vadd.f32 %v1134, 1e-05
    %v1137 = vrsqrt.pop %v1135
    %v1138 = vrsqrt.pop %v1136
    %v1139 = vmul.f32 %v1123, %v1137
    %v1140 = vmul.f32 %v1124, %v1138
    %v1142 = vlaneseq
    %v1143 = vshrl.u32 %v1142, 7
    %v1144 = vsub.s32 0, %v1143
    %v1145 = vrot.slane %v60, %v1144
    %v1147 = vmul.f32 %v1139, %v1145
    %v1148 = vmul.f32 %v1140, %v1145
    %1149 = vrot.lane.b32.xlu0 %v1145, 96
    %v1150 = vpop.permute.xlu0 %1149
    %v1152 = vadd.f32 %v1147, %v1150
    %v1153 = vadd.f32 %v1148, %v1150
    %v1154 = vld [vmem:[%s4] sm:$0xff]
    %v1155 = vld [vmem:[%s4 + $0x8] sm:$0xff]
    %v1156 = vld [vmem:[%s4 + $0x10] sm:$0xff]
    %v1157 = vld [vmem:[%s4 + $0x18] sm:$0xff]
    %1158 = vrot.lane.b32.xlu0 %v1145, 64
    %v1159 = vpop.permute.xlu0 %1158
    %v1162 = vsel %vm72, %v1152, 0
    %v1165 = vsel %vm72, %v1153, 0
    %1167 = vmatprep.subr.mxu0 0.0
    %1168 = vmatpush1.msra.mxu0 %v1154
    %1169 = vmatprep.subr.mxu0 0.0
    %1170 = vmatpush1.msra.mxu0 %v1155
    %1171 = vmatprep.subr.mxu0 0.0
    %1172 = vmatpush1.msra.mxu0 %v1156
    %1173 = vmatprep.subr.mxu0 0.0
    %1174 = vmatpush1.msra.mxu0 %v1157
    %1175 = vmatprep.subr.mxu0 0.0
    %1176 = vmatpush1.msra.mxu0 0.0
    %1177 = vmatprep.subr.mxu0 0.0
    %1178 = vmatpush1.msra.mxu0 0.0
    %1179 = vmatprep.subr.mxu0 0.0
    %1180 = vmatpush1.msra.mxu0 0.0
    %1181 = vmatprep.subr.mxu0 0.0
    %1182 = vmatpush1.msra.mxu0 0.0
    %1183 = vmatprep.subr.mxu0 0.0
    %1184 = vmatpush1.msra.mxu0 0.0
    %1185 = vmatprep.subr.mxu0 0.0
    %1186 = vmatpush1.msra.mxu0 0.0
    %1187 = vmatprep.subr.mxu0 0.0
    %1188 = vmatpush1.msra.mxu0 0.0
    %1189 = vmatprep.subr.mxu0 0.0
    %1190 = vmatpush1.msra.mxu0 0.0
    %1191 = vmatprep.subr.mxu0 0.0
    %1192 = vmatpush1.msra.mxu0 0.0
    %1193 = vmatprep.subr.mxu0 0.0
    %1194 = vmatpush1.msra.mxu0 0.0
    %1195 = vmatprep.subr.mxu0 0.0
    %1196 = vmatpush1.msra.mxu0 0.0
    %1197 = vmatprep.subr.mxu0 0.0
    %1198 = vmatpush1.msra.mxu0 0.0
    %1199 = vmatprep.subr.mxu0 0.0
    %1200 = vmatpush1.msra.mxu0 0.0
    %1201 = vmatprep.subr.mxu0 0.0
    %1202 = vmatpush1.msra.mxu0 0.0
    %1203 = vmatprep.subr.mxu0 0.0
    %1204 = vmatpush1.msra.mxu0 0.0
    %1205 = vmatprep.subr.mxu0 0.0
    %1206 = vmatpush1.msra.mxu0 0.0
    %1207 = vmatprep.subr.mxu0 0.0
    %1208 = vmatpush1.msra.mxu0 0.0
    %1209 = vmatprep.subr.mxu0 0.0
    %1210 = vmatpush1.msra.mxu0 0.0
    %1211 = vmatprep.subr.mxu0 0.0
    %1212 = vmatpush1.msra.mxu0 0.0
    %1213 = vmatprep.subr.mxu0 0.0
    %1214 = vmatpush1.msra.mxu0 0.0
    %1215 = vmatprep.subr.mxu0 0.0
    %1216 = vmatpush1.msra.mxu0 0.0
    %1217 = vmatprep.subr.mxu0 0.0
    %1218 = vmatpush1.msra.mxu0 0.0
    %1219 = vmatprep.subr.mxu0 0.0
    %1220 = vmatpush1.msra.mxu0 0.0
    %1221 = vmatprep.subr.mxu0 0.0
    %1222 = vmatpush1.msra.mxu0 0.0
    %1223 = vmatprep.subr.mxu0 0.0
    %1224 = vmatpush1.msra.mxu0 0.0
    %1225 = vmatprep.subr.mxu0 0.0
    %1226 = vmatpush1.msra.mxu0 0.0
    %1227 = vmatprep.subr.mxu0 0.0
    %1228 = vmatpush1.msra.mxu0 0.0
    %1229 = vmatprep.subr.mxu0 0.0
    %1230 = vmatpush1.msra.mxu0 0.0
    %1231 = vmatprep.mubr.f32.mxu0 0.0
    %1232 = vmatmul.mubr.f32.gmra.mrb[0].mxu0 %v1162
    %v1233 = vpop.f32.mrb[0].mxu0
    %v1234 = vadd.f32 %v1159, %v1233
    %v1235 = vpop.f32.mrb[0].mxu0
    %1236 = vmatprep.mubr.f32.mxu0 0.0
    %1237 = vmatmul.mubr.f32.gmra.mrb[0].mxu0 %v1165
    %v1238 = vpop.f32.mrb[0].mxu0
    %v1239 = vadd.f32 %v1159, %v1238
    %v1240 = vpop.f32.mrb[0].mxu0
    %1241 = vdwg.mxu0
    %v1242 = vmax.f32 %v1234, 0.0
    %v1243 = vmax.f32 %v1239, 0.0
    %v1244 = vld [vmem:[%s5] sm:$0xff]
    %v1245 = vld [vmem:[%s5 + $0x8] sm:$0xff]
    %v1246 = vld [vmem:[%s5 + $0x10] sm:$0xff]
    %v1247 = vld [vmem:[%s5 + $0x18] sm:$0xff]
    %v1248 = vld [vmem:[%s5 + $0x20] sm:$0xff]
    %v1249 = vld [vmem:[%s5 + $0x28] sm:$0xff]
    %v1250 = vld [vmem:[%s5 + $0x30] sm:$0xff]
    %v1251 = vld [vmem:[%s5 + $0x38] sm:$0xff]
    %v1253 = vlaneseq
    %v1254 = vshrl.u32 %v1253, 7
    %v1255 = vsub.s32 0, %v1254
    %v1256 = vrot.slane %v61, %v1255
    %vm1258 = vcmask 523264
    %v1260 = vsel %vm1258, %v1242, 0
    %v1263 = vsel %vm1258, %v1243, 0
    %1265 = vmatprep.subr.mxu0 0.0
    %1266 = vmatpush1.msra.mxu0 %v1244
    %1267 = vmatprep.subr.mxu0 0.0
    %1268 = vmatpush1.msra.mxu0 %v1245
    %1269 = vmatprep.subr.mxu0 0.0
    %1270 = vmatpush1.msra.mxu0 %v1246
    %1271 = vmatprep.subr.mxu0 0.0
    %1272 = vmatpush1.msra.mxu0 %v1247
    %1273 = vmatprep.subr.mxu0 0.0
    %1274 = vmatpush1.msra.mxu0 %v1248
    %1275 = vmatprep.subr.mxu0 0.0
    %1276 = vmatpush1.msra.mxu0 %v1249
    %1277 = vmatprep.subr.mxu0 0.0
    %1278 = vmatpush1.msra.mxu0 %v1250
    %1279 = vmatprep.subr.mxu0 0.0
    %1280 = vmatpush1.msra.mxu0 %v1251
    %1281 = vmatprep.subr.mxu0 0.0
    %1282 = vmatpush1.msra.mxu0 0.0
    %1283 = vmatprep.subr.mxu0 0.0
    %1284 = vmatpush1.msra.mxu0 0.0
    %1285 = vmatprep.subr.mxu0 0.0
    %1286 = vmatpush1.msra.mxu0 0.0
    %1287 = vmatprep.subr.mxu0 0.0
    %1288 = vmatpush1.msra.mxu0 0.0
    %1289 = vmatprep.subr.mxu0 0.0
    %1290 = vmatpush1.msra.mxu0 0.0
    %1291 = vmatprep.subr.mxu0 0.0
    %1292 = vmatpush1.msra.mxu0 0.0
    %1293 = vmatprep.subr.mxu0 0.0
    %1294 = vmatpush1.msra.mxu0 0.0
    %1295 = vmatprep.subr.mxu0 0.0
    %1296 = vmatpush1.msra.mxu0 0.0
    %1297 = vmatprep.subr.mxu0 0.0
    %1298 = vmatpush1.msra.mxu0 0.0
    %1299 = vmatprep.subr.mxu0 0.0
    %1300 = vmatpush1.msra.mxu0 0.0
    %1301 = vmatprep.subr.mxu0 0.0
    %1302 = vmatpush1.msra.mxu0 0.0
    %1303 = vmatprep.subr.mxu0 0.0
    %1304 = vmatpush1.msra.mxu0 0.0
    %1305 = vmatprep.subr.mxu0 0.0
    %1306 = vmatpush1.msra.mxu0 0.0
    %1307 = vmatprep.subr.mxu0 0.0
    %1308 = vmatpush1.msra.mxu0 0.0
    %1309 = vmatprep.subr.mxu0 0.0
    %1310 = vmatpush1.msra.mxu0 0.0
    %1311 = vmatprep.subr.mxu0 0.0
    %1312 = vmatpush1.msra.mxu0 0.0
    %1313 = vmatprep.subr.mxu0 0.0
    %1314 = vmatpush1.msra.mxu0 0.0
    %1315 = vmatprep.subr.mxu0 0.0
    %1316 = vmatpush1.msra.mxu0 0.0
    %1317 = vmatprep.subr.mxu0 0.0
    %1318 = vmatpush1.msra.mxu0 0.0
    %1319 = vmatprep.subr.mxu0 0.0
    %1320 = vmatpush1.msra.mxu0 0.0
    %1321 = vmatprep.subr.mxu0 0.0
    %1322 = vmatpush1.msra.mxu0 0.0
    %1323 = vmatprep.subr.mxu0 0.0
    %1324 = vmatpush1.msra.mxu0 0.0
    %1325 = vmatprep.subr.mxu0 0.0
    %1326 = vmatpush1.msra.mxu0 0.0
    %1327 = vmatprep.subr.mxu0 0.0
    %1328 = vmatpush1.msra.mxu0 0.0
    %1329 = vmatprep.mubr.f32.mxu0 0.0
    %1330 = vmatmul.mubr.f32.gmra.mrb[0].mxu0 %v1260
    %v1331 = vpop.f32.mrb[0].mxu0
    %v1332 = vadd.f32 %v1256, %v1331
    %v1333 = vpop.f32.mrb[0].mxu0
    %1334 = vmatprep.mubr.f32.mxu0 0.0
    %1335 = vmatmul.mubr.f32.gmra.mrb[0].mxu0 %v1263
    %v1336 = vpop.f32.mrb[0].mxu0
    %v1337 = vadd.f32 %v1256, %v1336
    %v1338 = vpop.f32.mrb[0].mxu0
    %1339 = vdwg.mxu0
    %v1340 = vadd.f32 %v1152, %v1332
    %v1341 = vadd.f32 %v1153, %v1337
    %v1342 = vsel %vm72, %v1340, 0.0
    %1343 = vadd.xlane.f32.xlu0 %v1342
    %v1344 = vpop.xlane.xlu0 %1343
    %v1345 = vsel %vm72, %v1341, 0.0
    %1346 = vadd.xlane.f32.xlu0 %v1345
    %v1347 = vpop.xlane.xlu0 %1346
    %v1348 = vmul.f32 %v1344, %v1120
    %v1349 = vmul.f32 %v1347, %v1120
    %v1350 = vsub.f32 %v1340, %v1348
    %v1351 = vsub.f32 %v1341, %v1349
    %v1352 = vmul.f32 %v1350, %v1350
    %v1353 = vmul.f32 %v1351, %v1351
    %v1354 = vsel %vm72, %v1352, 0.0
    %1355 = vadd.xlane.f32.xlu0 %v1354
    %v1356 = vpop.xlane.xlu0 %1355
    %v1357 = vsel %vm72, %v1353, 0.0
    %1358 = vadd.xlane.f32.xlu0 %v1357
    %v1359 = vpop.xlane.xlu0 %1358
    %v1360 = vmul.f32 %v1356, %v1120
    %v1361 = vmul.f32 %v1359, %v1120
    %v1362 = vadd.f32 %v1360, 1e-05
    %v1363 = vadd.f32 %v1361, 1e-05
    %v1364 = vrsqrt.pop %v1362
    %v1365 = vrsqrt.pop %v1363
    %v1366 = vmul.f32 %v1350, %v1364
    %v1367 = vmul.f32 %v1351, %v1365
    %1368 = vrot.lane.b32.xlu0 %v1256, 96
    %v1369 = vpop.permute.xlu0 %1368
    %v1371 = vmul.f32 %v1366, %v1369
    %v1372 = vmul.f32 %v1367, %v1369
    %1373 = vrot.lane.b32.xlu0 %v1256, 64
    %v1374 = vpop.permute.xlu0 %1373
    %v1376 = vadd.f32 %v1371, %v1374
    %v1377 = vadd.f32 %v1372, %v1374
    %s1378 = scalar_lea.vmem %s6, 3
    %v1379 = vld [vmem:[%s1378] sm:$0x1]
    %v1380 = vld [vmem:[%s1378 + $0x1] sm:$0x1]
    %v1381 = vld [vmem:[%s1378 + $0x2] sm:$0x1]
    %s1382 = scalar_lea.vmem %s2, 32
    %v1383 = vld [vmem:[%s1382] sm:$0xff]
    %v1384 = vld [vmem:[%s1382 + $0x8] sm:$0xff]
    %v1385 = vld [vmem:[%s1382 + $0x10] sm:$0xff]
    %v1386 = vld [vmem:[%s1382 + $0x18] sm:$0xff]
    %v1388 = vlaneseq
    %v1389 = vshrl.u32 %v1388, 7
    %v1390 = vsub.s32 0, %v1389
    %v1391 = vrot.slane %v1379, %v1390
    %v1394 = vsel %vm72, %v1376, 0
    %v1397 = vsel %vm72, %v1377, 0
    %1399 = vmatprep.subr.mxu0 0.0
    %1400 = vmatpush1.msra.mxu0 %v1383
    %1401 = vmatprep.subr.mxu0 0.0
    %1402 = vmatpush1.msra.mxu0 %v1384
    %1403 = vmatprep.subr.mxu0 0.0
    %1404 = vmatpush1.msra.mxu0 %v1385
    %1405 = vmatprep.subr.mxu0 0.0
    %1406 = vmatpush1.msra.mxu0 %v1386
    %1407 = vmatprep.subr.mxu0 0.0
    %1408 = vmatpush1.msra.mxu0 0.0
    %1409 = vmatprep.subr.mxu0 0.0
    %1410 = vmatpush1.msra.mxu0 0.0
    %1411 = vmatprep.subr.mxu0 0.0
    %1412 = vmatpush1.msra.mxu0 0.0
    %1413 = vmatprep.subr.mxu0 0.0
    %1414 = vmatpush1.msra.mxu0 0.0
    %1415 = vmatprep.subr.mxu0 0.0
    %1416 = vmatpush1.msra.mxu0 0.0
    %1417 = vmatprep.subr.mxu0 0.0
    %1418 = vmatpush1.msra.mxu0 0.0
    %1419 = vmatprep.subr.mxu0 0.0
    %1420 = vmatpush1.msra.mxu0 0.0
    %1421 = vmatprep.subr.mxu0 0.0
    %1422 = vmatpush1.msra.mxu0 0.0
    %1423 = vmatprep.subr.mxu0 0.0
    %1424 = vmatpush1.msra.mxu0 0.0
    %1425 = vmatprep.subr.mxu0 0.0
    %1426 = vmatpush1.msra.mxu0 0.0
    %1427 = vmatprep.subr.mxu0 0.0
    %1428 = vmatpush1.msra.mxu0 0.0
    %1429 = vmatprep.subr.mxu0 0.0
    %1430 = vmatpush1.msra.mxu0 0.0
    %1431 = vmatprep.subr.mxu0 0.0
    %1432 = vmatpush1.msra.mxu0 0.0
    %1433 = vmatprep.subr.mxu0 0.0
    %1434 = vmatpush1.msra.mxu0 0.0
    %1435 = vmatprep.subr.mxu0 0.0
    %1436 = vmatpush1.msra.mxu0 0.0
    %1437 = vmatprep.subr.mxu0 0.0
    %1438 = vmatpush1.msra.mxu0 0.0
    %1439 = vmatprep.subr.mxu0 0.0
    %1440 = vmatpush1.msra.mxu0 0.0
    %1441 = vmatprep.subr.mxu0 0.0
    %1442 = vmatpush1.msra.mxu0 0.0
    %1443 = vmatprep.subr.mxu0 0.0
    %1444 = vmatpush1.msra.mxu0 0.0
    %1445 = vmatprep.subr.mxu0 0.0
    %1446 = vmatpush1.msra.mxu0 0.0
    %1447 = vmatprep.subr.mxu0 0.0
    %1448 = vmatpush1.msra.mxu0 0.0
    %1449 = vmatprep.subr.mxu0 0.0
    %1450 = vmatpush1.msra.mxu0 0.0
    %1451 = vmatprep.subr.mxu0 0.0
    %1452 = vmatpush1.msra.mxu0 0.0
    %1453 = vmatprep.subr.mxu0 0.0
    %1454 = vmatpush1.msra.mxu0 0.0
    %1455 = vmatprep.subr.mxu0 0.0
    %1456 = vmatpush1.msra.mxu0 0.0
    %1457 = vmatprep.subr.mxu0 0.0
    %1458 = vmatpush1.msra.mxu0 0.0
    %1459 = vmatprep.subr.mxu0 0.0
    %1460 = vmatpush1.msra.mxu0 0.0
    %1461 = vmatprep.subr.mxu0 0.0
    %1462 = vmatpush1.msra.mxu0 0.0
    %1463 = vmatprep.mubr.f32.mxu0 0.0
    %1464 = vmatmul.mubr.f32.gmra.mrb[0].mxu0 %v1394
    %v1465 = vpop.f32.mrb[0].mxu0
    %v1466 = vadd.f32 %v1391, %v1465
    %v1467 = vpop.f32.mrb[0].mxu0
    %1468 = vmatprep.mubr.f32.mxu0 0.0
    %1469 = vmatmul.mubr.f32.gmra.mrb[0].mxu0 %v1397
    %v1470 = vpop.f32.mrb[0].mxu0
    %v1471 = vadd.f32 %v1391, %v1470
    %v1472 = vpop.f32.mrb[0].mxu0
    %1473 = vdwg.mxu0
    %1474 = vst.msk [vmem:[#allocation2] sm:$0xff] %vm154, %v1466
    %1475 = vst.msk [vmem:[#allocation2 + $0x8] sm:$0xff] %vm154, %v1471
    %v1476 = vld [vmem:[#allocation2] sm:$0xff]
    %v1477 = vld [vmem:[#allocation2 + $0x8] sm:$0xff]
    %1480 = vrot.lane.b32.xlu0 %v1476, 96
    %v1481 = vpop.permute.xlu0 %1480
    %1482 = vrot.lane.b32.xlu0 %v1477, 96
    %v1483 = vpop.permute.xlu0 %1482
    %v1484 = vsel %vm165, %v1476, 0
    %v1486 = vsel %vm165, %v1477, 0
    %v1488 = vsel %vm165, %v1481, 0
    %v1490 = vsel %vm165, %v1483, 0
    %1492 = vmatprep.subr.mxu0 0.0
    %1493 = vmatpush1.xpose.msra.mxu0 %v1488
    %1494 = vmatprep.subr.mxu0 0.0
    %1495 = vmatpush1.xpose.msra.mxu0 %v1490
    %1496 = vmatprep.subr.mxu0 0.0
    %1497 = vmatpush1.xpose.msra.mxu0 0.0
    %1498 = vmatprep.subr.mxu0 0.0
    %1499 = vmatpush1.xpose.msra.mxu0 0.0
    %1500 = vmatprep.subr.mxu0 0.0
    %1501 = vmatpush1.xpose.msra.mxu0 0.0
    %1502 = vmatprep.subr.mxu0 0.0
    %1503 = vmatpush1.xpose.msra.mxu0 0.0
    %1504 = vmatprep.subr.mxu0 0.0
    %1505 = vmatpush1.xpose.msra.mxu0 0.0
    %1506 = vmatprep.subr.mxu0 0.0
    %1507 = vmatpush1.xpose.msra.mxu0 0.0
    %1508 = vmatprep.subr.mxu0 0.0
    %1509 = vmatpush1.xpose.msra.mxu0 0.0
    %1510 = vmatprep.subr.mxu0 0.0
    %1511 = vmatpush1.xpose.msra.mxu0 0.0
    %1512 = vmatprep.subr.mxu0 0.0
    %1513 = vmatpush1.xpose.msra.mxu0 0.0
    %1514 = vmatprep.subr.mxu0 0.0
    %1515 = vmatpush1.xpose.msra.mxu0 0.0
    %1516 = vmatprep.subr.mxu0 0.0
    %1517 = vmatpush1.xpose.msra.mxu0 0.0
    %1518 = vmatprep.subr.mxu0 0.0
    %1519 = vmatpush1.xpose.msra.mxu0 0.0
    %1520 = vmatprep.subr.mxu0 0.0
    %1521 = vmatpush1.xpose.msra.mxu0 0.0
    %1522 = vmatprep.subr.mxu0 0.0
    %1523 = vmatpush1.xpose.msra.mxu0 0.0
    %1524 = vmatprep.subr.mxu0 0.0
    %1525 = vmatpush1.xpose.msra.mxu0 0.0
    %1526 = vmatprep.subr.mxu0 0.0
    %1527 = vmatpush1.xpose.msra.mxu0 0.0
    %1528 = vmatprep.subr.mxu0 0.0
    %1529 = vmatpush1.xpose.msra.mxu0 0.0
    %1530 = vmatprep.subr.mxu0 0.0
    %1531 = vmatpush1.xpose.msra.mxu0 0.0
    %1532 = vmatprep.subr.mxu0 0.0
    %1533 = vmatpush1.xpose.msra.mxu0 0.0
    %1534 = vmatprep.subr.mxu0 0.0
    %1535 = vmatpush1.xpose.msra.mxu0 0.0
    %1536 = vmatprep.subr.mxu0 0.0
    %1537 = vmatpush1.xpose.msra.mxu0 0.0
    %1538 = vmatprep.subr.mxu0 0.0
    %1539 = vmatpush1.xpose.msra.mxu0 0.0
    %1540 = vmatprep.subr.mxu0 0.0
    %1541 = vmatpush1.xpose.msra.mxu0 0.0
    %1542 = vmatprep.subr.mxu0 0.0
    %1543 = vmatpush1.xpose.msra.mxu0 0.0
    %1544 = vmatprep.subr.mxu0 0.0
    %1545 = vmatpush1.xpose.msra.mxu0 0.0
    %1546 = vmatprep.subr.mxu0 0.0
    %1547 = vmatpush1.xpose.msra.mxu0 0.0
    %1548 = vmatprep.subr.mxu0 0.0
    %1549 = vmatpush1.xpose.msra.mxu0 0.0
    %1550 = vmatprep.subr.mxu0 0.0
    %1551 = vmatpush1.xpose.msra.mxu0 0.0
    %1552 = vmatprep.subr.mxu0 0.0
    %1553 = vmatpush1.xpose.msra.mxu0 0.0
    %1554 = vmatprep.subr.mxu0 0.0
    %1555 = vmatpush1.xpose.msra.mxu0 0.0
    %1556 = vmatprep.mubr.f32.mxu0 0.0
    %1557 = vmatmul.mubr.f32.gmra.mrb[0].mxu0 %v1484
    %v1558 = vpop.f32.mrb[0].mxu0
    %v1559 = vadd.f32 0.0, %v1558
    %v1560 = vpop.f32.mrb[0].mxu0
    %1561 = vmatprep.mubr.f32.mxu0 0.0
    %1562 = vmatmul.mubr.f32.gmra.mrb[0].mxu0 %v1486
    %v1563 = vpop.f32.mrb[0].mxu0
    %v1564 = vadd.f32 0.0, %v1563
    %v1565 = vpop.f32.mrb[0].mxu0
    %1566 = vdwg.mxu0
    %v1567 = vmul.f32 %v1559, 0.35355338
    %v1568 = vmul.f32 %v1564, 0.35355338
    %v1569 = vadd.f32 %v1567, %v57
    %v1570 = vadd.f32 %v1568, %v58
    %v1571 = vsel %vm253, %v1569, -inf
    %1572 = vmax.xlane.f32.xlu0 %v1571
    %v1573 = vpop.xlane.xlu0 %1572
    %v1574 = vsel %vm253, %v1570, -inf
    %1575 = vmax.xlane.f32.xlu0 %v1574
    %v1576 = vpop.xlane.xlu0 %1575
    %v1577 = vsub.f32 %v1569, %v1573
    %v1578 = vsub.f32 %v1570, %v1576
    %v1579 = vmul.f32 %v1577, 1.442695
    %v1580 = vpow.pop %v1579
    %v1581 = vmul.f32 %v1578, 1.442695
    %v1582 = vpow.pop %v1581
    %v1583 = vsel %vm253, %v1580, 0.0
    %1584 = vadd.xlane.f32.xlu0 %v1583
    %v1585 = vpop.xlane.xlu0 %1584
    %v1586 = vsel %vm253, %v1582, 0.0
    %1587 = vadd.xlane.f32.xlu0 %v1586
    %v1588 = vpop.xlane.xlu0 %1587
    %v1589 = vrcp.pop %v1585
    %v1590 = vrcp.pop %v1588
    %v1591 = vmul.f32 %v1580, %v1589
    %v1592 = vmul.f32 %v1582, %v1590
    %1593 = vrot.lane.b32.xlu0 %v1476, 64
    %v1594 = vpop.permute.xlu0 %1593
    %1595 = vrot.lane.b32.xlu0 %v1477, 64
    %v1596 = vpop.permute.xlu0 %1595
    %v1600 = vsel %vm253, %v1591, 0
    %v1603 = vsel %vm253, %v1592, 0
    %1605 = vmatprep.subr.mxu0 0.0
    %1606 = vmatpush1.msra.mxu0 %v1594
    %1607 = vmatprep.subr.mxu0 0.0
    %1608 = vmatpush1.msra.mxu0 %v1596
    %1609 = vmatprep.subr.mxu0 0.0
    %1610 = vmatpush1.msra.mxu0 0.0
    %1611 = vmatprep.subr.mxu0 0.0
    %1612 = vmatpush1.msra.mxu0 0.0
    %1613 = vmatprep.subr.mxu0 0.0
    %1614 = vmatpush1.msra.mxu0 0.0
    %1615 = vmatprep.subr.mxu0 0.0
    %1616 = vmatpush1.msra.mxu0 0.0
    %1617 = vmatprep.subr.mxu0 0.0
    %1618 = vmatpush1.msra.mxu0 0.0
    %1619 = vmatprep.subr.mxu0 0.0
    %1620 = vmatpush1.msra.mxu0 0.0
    %1621 = vmatprep.subr.mxu0 0.0
    %1622 = vmatpush1.msra.mxu0 0.0
    %1623 = vmatprep.subr.mxu0 0.0
    %1624 = vmatpush1.msra.mxu0 0.0
    %1625 = vmatprep.subr.mxu0 0.0
    %1626 = vmatpush1.msra.mxu0 0.0
    %1627 = vmatprep.subr.mxu0 0.0
    %1628 = vmatpush1.msra.mxu0 0.0
    %1629 = vmatprep.subr.mxu0 0.0
    %1630 = vmatpush1.msra.mxu0 0.0
    %1631 = vmatprep.subr.mxu0 0.0
    %1632 = vmatpush1.msra.mxu0 0.0
    %1633 = vmatprep.subr.mxu0 0.0
    %1634 = vmatpush1.msra.mxu0 0.0
    %1635 = vmatprep.subr.mxu0 0.0
    %1636 = vmatpush1.msra.mxu0 0.0
    %1637 = vmatprep.subr.mxu0 0.0
    %1638 = vmatpush1.msra.mxu0 0.0
    %1639 = vmatprep.subr.mxu0 0.0
    %1640 = vmatpush1.msra.mxu0 0.0
    %1641 = vmatprep.subr.mxu0 0.0
    %1642 = vmatpush1.msra.mxu0 0.0
    %1643 = vmatprep.subr.mxu0 0.0
    %1644 = vmatpush1.msra.mxu0 0.0
    %1645 = vmatprep.subr.mxu0 0.0
    %1646 = vmatpush1.msra.mxu0 0.0
    %1647 = vmatprep.subr.mxu0 0.0
    %1648 = vmatpush1.msra.mxu0 0.0
    %1649 = vmatprep.subr.mxu0 0.0
    %1650 = vmatpush1.msra.mxu0 0.0
    %1651 = vmatprep.subr.mxu0 0.0
    %1652 = vmatpush1.msra.mxu0 0.0
    %1653 = vmatprep.subr.mxu0 0.0
    %1654 = vmatpush1.msra.mxu0 0.0
    %1655 = vmatprep.subr.mxu0 0.0
    %1656 = vmatpush1.msra.mxu0 0.0
    %1657 = vmatprep.subr.mxu0 0.0
    %1658 = vmatpush1.msra.mxu0 0.0
    %1659 = vmatprep.subr.mxu0 0.0
    %1660 = vmatpush1.msra.mxu0 0.0
    %1661 = vmatprep.subr.mxu0 0.0
    %1662 = vmatpush1.msra.mxu0 0.0
    %1663 = vmatprep.subr.mxu0 0.0
    %1664 = vmatpush1.msra.mxu0 0.0
    %1665 = vmatprep.subr.mxu0 0.0
    %1666 = vmatpush1.msra.mxu0 0.0
    %1667 = vmatprep.subr.mxu0 0.0
    %1668 = vmatpush1.msra.mxu0 0.0
    %1669 = vmatprep.mubr.f32.mxu0 0.0
    %1670 = vmatmul.mubr.f32.gmra.mrb[0].mxu0 %v1600
    %v1671 = vpop.f32.mrb[0].mxu0
    %v1672 = vadd.f32 0.0, %v1671
    %v1673 = vpop.f32.mrb[0].mxu0
    %1674 = vmatprep.mubr.f32.mxu0 0.0
    %1675 = vmatmul.mubr.f32.gmra.mrb[0].mxu0 %v1603
    %v1676 = vpop.f32.mrb[0].mxu0
    %v1677 = vadd.f32 0.0, %v1676
    %v1678 = vpop.f32.mrb[0].mxu0
    %1679 = vdwg.mxu0
    %1680 = vst.msk [vmem:[#allocation3] sm:$0xff] %vm165, %v1672
    %1681 = vst.msk [vmem:[#allocation3 + $0x8] sm:$0xff] %vm165, %v1677
    %v1682 = vld [vmem:[#allocation2] sm:$0xff]
    %v1683 = vld [vmem:[#allocation2 + $0x8] sm:$0xff]
    %1686 = vrot.lane.b32.xlu0 %v1682, 120
    %v1687 = vpop.permute.xlu0 %1686
    %1688 = vrot.lane.b32.xlu0 %v1683, 120
    %v1689 = vpop.permute.xlu0 %1688
    %1690 = vrot.lane.b32.xlu0 %v1682, 88
    %v1691 = vpop.permute.xlu0 %1690
    %1692 = vrot.lane.b32.xlu0 %v1683, 88
    %v1693 = vpop.permute.xlu0 %1692
    %v1694 = vsel %vm165, %v1687, 0
    %v1696 = vsel %vm165, %v1689, 0
    %v1698 = vsel %vm165, %v1691, 0
    %v1700 = vsel %vm165, %v1693, 0
    %1702 = vmatprep.subr.mxu0 0.0
    %1703 = vmatpush1.xpose.msra.mxu0 %v1698
    %1704 = vmatprep.subr.mxu0 0.0
    %1705 = vmatpush1.xpose.msra.mxu0 %v1700
    %1706 = vmatprep.subr.mxu0 0.0
    %1707 = vmatpush1.xpose.msra.mxu0 0.0
    %1708 = vmatprep.subr.mxu0 0.0
    %1709 = vmatpush1.xpose.msra.mxu0 0.0
    %1710 = vmatprep.subr.mxu0 0.0
    %1711 = vmatpush1.xpose.msra.mxu0 0.0
    %1712 = vmatprep.subr.mxu0 0.0
    %1713 = vmatpush1.xpose.msra.mxu0 0.0
    %1714 = vmatprep.subr.mxu0 0.0
    %1715 = vmatpush1.xpose.msra.mxu0 0.0
    %1716 = vmatprep.subr.mxu0 0.0
    %1717 = vmatpush1.xpose.msra.mxu0 0.0
    %1718 = vmatprep.subr.mxu0 0.0
    %1719 = vmatpush1.xpose.msra.mxu0 0.0
    %1720 = vmatprep.subr.mxu0 0.0
    %1721 = vmatpush1.xpose.msra.mxu0 0.0
    %1722 = vmatprep.subr.mxu0 0.0
    %1723 = vmatpush1.xpose.msra.mxu0 0.0
    %1724 = vmatprep.subr.mxu0 0.0
    %1725 = vmatpush1.xpose.msra.mxu0 0.0
    %1726 = vmatprep.subr.mxu0 0.0
    %1727 = vmatpush1.xpose.msra.mxu0 0.0
    %1728 = vmatprep.subr.mxu0 0.0
    %1729 = vmatpush1.xpose.msra.mxu0 0.0
    %1730 = vmatprep.subr.mxu0 0.0
    %1731 = vmatpush1.xpose.msra.mxu0 0.0
    %1732 = vmatprep.subr.mxu0 0.0
    %1733 = vmatpush1.xpose.msra.mxu0 0.0
    %1734 = vmatprep.subr.mxu0 0.0
    %1735 = vmatpush1.xpose.msra.mxu0 0.0
    %1736 = vmatprep.subr.mxu0 0.0
    %1737 = vmatpush1.xpose.msra.mxu0 0.0
    %1738 = vmatprep.subr.mxu0 0.0
    %1739 = vmatpush1.xpose.msra.mxu0 0.0
    %1740 = vmatprep.subr.mxu0 0.0
    %1741 = vmatpush1.xpose.msra.mxu0 0.0
    %1742 = vmatprep.subr.mxu0 0.0
    %1743 = vmatpush1.xpose.msra.mxu0 0.0
    %1744 = vmatprep.subr.mxu0 0.0
    %1745 = vmatpush1.xpose.msra.mxu0 0.0
    %1746 = vmatprep.subr.mxu0 0.0
    %1747 = vmatpush1.xpose.msra.mxu0 0.0
    %1748 = vmatprep.subr.mxu0 0.0
    %1749 = vmatpush1.xpose.msra.mxu0 0.0
    %1750 = vmatprep.subr.mxu0 0.0
    %1751 = vmatpush1.xpose.msra.mxu0 0.0
    %1752 = vmatprep.subr.mxu0 0.0
    %1753 = vmatpush1.xpose.msra.mxu0 0.0
    %1754 = vmatprep.subr.mxu0 0.0
    %1755 = vmatpush1.xpose.msra.mxu0 0.0
    %1756 = vmatprep.subr.mxu0 0.0
    %1757 = vmatpush1.xpose.msra.mxu0 0.0
    %1758 = vmatprep.subr.mxu0 0.0
    %1759 = vmatpush1.xpose.msra.mxu0 0.0
    %1760 = vmatprep.subr.mxu0 0.0
    %1761 = vmatpush1.xpose.msra.mxu0 0.0
    %1762 = vmatprep.subr.mxu0 0.0
    %1763 = vmatpush1.xpose.msra.mxu0 0.0
    %1764 = vmatprep.subr.mxu0 0.0
    %1765 = vmatpush1.xpose.msra.mxu0 0.0
    %1766 = vmatprep.mubr.f32.mxu0 0.0
    %1767 = vmatmul.mubr.f32.gmra.mrb[0].mxu0 %v1694
    %v1768 = vpop.f32.mrb[0].mxu0
    %v1769 = vadd.f32 0.0, %v1768
    %v1770 = vpop.f32.mrb[0].mxu0
    %1771 = vmatprep.mubr.f32.mxu0 0.0
    %1772 = vmatmul.mubr.f32.gmra.mrb[0].mxu0 %v1696
    %v1773 = vpop.f32.mrb[0].mxu0
    %v1774 = vadd.f32 0.0, %v1773
    %v1775 = vpop.f32.mrb[0].mxu0
    %1776 = vdwg.mxu0
    %v1777 = vmul.f32 %v1769, 0.35355338
    %v1778 = vmul.f32 %v1774, 0.35355338
    %v1779 = vadd.f32 %v1777, %v57
    %v1780 = vadd.f32 %v1778, %v58
    %v1781 = vsel %vm253, %v1779, -inf
    %1782 = vmax.xlane.f32.xlu0 %v1781
    %v1783 = vpop.xlane.xlu0 %1782
    %v1784 = vsel %vm253, %v1780, -inf
    %1785 = vmax.xlane.f32.xlu0 %v1784
    %v1786 = vpop.xlane.xlu0 %1785
    %v1787 = vsub.f32 %v1779, %v1783
    %v1788 = vsub.f32 %v1780, %v1786
    %v1789 = vmul.f32 %v1787, 1.442695
    %v1790 = vpow.pop %v1789
    %v1791 = vmul.f32 %v1788, 1.442695
    %v1792 = vpow.pop %v1791
    %v1793 = vsel %vm253, %v1790, 0.0
    %1794 = vadd.xlane.f32.xlu0 %v1793
    %v1795 = vpop.xlane.xlu0 %1794
    %v1796 = vsel %vm253, %v1792, 0.0
    %1797 = vadd.xlane.f32.xlu0 %v1796
    %v1798 = vpop.xlane.xlu0 %1797
    %v1799 = vrcp.pop %v1795
    %v1800 = vrcp.pop %v1798
    %v1801 = vmul.f32 %v1790, %v1799
    %v1802 = vmul.f32 %v1792, %v1800
    %1803 = vrot.lane.b32.xlu0 %v1682, 56
    %v1804 = vpop.permute.xlu0 %1803
    %1805 = vrot.lane.b32.xlu0 %v1683, 56
    %v1806 = vpop.permute.xlu0 %1805
    %v1810 = vsel %vm253, %v1801, 0
    %v1813 = vsel %vm253, %v1802, 0
    %1815 = vmatprep.subr.mxu0 0.0
    %1816 = vmatpush1.msra.mxu0 %v1804
    %1817 = vmatprep.subr.mxu0 0.0
    %1818 = vmatpush1.msra.mxu0 %v1806
    %1819 = vmatprep.subr.mxu0 0.0
    %1820 = vmatpush1.msra.mxu0 0.0
    %1821 = vmatprep.subr.mxu0 0.0
    %1822 = vmatpush1.msra.mxu0 0.0
    %1823 = vmatprep.subr.mxu0 0.0
    %1824 = vmatpush1.msra.mxu0 0.0
    %1825 = vmatprep.subr.mxu0 0.0
    %1826 = vmatpush1.msra.mxu0 0.0
    %1827 = vmatprep.subr.mxu0 0.0
    %1828 = vmatpush1.msra.mxu0 0.0
    %1829 = vmatprep.subr.mxu0 0.0
    %1830 = vmatpush1.msra.mxu0 0.0
    %1831 = vmatprep.subr.mxu0 0.0
    %1832 = vmatpush1.msra.mxu0 0.0
    %1833 = vmatprep.subr.mxu0 0.0
    %1834 = vmatpush1.msra.mxu0 0.0
    %1835 = vmatprep.subr.mxu0 0.0
    %1836 = vmatpush1.msra.mxu0 0.0
    %1837 = vmatprep.subr.mxu0 0.0
    %1838 = vmatpush1.msra.mxu0 0.0
    %1839 = vmatprep.subr.mxu0 0.0
    %1840 = vmatpush1.msra.mxu0 0.0
    %1841 = vmatprep.subr.mxu0 0.0
    %1842 = vmatpush1.msra.mxu0 0.0
    %1843 = vmatprep.subr.mxu0 0.0
    %1844 = vmatpush1.msra.mxu0 0.0
    %1845 = vmatprep.subr.mxu0 0.0
    %1846 = vmatpush1.msra.mxu0 0.0
    %1847 = vmatprep.subr.mxu0 0.0
    %1848 = vmatpush1.msra.mxu0 0.0
    %1849 = vmatprep.subr.mxu0 0.0
    %1850 = vmatpush1.msra.mxu0 0.0
    %1851 = vmatprep.subr.mxu0 0.0
    %1852 = vmatpush1.msra.mxu0 0.0
    %1853 = vmatprep.subr.mxu0 0.0
    %1854 = vmatpush1.msra.mxu0 0.0
    %1855 = vmatprep.subr.mxu0 0.0
    %1856 = vmatpush1.msra.mxu0 0.0
    %1857 = vmatprep.subr.mxu0 0.0
    %1858 = vmatpush1.msra.mxu0 0.0
    %1859 = vmatprep.subr.mxu0 0.0
    %1860 = vmatpush1.msra.mxu0 0.0
    %1861 = vmatprep.subr.mxu0 0.0
    %1862 = vmatpush1.msra.mxu0 0.0
    %1863 = vmatprep.subr.mxu0 0.0
    %1864 = vmatpush1.msra.mxu0 0.0
    %1865 = vmatprep.subr.mxu0 0.0
    %1866 = vmatpush1.msra.mxu0 0.0
    %1867 = vmatprep.subr.mxu0 0.0
    %1868 = vmatpush1.msra.mxu0 0.0
    %1869 = vmatprep.subr.mxu0 0.0
    %1870 = vmatpush1.msra.mxu0 0.0
    %1871 = vmatprep.subr.mxu0 0.0
    %1872 = vmatpush1.msra.mxu0 0.0
    %1873 = vmatprep.subr.mxu0 0.0
    %1874 = vmatpush1.msra.mxu0 0.0
    %1875 = vmatprep.subr.mxu0 0.0
    %1876 = vmatpush1.msra.mxu0 0.0
    %1877 = vmatprep.subr.mxu0 0.0
    %1878 = vmatpush1.msra.mxu0 0.0
    %1879 = vmatprep.mubr.f32.mxu0 0.0
    %1880 = vmatmul.mubr.f32.gmra.mrb[0].mxu0 %v1810
    %v1881 = vpop.f32.mrb[0].mxu0
    %v1882 = vadd.f32 0.0, %v1881
    %v1883 = vpop.f32.mrb[0].mxu0
    %1884 = vmatprep.mubr.f32.mxu0 0.0
    %1885 = vmatmul.mubr.f32.gmra.mrb[0].mxu0 %v1813
    %v1886 = vpop.f32.mrb[0].mxu0
    %v1887 = vadd.f32 0.0, %v1886
    %v1888 = vpop.f32.mrb[0].mxu0
    %1889 = vdwg.mxu0
    %1892 = vrot.lane.b32.xlu0 %v1882, 8
    %v1893 = vpop.permute.xlu0 %1892
    %1894 = vrot.lane.b32.xlu0 %v1887, 8
    %v1895 = vpop.permute.xlu0 %1894
    %1898 = vst.msk [vmem:[#allocation3] sm:$0xff] %vm581, %v1893
    %1899 = vst.msk [vmem:[#allocation3 + $0x8] sm:$0xff] %vm581, %v1895
    %v1900 = vld [vmem:[#allocation2] sm:$0xff]
    %v1901 = vld [vmem:[#allocation2 + $0x8] sm:$0xff]
    %1904 = vrot.lane.b32.xlu0 %v1900, 112
    %v1905 = vpop.permute.xlu0 %1904
    %1906 = vrot.lane.b32.xlu0 %v1901, 112
    %v1907 = vpop.permute.xlu0 %1906
    %1908 = vrot.lane.b32.xlu0 %v1900, 80
    %v1909 = vpop.permute.xlu0 %1908
    %1910 = vrot.lane.b32.xlu0 %v1901, 80
    %v1911 = vpop.permute.xlu0 %1910
    %v1912 = vsel %vm165, %v1905, 0
    %v1914 = vsel %vm165, %v1907, 0
    %v1916 = vsel %vm165, %v1909, 0
    %v1918 = vsel %vm165, %v1911, 0
    %1920 = vmatprep.subr.mxu0 0.0
    %1921 = vmatpush1.xpose.msra.mxu0 %v1916
    %1922 = vmatprep.subr.mxu0 0.0
    %1923 = vmatpush1.xpose.msra.mxu0 %v1918
    %1924 = vmatprep.subr.mxu0 0.0
    %1925 = vmatpush1.xpose.msra.mxu0 0.0
    %1926 = vmatprep.subr.mxu0 0.0
    %1927 = vmatpush1.xpose.msra.mxu0 0.0
    %1928 = vmatprep.subr.mxu0 0.0
    %1929 = vmatpush1.xpose.msra.mxu0 0.0
    %1930 = vmatprep.subr.mxu0 0.0
    %1931 = vmatpush1.xpose.msra.mxu0 0.0
    %1932 = vmatprep.subr.mxu0 0.0
    %1933 = vmatpush1.xpose.msra.mxu0 0.0
    %1934 = vmatprep.subr.mxu0 0.0
    %1935 = vmatpush1.xpose.msra.mxu0 0.0
    %1936 = vmatprep.subr.mxu0 0.0
    %1937 = vmatpush1.xpose.msra.mxu0 0.0
    %1938 = vmatprep.subr.mxu0 0.0
    %1939 = vmatpush1.xpose.msra.mxu0 0.0
    %1940 = vmatprep.subr.mxu0 0.0
    %1941 = vmatpush1.xpose.msra.mxu0 0.0
    %1942 = vmatprep.subr.mxu0 0.0
    %1943 = vmatpush1.xpose.msra.mxu0 0.0
    %1944 = vmatprep.subr.mxu0 0.0
    %1945 = vmatpush1.xpose.msra.mxu0 0.0
    %1946 = vmatprep.subr.mxu0 0.0
    %1947 = vmatpush1.xpose.msra.mxu0 0.0
    %1948 = vmatprep.subr.mxu0 0.0
    %1949 = vmatpush1.xpose.msra.mxu0 0.0
    %1950 = vmatprep.subr.mxu0 0.0
    %1951 = vmatpush1.xpose.msra.mxu0 0.0
    %1952 = vmatprep.subr.mxu0 0.0
    %1953 = vmatpush1.xpose.msra.mxu0 0.0
    %1954 = vmatprep.subr.mxu0 0.0
    %1955 = vmatpush1.xpose.msra.mxu0 0.0
    %1956 = vmatprep.subr.mxu0 0.0
    %1957 = vmatpush1.xpose.msra.mxu0 0.0
    %1958 = vmatprep.subr.mxu0 0.0
    %1959 = vmatpush1.xpose.msra.mxu0 0.0
    %1960 = vmatprep.subr.mxu0 0.0
    %1961 = vmatpush1.xpose.msra.mxu0 0.0
    %1962 = vmatprep.subr.mxu0 0.0
    %1963 = vmatpush1.xpose.msra.mxu0 0.0
    %1964 = vmatprep.subr.mxu0 0.0
    %1965 = vmatpush1.xpose.msra.mxu0 0.0
    %1966 = vmatprep.subr.mxu0 0.0
    %1967 = vmatpush1.xpose.msra.mxu0 0.0
    %1968 = vmatprep.subr.mxu0 0.0
    %1969 = vmatpush1.xpose.msra.mxu0 0.0
    %1970 = vmatprep.subr.mxu0 0.0
    %1971 = vmatpush1.xpose.msra.mxu0 0.0
    %1972 = vmatprep.subr.mxu0 0.0
    %1973 = vmatpush1.xpose.msra.mxu0 0.0
    %1974 = vmatprep.subr.mxu0 0.0
    %1975 = vmatpush1.xpose.msra.mxu0 0.0
    %1976 = vmatprep.subr.mxu0 0.0
    %1977 = vmatpush1.xpose.msra.mxu0 0.0
    %1978 = vmatprep.subr.mxu0 0.0
    %1979 = vmatpush1.xpose.msra.mxu0 0.0
    %1980 = vmatprep.subr.mxu0 0.0
    %1981 = vmatpush1.xpose.msra.mxu0 0.0
    %1982 = vmatprep.subr.mxu0 0.0
    %1983 = vmatpush1.xpose.msra.mxu0 0.0
    %1984 = vmatprep.mubr.f32.mxu0 0.0
    %1985 = vmatmul.mubr.f32.gmra.mrb[0].mxu0 %v1912
    %v1986 = vpop.f32.mrb[0].mxu0
    %v1987 = vadd.f32 0.0, %v1986
    %v1988 = vpop.f32.mrb[0].mxu0
    %1989 = vmatprep.mubr.f32.mxu0 0.0
    %1990 = vmatmul.mubr.f32.gmra.mrb[0].mxu0 %v1914
    %v1991 = vpop.f32.mrb[0].mxu0
    %v1992 = vadd.f32 0.0, %v1991
    %v1993 = vpop.f32.mrb[0].mxu0
    %1994 = vdwg.mxu0
    %v1995 = vmul.f32 %v1987, 0.35355338
    %v1996 = vmul.f32 %v1992, 0.35355338
    %v1997 = vadd.f32 %v1995, %v57
    %v1998 = vadd.f32 %v1996, %v58
    %v1999 = vsel %vm253, %v1997, -inf
    %2000 = vmax.xlane.f32.xlu0 %v1999
    %v2001 = vpop.xlane.xlu0 %2000
    %v2002 = vsel %vm253, %v1998, -inf
    %2003 = vmax.xlane.f32.xlu0 %v2002
    %v2004 = vpop.xlane.xlu0 %2003
    %v2005 = vsub.f32 %v1997, %v2001
    %v2006 = vsub.f32 %v1998, %v2004
    %v2007 = vmul.f32 %v2005, 1.442695
    %v2008 = vpow.pop %v2007
    %v2009 = vmul.f32 %v2006, 1.442695
    %v2010 = vpow.pop %v2009
    %v2011 = vsel %vm253, %v2008, 0.0
    %2012 = vadd.xlane.f32.xlu0 %v2011
    %v2013 = vpop.xlane.xlu0 %2012
    %v2014 = vsel %vm253, %v2010, 0.0
    %2015 = vadd.xlane.f32.xlu0 %v2014
    %v2016 = vpop.xlane.xlu0 %2015
    %v2017 = vrcp.pop %v2013
    %v2018 = vrcp.pop %v2016
    %v2019 = vmul.f32 %v2008, %v2017
    %v2020 = vmul.f32 %v2010, %v2018
    %2021 = vrot.lane.b32.xlu0 %v1900, 48
    %v2022 = vpop.permute.xlu0 %2021
    %2023 = vrot.lane.b32.xlu0 %v1901, 48
    %v2024 = vpop.permute.xlu0 %2023
    %v2028 = vsel %vm253, %v2019, 0
    %v2031 = vsel %vm253, %v2020, 0
    %2033 = vmatprep.subr.mxu0 0.0
    %2034 = vmatpush1.msra.mxu0 %v2022
    %2035 = vmatprep.subr.mxu0 0.0
    %2036 = vmatpush1.msra.mxu0 %v2024
    %2037 = vmatprep.subr.mxu0 0.0
    %2038 = vmatpush1.msra.mxu0 0.0
    %2039 = vmatprep.subr.mxu0 0.0
    %2040 = vmatpush1.msra.mxu0 0.0
    %2041 = vmatprep.subr.mxu0 0.0
    %2042 = vmatpush1.msra.mxu0 0.0
    %2043 = vmatprep.subr.mxu0 0.0
    %2044 = vmatpush1.msra.mxu0 0.0
    %2045 = vmatprep.subr.mxu0 0.0
    %2046 = vmatpush1.msra.mxu0 0.0
    %2047 = vmatprep.subr.mxu0 0.0
    %2048 = vmatpush1.msra.mxu0 0.0
    %2049 = vmatprep.subr.mxu0 0.0
    %2050 = vmatpush1.msra.mxu0 0.0
    %2051 = vmatprep.subr.mxu0 0.0
    %2052 = vmatpush1.msra.mxu0 0.0
    %2053 = vmatprep.subr.mxu0 0.0
    %2054 = vmatpush1.msra.mxu0 0.0
    %2055 = vmatprep.subr.mxu0 0.0
    %2056 = vmatpush1.msra.mxu0 0.0
    %2057 = vmatprep.subr.mxu0 0.0
    %2058 = vmatpush1.msra.mxu0 0.0
    %2059 = vmatprep.subr.mxu0 0.0
    %2060 = vmatpush1.msra.mxu0 0.0
    %2061 = vmatprep.subr.mxu0 0.0
    %2062 = vmatpush1.msra.mxu0 0.0
    %2063 = vmatprep.subr.mxu0 0.0
    %2064 = vmatpush1.msra.mxu0 0.0
    %2065 = vmatprep.subr.mxu0 0.0
    %2066 = vmatpush1.msra.mxu0 0.0
    %2067 = vmatprep.subr.mxu0 0.0
    %2068 = vmatpush1.msra.mxu0 0.0
    %2069 = vmatprep.subr.mxu0 0.0
    %2070 = vmatpush1.msra.mxu0 0.0
    %2071 = vmatprep.subr.mxu0 0.0
    %2072 = vmatpush1.msra.mxu0 0.0
    %2073 = vmatprep.subr.mxu0 0.0
    %2074 = vmatpush1.msra.mxu0 0.0
    %2075 = vmatprep.subr.mxu0 0.0
    %2076 = vmatpush1.msra.mxu0 0.0
    %2077 = vmatprep.subr.mxu0 0.0
    %2078 = vmatpush1.msra.mxu0 0.0
    %2079 = vmatprep.subr.mxu0 0.0
    %2080 = vmatpush1.msra.mxu0 0.0
    %2081 = vmatprep.subr.mxu0 0.0
    %2082 = vmatpush1.msra.mxu0 0.0
    %2083 = vmatprep.subr.mxu0 0.0
    %2084 = vmatpush1.msra.mxu0 0.0
    %2085 = vmatprep.subr.mxu0 0.0
    %2086 = vmatpush1.msra.mxu0 0.0
    %2087 = vmatprep.subr.mxu0 0.0
    %2088 = vmatpush1.msra.mxu0 0.0
    %2089 = vmatprep.subr.mxu0 0.0
    %2090 = vmatpush1.msra.mxu0 0.0
    %2091 = vmatprep.subr.mxu0 0.0
    %2092 = vmatpush1.msra.mxu0 0.0
    %2093 = vmatprep.subr.mxu0 0.0
    %2094 = vmatpush1.msra.mxu0 0.0
    %2095 = vmatprep.subr.mxu0 0.0
    %2096 = vmatpush1.msra.mxu0 0.0
    %2097 = vmatprep.mubr.f32.mxu0 0.0
    %2098 = vmatmul.mubr.f32.gmra.mrb[0].mxu0 %v2028
    %v2099 = vpop.f32.mrb[0].mxu0
    %v2100 = vadd.f32 0.0, %v2099
    %v2101 = vpop.f32.mrb[0].mxu0
    %2102 = vmatprep.mubr.f32.mxu0 0.0
    %2103 = vmatmul.mubr.f32.gmra.mrb[0].mxu0 %v2031
    %v2104 = vpop.f32.mrb[0].mxu0
    %v2105 = vadd.f32 0.0, %v2104
    %v2106 = vpop.f32.mrb[0].mxu0
    %2107 = vdwg.mxu0
    %2110 = vrot.lane.b32.xlu0 %v2100, 16
    %v2111 = vpop.permute.xlu0 %2110
    %2112 = vrot.lane.b32.xlu0 %v2105, 16
    %v2113 = vpop.permute.xlu0 %2112
    %2116 = vst.msk [vmem:[#allocation3] sm:$0xff] %vm800, %v2111
    %2117 = vst.msk [vmem:[#allocation3 + $0x8] sm:$0xff] %vm800, %v2113
    %v2118 = vld [vmem:[#allocation2] sm:$0xff]
    %v2119 = vld [vmem:[#allocation2 + $0x8] sm:$0xff]
    %2122 = vrot.lane.b32.xlu0 %v2118, 104
    %v2123 = vpop.permute.xlu0 %2122
    %2124 = vrot.lane.b32.xlu0 %v2119, 104
    %v2125 = vpop.permute.xlu0 %2124
    %2126 = vrot.lane.b32.xlu0 %v2118, 72
    %v2127 = vpop.permute.xlu0 %2126
    %2128 = vrot.lane.b32.xlu0 %v2119, 72
    %v2129 = vpop.permute.xlu0 %2128
    %v2130 = vsel %vm165, %v2123, 0
    %v2132 = vsel %vm165, %v2125, 0
    %v2134 = vsel %vm165, %v2127, 0
    %v2136 = vsel %vm165, %v2129, 0
    %2138 = vmatprep.subr.mxu0 0.0
    %2139 = vmatpush1.xpose.msra.mxu0 %v2134
    %2140 = vmatprep.subr.mxu0 0.0
    %2141 = vmatpush1.xpose.msra.mxu0 %v2136
    %2142 = vmatprep.subr.mxu0 0.0
    %2143 = vmatpush1.xpose.msra.mxu0 0.0
    %2144 = vmatprep.subr.mxu0 0.0
    %2145 = vmatpush1.xpose.msra.mxu0 0.0
    %2146 = vmatprep.subr.mxu0 0.0
    %2147 = vmatpush1.xpose.msra.mxu0 0.0
    %2148 = vmatprep.subr.mxu0 0.0
    %2149 = vmatpush1.xpose.msra.mxu0 0.0
    %2150 = vmatprep.subr.mxu0 0.0
    %2151 = vmatpush1.xpose.msra.mxu0 0.0
    %2152 = vmatprep.subr.mxu0 0.0
    %2153 = vmatpush1.xpose.msra.mxu0 0.0
    %2154 = vmatprep.subr.mxu0 0.0
    %2155 = vmatpush1.xpose.msra.mxu0 0.0
    %2156 = vmatprep.subr.mxu0 0.0
    %2157 = vmatpush1.xpose.msra.mxu0 0.0
    %2158 = vmatprep.subr.mxu0 0.0
    %2159 = vmatpush1.xpose.msra.mxu0 0.0
    %2160 = vmatprep.subr.mxu0 0.0
    %2161 = vmatpush1.xpose.msra.mxu0 0.0
    %2162 = vmatprep.subr.mxu0 0.0
    %2163 = vmatpush1.xpose.msra.mxu0 0.0
    %2164 = vmatprep.subr.mxu0 0.0
    %2165 = vmatpush1.xpose.msra.mxu0 0.0
    %2166 = vmatprep.subr.mxu0 0.0
    %2167 = vmatpush1.xpose.msra.mxu0 0.0
    %2168 = vmatprep.subr.mxu0 0.0
    %2169 = vmatpush1.xpose.msra.mxu0 0.0
    %2170 = vmatprep.subr.mxu0 0.0
    %2171 = vmatpush1.xpose.msra.mxu0 0.0
    %2172 = vmatprep.subr.mxu0 0.0
    %2173 = vmatpush1.xpose.msra.mxu0 0.0
    %2174 = vmatprep.subr.mxu0 0.0
    %2175 = vmatpush1.xpose.msra.mxu0 0.0
    %2176 = vmatprep.subr.mxu0 0.0
    %2177 = vmatpush1.xpose.msra.mxu0 0.0
    %2178 = vmatprep.subr.mxu0 0.0
    %2179 = vmatpush1.xpose.msra.mxu0 0.0
    %2180 = vmatprep.subr.mxu0 0.0
    %2181 = vmatpush1.xpose.msra.mxu0 0.0
    %2182 = vmatprep.subr.mxu0 0.0
    %2183 = vmatpush1.xpose.msra.mxu0 0.0
    %2184 = vmatprep.subr.mxu0 0.0
    %2185 = vmatpush1.xpose.msra.mxu0 0.0
    %2186 = vmatprep.subr.mxu0 0.0
    %2187 = vmatpush1.xpose.msra.mxu0 0.0
    %2188 = vmatprep.subr.mxu0 0.0
    %2189 = vmatpush1.xpose.msra.mxu0 0.0
    %2190 = vmatprep.subr.mxu0 0.0
    %2191 = vmatpush1.xpose.msra.mxu0 0.0
    %2192 = vmatprep.subr.mxu0 0.0
    %2193 = vmatpush1.xpose.msra.mxu0 0.0
    %2194 = vmatprep.subr.mxu0 0.0
    %2195 = vmatpush1.xpose.msra.mxu0 0.0
    %2196 = vmatprep.subr.mxu0 0.0
    %2197 = vmatpush1.xpose.msra.mxu0 0.0
    %2198 = vmatprep.subr.mxu0 0.0
    %2199 = vmatpush1.xpose.msra.mxu0 0.0
    %2200 = vmatprep.subr.mxu0 0.0
    %2201 = vmatpush1.xpose.msra.mxu0 0.0
    %2202 = vmatprep.mubr.f32.mxu0 0.0
    %2203 = vmatmul.mubr.f32.gmra.mrb[0].mxu0 %v2130
    %v2204 = vpop.f32.mrb[0].mxu0
    %v2205 = vadd.f32 0.0, %v2204
    %v2206 = vpop.f32.mrb[0].mxu0
    %2207 = vmatprep.mubr.f32.mxu0 0.0
    %2208 = vmatmul.mubr.f32.gmra.mrb[0].mxu0 %v2132
    %v2209 = vpop.f32.mrb[0].mxu0
    %v2210 = vadd.f32 0.0, %v2209
    %v2211 = vpop.f32.mrb[0].mxu0
    %2212 = vdwg.mxu0
    %v2213 = vmul.f32 %v2205, 0.35355338
    %v2214 = vmul.f32 %v2210, 0.35355338
    %v2215 = vadd.f32 %v2213, %v57
    %v2216 = vadd.f32 %v2214, %v58
    %v2217 = vsel %vm253, %v2215, -inf
    %2218 = vmax.xlane.f32.xlu0 %v2217
    %v2219 = vpop.xlane.xlu0 %2218
    %v2220 = vsel %vm253, %v2216, -inf
    %2221 = vmax.xlane.f32.xlu0 %v2220
    %v2222 = vpop.xlane.xlu0 %2221
    %v2223 = vsub.f32 %v2215, %v2219
    %v2224 = vsub.f32 %v2216, %v2222
    %v2225 = vmul.f32 %v2223, 1.442695
    %v2226 = vpow.pop %v2225
    %v2227 = vmul.f32 %v2224, 1.442695
    %v2228 = vpow.pop %v2227
    %v2229 = vsel %vm253, %v2226, 0.0
    %2230 = vadd.xlane.f32.xlu0 %v2229
    %v2231 = vpop.xlane.xlu0 %2230
    %v2232 = vsel %vm253, %v2228, 0.0
    %2233 = vadd.xlane.f32.xlu0 %v2232
    %v2234 = vpop.xlane.xlu0 %2233
    %v2235 = vrcp.pop %v2231
    %v2236 = vrcp.pop %v2234
    %v2237 = vmul.f32 %v2226, %v2235
    %v2238 = vmul.f32 %v2228, %v2236
    %2239 = vrot.lane.b32.xlu0 %v2118, 40
    %v2240 = vpop.permute.xlu0 %2239
    %2241 = vrot.lane.b32.xlu0 %v2119, 40
    %v2242 = vpop.permute.xlu0 %2241
    %v2246 = vsel %vm253, %v2237, 0
    %v2249 = vsel %vm253, %v2238, 0
    %2251 = vmatprep.subr.mxu0 0.0
    %2252 = vmatpush1.msra.mxu0 %v2240
    %2253 = vmatprep.subr.mxu0 0.0
    %2254 = vmatpush1.msra.mxu0 %v2242
    %2255 = vmatprep.subr.mxu0 0.0
    %2256 = vmatpush1.msra.mxu0 0.0
    %2257 = vmatprep.subr.mxu0 0.0
    %2258 = vmatpush1.msra.mxu0 0.0
    %2259 = vmatprep.subr.mxu0 0.0
    %2260 = vmatpush1.msra.mxu0 0.0
    %2261 = vmatprep.subr.mxu0 0.0
    %2262 = vmatpush1.msra.mxu0 0.0
    %2263 = vmatprep.subr.mxu0 0.0
    %2264 = vmatpush1.msra.mxu0 0.0
    %2265 = vmatprep.subr.mxu0 0.0
    %2266 = vmatpush1.msra.mxu0 0.0
    %2267 = vmatprep.subr.mxu0 0.0
    %2268 = vmatpush1.msra.mxu0 0.0
    %2269 = vmatprep.subr.mxu0 0.0
    %2270 = vmatpush1.msra.mxu0 0.0
    %2271 = vmatprep.subr.mxu0 0.0
    %2272 = vmatpush1.msra.mxu0 0.0
    %2273 = vmatprep.subr.mxu0 0.0
    %2274 = vmatpush1.msra.mxu0 0.0
    %2275 = vmatprep.subr.mxu0 0.0
    %2276 = vmatpush1.msra.mxu0 0.0
    %2277 = vmatprep.subr.mxu0 0.0
    %2278 = vmatpush1.msra.mxu0 0.0
    %2279 = vmatprep.subr.mxu0 0.0
    %2280 = vmatpush1.msra.mxu0 0.0
    %2281 = vmatprep.subr.mxu0 0.0
    %2282 = vmatpush1.msra.mxu0 0.0
    %2283 = vmatprep.subr.mxu0 0.0
    %2284 = vmatpush1.msra.mxu0 0.0
    %2285 = vmatprep.subr.mxu0 0.0
    %2286 = vmatpush1.msra.mxu0 0.0
    %2287 = vmatprep.subr.mxu0 0.0
    %2288 = vmatpush1.msra.mxu0 0.0
    %2289 = vmatprep.subr.mxu0 0.0
    %2290 = vmatpush1.msra.mxu0 0.0
    %2291 = vmatprep.subr.mxu0 0.0
    %2292 = vmatpush1.msra.mxu0 0.0
    %2293 = vmatprep.subr.mxu0 0.0
    %2294 = vmatpush1.msra.mxu0 0.0
    %2295 = vmatprep.subr.mxu0 0.0
    %2296 = vmatpush1.msra.mxu0 0.0
    %2297 = vmatprep.subr.mxu0 0.0
    %2298 = vmatpush1.msra.mxu0 0.0
    %2299 = vmatprep.subr.mxu0 0.0
    %2300 = vmatpush1.msra.mxu0 0.0
    %2301 = vmatprep.subr.mxu0 0.0
    %2302 = vmatpush1.msra.mxu0 0.0
    %2303 = vmatprep.subr.mxu0 0.0
    %2304 = vmatpush1.msra.mxu0 0.0
    %2305 = vmatprep.subr.mxu0 0.0
    %2306 = vmatpush1.msra.mxu0 0.0
    %2307 = vmatprep.subr.mxu0 0.0
    %2308 = vmatpush1.msra.mxu0 0.0
    %2309 = vmatprep.subr.mxu0 0.0
    %2310 = vmatpush1.msra.mxu0 0.0
    %2311 = vmatprep.subr.mxu0 0.0
    %2312 = vmatpush1.msra.mxu0 0.0
    %2313 = vmatprep.subr.mxu0 0.0
    %2314 = vmatpush1.msra.mxu0 0.0
    %2315 = vmatprep.mubr.f32.mxu0 0.0
    %2316 = vmatmul.mubr.f32.gmra.mrb[0].mxu0 %v2246
    %v2317 = vpop.f32.mrb[0].mxu0
    %v2318 = vadd.f32 0.0, %v2317
    %v2319 = vpop.f32.mrb[0].mxu0
    %2320 = vmatprep.mubr.f32.mxu0 0.0
    %2321 = vmatmul.mubr.f32.gmra.mrb[0].mxu0 %v2249
    %v2322 = vpop.f32.mrb[0].mxu0
    %v2323 = vadd.f32 0.0, %v2322
    %v2324 = vpop.f32.mrb[0].mxu0
    %2325 = vdwg.mxu0
    %2328 = vrot.lane.b32.xlu0 %v2318, 24
    %v2329 = vpop.permute.xlu0 %2328
    %2330 = vrot.lane.b32.xlu0 %v2323, 24
    %v2331 = vpop.permute.xlu0 %2330
    %2334 = vst.msk [vmem:[#allocation3] sm:$0xff] %vm1019, %v2329
    %2335 = vst.msk [vmem:[#allocation3 + $0x8] sm:$0xff] %vm1019, %v2331
    %v2336 = vld [vmem:[#allocation3] sm:$0xff]
    %v2337 = vld [vmem:[#allocation3 + $0x8] sm:$0xff]
    %s2338 = scalar_lea.vmem %s3, 32
    %v2339 = vld [vmem:[%s2338] sm:$0xff]
    %v2340 = vld [vmem:[%s2338 + $0x8] sm:$0xff]
    %v2341 = vld [vmem:[%s2338 + $0x10] sm:$0xff]
    %v2342 = vld [vmem:[%s2338 + $0x18] sm:$0xff]
    %2343 = vrot.lane.b32.xlu0 %v1391, 32
    %v2344 = vpop.permute.xlu0 %2343
    %v2347 = vsel %vm72, %v2336, 0
    %v2350 = vsel %vm72, %v2337, 0
    %2352 = vmatprep.subr.mxu0 0.0
    %2353 = vmatpush1.msra.mxu0 %v2339
    %2354 = vmatprep.subr.mxu0 0.0
    %2355 = vmatpush1.msra.mxu0 %v2340
    %2356 = vmatprep.subr.mxu0 0.0
    %2357 = vmatpush1.msra.mxu0 %v2341
    %2358 = vmatprep.subr.mxu0 0.0
    %2359 = vmatpush1.msra.mxu0 %v2342
    %2360 = vmatprep.subr.mxu0 0.0
    %2361 = vmatpush1.msra.mxu0 0.0
    %2362 = vmatprep.subr.mxu0 0.0
    %2363 = vmatpush1.msra.mxu0 0.0
    %2364 = vmatprep.subr.mxu0 0.0
    %2365 = vmatpush1.msra.mxu0 0.0
    %2366 = vmatprep.subr.mxu0 0.0
    %2367 = vmatpush1.msra.mxu0 0.0
    %2368 = vmatprep.subr.mxu0 0.0
    %2369 = vmatpush1.msra.mxu0 0.0
    %2370 = vmatprep.subr.mxu0 0.0
    %2371 = vmatpush1.msra.mxu0 0.0
    %2372 = vmatprep.subr.mxu0 0.0
    %2373 = vmatpush1.msra.mxu0 0.0
    %2374 = vmatprep.subr.mxu0 0.0
    %2375 = vmatpush1.msra.mxu0 0.0
    %2376 = vmatprep.subr.mxu0 0.0
    %2377 = vmatpush1.msra.mxu0 0.0
    %2378 = vmatprep.subr.mxu0 0.0
    %2379 = vmatpush1.msra.mxu0 0.0
    %2380 = vmatprep.subr.mxu0 0.0
    %2381 = vmatpush1.msra.mxu0 0.0
    %2382 = vmatprep.subr.mxu0 0.0
    %2383 = vmatpush1.msra.mxu0 0.0
    %2384 = vmatprep.subr.mxu0 0.0
    %2385 = vmatpush1.msra.mxu0 0.0
    %2386 = vmatprep.subr.mxu0 0.0
    %2387 = vmatpush1.msra.mxu0 0.0
    %2388 = vmatprep.subr.mxu0 0.0
    %2389 = vmatpush1.msra.mxu0 0.0
    %2390 = vmatprep.subr.mxu0 0.0
    %2391 = vmatpush1.msra.mxu0 0.0
    %2392 = vmatprep.subr.mxu0 0.0
    %2393 = vmatpush1.msra.mxu0 0.0
    %2394 = vmatprep.subr.mxu0 0.0
    %2395 = vmatpush1.msra.mxu0 0.0
    %2396 = vmatprep.subr.mxu0 0.0
    %2397 = vmatpush1.msra.mxu0 0.0
    %2398 = vmatprep.subr.mxu0 0.0
    %2399 = vmatpush1.msra.mxu0 0.0
    %2400 = vmatprep.subr.mxu0 0.0
    %2401 = vmatpush1.msra.mxu0 0.0
    %2402 = vmatprep.subr.mxu0 0.0
    %2403 = vmatpush1.msra.mxu0 0.0
    %2404 = vmatprep.subr.mxu0 0.0
    %2405 = vmatpush1.msra.mxu0 0.0
    %2406 = vmatprep.subr.mxu0 0.0
    %2407 = vmatpush1.msra.mxu0 0.0
    %2408 = vmatprep.subr.mxu0 0.0
    %2409 = vmatpush1.msra.mxu0 0.0
    %2410 = vmatprep.subr.mxu0 0.0
    %2411 = vmatpush1.msra.mxu0 0.0
    %2412 = vmatprep.subr.mxu0 0.0
    %2413 = vmatpush1.msra.mxu0 0.0
    %2414 = vmatprep.subr.mxu0 0.0
    %2415 = vmatpush1.msra.mxu0 0.0
    %2416 = vmatprep.mubr.f32.mxu0 0.0
    %2417 = vmatmul.mubr.f32.gmra.mrb[0].mxu0 %v2347
    %v2418 = vpop.f32.mrb[0].mxu0
    %v2419 = vadd.f32 %v2344, %v2418
    %v2420 = vpop.f32.mrb[0].mxu0
    %2421 = vmatprep.mubr.f32.mxu0 0.0
    %2422 = vmatmul.mubr.f32.gmra.mrb[0].mxu0 %v2350
    %v2423 = vpop.f32.mrb[0].mxu0
    %v2424 = vadd.f32 %v2344, %v2423
    %v2425 = vpop.f32.mrb[0].mxu0
    %2426 = vdwg.mxu0
    %v2427 = vadd.f32 %v1376, %v2419
    %v2428 = vadd.f32 %v1377, %v2424
    %v2429 = vsel %vm72, %v2427, 0.0
    %2430 = vadd.xlane.f32.xlu0 %v2429
    %v2431 = vpop.xlane.xlu0 %2430
    %v2432 = vsel %vm72, %v2428, 0.0
    %2433 = vadd.xlane.f32.xlu0 %v2432
    %v2434 = vpop.xlane.xlu0 %2433
    %v2435 = vmul.f32 %v2431, %v1120
    %v2436 = vmul.f32 %v2434, %v1120
    %v2437 = vsub.f32 %v2427, %v2435
    %v2438 = vsub.f32 %v2428, %v2436
    %v2439 = vmul.f32 %v2437, %v2437
    %v2440 = vmul.f32 %v2438, %v2438
    %v2441 = vsel %vm72, %v2439, 0.0
    %2442 = vadd.xlane.f32.xlu0 %v2441
    %v2443 = vpop.xlane.xlu0 %2442
    %v2444 = vsel %vm72, %v2440, 0.0
    %2445 = vadd.xlane.f32.xlu0 %v2444
    %v2446 = vpop.xlane.xlu0 %2445
    %v2447 = vmul.f32 %v2443, %v1120
    %v2448 = vmul.f32 %v2446, %v1120
    %v2449 = vadd.f32 %v2447, 1e-05
    %v2450 = vadd.f32 %v2448, 1e-05
    %v2451 = vrsqrt.pop %v2449
    %v2452 = vrsqrt.pop %v2450
    %v2453 = vmul.f32 %v2437, %v2451
    %v2454 = vmul.f32 %v2438, %v2452
    %v2456 = vlaneseq
    %v2457 = vshrl.u32 %v2456, 7
    %v2458 = vsub.s32 0, %v2457
    %v2459 = vrot.slane %v1380, %v2458
    %v2461 = vmul.f32 %v2453, %v2459
    %v2462 = vmul.f32 %v2454, %v2459
    %2463 = vrot.lane.b32.xlu0 %v2459, 96
    %v2464 = vpop.permute.xlu0 %2463
    %v2466 = vadd.f32 %v2461, %v2464
    %v2467 = vadd.f32 %v2462, %v2464
    %s2468 = scalar_lea.vmem %s4, 32
    %v2469 = vld [vmem:[%s2468] sm:$0xff]
    %v2470 = vld [vmem:[%s2468 + $0x8] sm:$0xff]
    %v2471 = vld [vmem:[%s2468 + $0x10] sm:$0xff]
    %v2472 = vld [vmem:[%s2468 + $0x18] sm:$0xff]
    %2473 = vrot.lane.b32.xlu0 %v2459, 64
    %v2474 = vpop.permute.xlu0 %2473
    %v2477 = vsel %vm72, %v2466, 0
    %v2480 = vsel %vm72, %v2467, 0
    %2482 = vmatprep.subr.mxu0 0.0
    %2483 = vmatpush1.msra.mxu0 %v2469
    %2484 = vmatprep.subr.mxu0 0.0
    %2485 = vmatpush1.msra.mxu0 %v2470
    %2486 = vmatprep.subr.mxu0 0.0
    %2487 = vmatpush1.msra.mxu0 %v2471
    %2488 = vmatprep.subr.mxu0 0.0
    %2489 = vmatpush1.msra.mxu0 %v2472
    %2490 = vmatprep.subr.mxu0 0.0
    %2491 = vmatpush1.msra.mxu0 0.0
    %2492 = vmatprep.subr.mxu0 0.0
    %2493 = vmatpush1.msra.mxu0 0.0
    %2494 = vmatprep.subr.mxu0 0.0
    %2495 = vmatpush1.msra.mxu0 0.0
    %2496 = vmatprep.subr.mxu0 0.0
    %2497 = vmatpush1.msra.mxu0 0.0
    %2498 = vmatprep.subr.mxu0 0.0
    %2499 = vmatpush1.msra.mxu0 0.0
    %2500 = vmatprep.subr.mxu0 0.0
    %2501 = vmatpush1.msra.mxu0 0.0
    %2502 = vmatprep.subr.mxu0 0.0
    %2503 = vmatpush1.msra.mxu0 0.0
    %2504 = vmatprep.subr.mxu0 0.0
    %2505 = vmatpush1.msra.mxu0 0.0
    %2506 = vmatprep.subr.mxu0 0.0
    %2507 = vmatpush1.msra.mxu0 0.0
    %2508 = vmatprep.subr.mxu0 0.0
    %2509 = vmatpush1.msra.mxu0 0.0
    %2510 = vmatprep.subr.mxu0 0.0
    %2511 = vmatpush1.msra.mxu0 0.0
    %2512 = vmatprep.subr.mxu0 0.0
    %2513 = vmatpush1.msra.mxu0 0.0
    %2514 = vmatprep.subr.mxu0 0.0
    %2515 = vmatpush1.msra.mxu0 0.0
    %2516 = vmatprep.subr.mxu0 0.0
    %2517 = vmatpush1.msra.mxu0 0.0
    %2518 = vmatprep.subr.mxu0 0.0
    %2519 = vmatpush1.msra.mxu0 0.0
    %2520 = vmatprep.subr.mxu0 0.0
    %2521 = vmatpush1.msra.mxu0 0.0
    %2522 = vmatprep.subr.mxu0 0.0
    %2523 = vmatpush1.msra.mxu0 0.0
    %2524 = vmatprep.subr.mxu0 0.0
    %2525 = vmatpush1.msra.mxu0 0.0
    %2526 = vmatprep.subr.mxu0 0.0
    %2527 = vmatpush1.msra.mxu0 0.0
    %2528 = vmatprep.subr.mxu0 0.0
    %2529 = vmatpush1.msra.mxu0 0.0
    %2530 = vmatprep.subr.mxu0 0.0
    %2531 = vmatpush1.msra.mxu0 0.0
    %2532 = vmatprep.subr.mxu0 0.0
    %2533 = vmatpush1.msra.mxu0 0.0
    %2534 = vmatprep.subr.mxu0 0.0
    %2535 = vmatpush1.msra.mxu0 0.0
    %2536 = vmatprep.subr.mxu0 0.0
    %2537 = vmatpush1.msra.mxu0 0.0
    %2538 = vmatprep.subr.mxu0 0.0
    %2539 = vmatpush1.msra.mxu0 0.0
    %2540 = vmatprep.subr.mxu0 0.0
    %2541 = vmatpush1.msra.mxu0 0.0
    %2542 = vmatprep.subr.mxu0 0.0
    %2543 = vmatpush1.msra.mxu0 0.0
    %2544 = vmatprep.subr.mxu0 0.0
    %2545 = vmatpush1.msra.mxu0 0.0
    %2546 = vmatprep.mubr.f32.mxu0 0.0
    %2547 = vmatmul.mubr.f32.gmra.mrb[0].mxu0 %v2477
    %v2548 = vpop.f32.mrb[0].mxu0
    %v2549 = vadd.f32 %v2474, %v2548
    %v2550 = vpop.f32.mrb[0].mxu0
    %2551 = vmatprep.mubr.f32.mxu0 0.0
    %2552 = vmatmul.mubr.f32.gmra.mrb[0].mxu0 %v2480
    %v2553 = vpop.f32.mrb[0].mxu0
    %v2554 = vadd.f32 %v2474, %v2553
    %v2555 = vpop.f32.mrb[0].mxu0
    %2556 = vdwg.mxu0
    %v2557 = vmax.f32 %v2549, 0.0
    %v2558 = vmax.f32 %v2554, 0.0
    %s2559 = scalar_lea.vmem %s5, 64
    %v2560 = vld [vmem:[%s2559] sm:$0xff]
    %v2561 = vld [vmem:[%s2559 + $0x8] sm:$0xff]
    %v2562 = vld [vmem:[%s2559 + $0x10] sm:$0xff]
    %v2563 = vld [vmem:[%s2559 + $0x18] sm:$0xff]
    %v2564 = vld [vmem:[%s2559 + $0x20] sm:$0xff]
    %v2565 = vld [vmem:[%s2559 + $0x28] sm:$0xff]
    %v2566 = vld [vmem:[%s2559 + $0x30] sm:$0xff]
    %v2567 = vld [vmem:[%s2559 + $0x38] sm:$0xff]
    %v2569 = vlaneseq
    %v2570 = vshrl.u32 %v2569, 7
    %v2571 = vsub.s32 0, %v2570
    %v2572 = vrot.slane %v1381, %v2571
    %v2575 = vsel %vm1258, %v2557, 0
    %v2578 = vsel %vm1258, %v2558, 0
    %2580 = vmatprep.subr.mxu0 0.0
    %2581 = vmatpush1.msra.mxu0 %v2560
    %2582 = vmatprep.subr.mxu0 0.0
    %2583 = vmatpush1.msra.mxu0 %v2561
    %2584 = vmatprep.subr.mxu0 0.0
    %2585 = vmatpush1.msra.mxu0 %v2562
    %2586 = vmatprep.subr.mxu0 0.0
    %2587 = vmatpush1.msra.mxu0 %v2563
    %2588 = vmatprep.subr.mxu0 0.0
    %2589 = vmatpush1.msra.mxu0 %v2564
    %2590 = vmatprep.subr.mxu0 0.0
    %2591 = vmatpush1.msra.mxu0 %v2565
    %2592 = vmatprep.subr.mxu0 0.0
    %2593 = vmatpush1.msra.mxu0 %v2566
    %2594 = vmatprep.subr.mxu0 0.0
    %2595 = vmatpush1.msra.mxu0 %v2567
    %2596 = vmatprep.subr.mxu0 0.0
    %2597 = vmatpush1.msra.mxu0 0.0
    %2598 = vmatprep.subr.mxu0 0.0
    %2599 = vmatpush1.msra.mxu0 0.0
    %2600 = vmatprep.subr.mxu0 0.0
    %2601 = vmatpush1.msra.mxu0 0.0
    %2602 = vmatprep.subr.mxu0 0.0
    %2603 = vmatpush1.msra.mxu0 0.0
    %2604 = vmatprep.subr.mxu0 0.0
    %2605 = vmatpush1.msra.mxu0 0.0
    %2606 = vmatprep.subr.mxu0 0.0
    %2607 = vmatpush1.msra.mxu0 0.0
    %2608 = vmatprep.subr.mxu0 0.0
    %2609 = vmatpush1.msra.mxu0 0.0
    %2610 = vmatprep.subr.mxu0 0.0
    %2611 = vmatpush1.msra.mxu0 0.0
    %2612 = vmatprep.subr.mxu0 0.0
    %2613 = vmatpush1.msra.mxu0 0.0
    %2614 = vmatprep.subr.mxu0 0.0
    %2615 = vmatpush1.msra.mxu0 0.0
    %2616 = vmatprep.subr.mxu0 0.0
    %2617 = vmatpush1.msra.mxu0 0.0
    %2618 = vmatprep.subr.mxu0 0.0
    %2619 = vmatpush1.msra.mxu0 0.0
    %2620 = vmatprep.subr.mxu0 0.0
    %2621 = vmatpush1.msra.mxu0 0.0
    %2622 = vmatprep.subr.mxu0 0.0
    %2623 = vmatpush1.msra.mxu0 0.0
    %2624 = vmatprep.subr.mxu0 0.0
    %2625 = vmatpush1.msra.mxu0 0.0
    %2626 = vmatprep.subr.mxu0 0.0
    %2627 = vmatpush1.msra.mxu0 0.0
    %2628 = vmatprep.subr.mxu0 0.0
    %2629 = vmatpush1.msra.mxu0 0.0
    %2630 = vmatprep.subr.mxu0 0.0
    %2631 = vmatpush1.msra.mxu0 0.0
    %2632 = vmatprep.subr.mxu0 0.0
    %2633 = vmatpush1.msra.mxu0 0.0
    %2634 = vmatprep.subr.mxu0 0.0
    %2635 = vmatpush1.msra.mxu0 0.0
    %2636 = vmatprep.subr.mxu0 0.0
    %2637 = vmatpush1.msra.mxu0 0.0
    %2638 = vmatprep.subr.mxu0 0.0
    %2639 = vmatpush1.msra.mxu0 0.0
    %2640 = vmatprep.subr.mxu0 0.0
    %2641 = vmatpush1.msra.mxu0 0.0
    %2642 = vmatprep.subr.mxu0 0.0
    %2643 = vmatpush1.msra.mxu0 0.0
    %2644 = vmatprep.mubr.f32.mxu0 0.0
    %2645 = vmatmul.mubr.f32.gmra.mrb[0].mxu0 %v2575
    %v2646 = vpop.f32.mrb[0].mxu0
    %v2647 = vadd.f32 %v2572, %v2646
    %v2648 = vpop.f32.mrb[0].mxu0
    %2649 = vmatprep.mubr.f32.mxu0 0.0
    %2650 = vmatmul.mubr.f32.gmra.mrb[0].mxu0 %v2578
    %v2651 = vpop.f32.mrb[0].mxu0
    %v2652 = vadd.f32 %v2572, %v2651
    %v2653 = vpop.f32.mrb[0].mxu0
    %2654 = vdwg.mxu0
    %v2655 = vadd.f32 %v2466, %v2647
    %v2656 = vadd.f32 %v2467, %v2652
    %v2657 = vsel %vm72, %v2655, 0.0
    %2658 = vadd.xlane.f32.xlu0 %v2657
    %v2659 = vpop.xlane.xlu0 %2658
    %v2660 = vsel %vm72, %v2656, 0.0
    %2661 = vadd.xlane.f32.xlu0 %v2660
    %v2662 = vpop.xlane.xlu0 %2661
    %v2663 = vmul.f32 %v2659, %v1120
    %v2664 = vmul.f32 %v2662, %v1120
    %v2665 = vsub.f32 %v2655, %v2663
    %v2666 = vsub.f32 %v2656, %v2664
    %v2667 = vmul.f32 %v2665, %v2665
    %v2668 = vmul.f32 %v2666, %v2666
    %v2669 = vsel %vm72, %v2667, 0.0
    %2670 = vadd.xlane.f32.xlu0 %v2669
    %v2671 = vpop.xlane.xlu0 %2670
    %v2672 = vsel %vm72, %v2668, 0.0
    %2673 = vadd.xlane.f32.xlu0 %v2672
    %v2674 = vpop.xlane.xlu0 %2673
    %v2675 = vmul.f32 %v2671, %v1120
    %v2676 = vmul.f32 %v2674, %v1120
    %v2677 = vadd.f32 %v2675, 1e-05
    %v2678 = vadd.f32 %v2676, 1e-05
    %v2679 = vrsqrt.pop %v2677
    %v2680 = vrsqrt.pop %v2678
    %v2681 = vmul.f32 %v2665, %v2679
    %v2682 = vmul.f32 %v2666, %v2680
    %2683 = vrot.lane.b32.xlu0 %v2572, 96
    %v2684 = vpop.permute.xlu0 %2683
    %v2686 = vmul.f32 %v2681, %v2684
    %v2687 = vmul.f32 %v2682, %v2684
    %2688 = vrot.lane.b32.xlu0 %v2572, 64
    %v2689 = vpop.permute.xlu0 %2688
    %v2691 = vadd.f32 %v2686, %v2689
    %v2692 = vadd.f32 %v2687, %v2689
    %2693 = vst.msk [vmem:[#allocation9] sm:$0xff] %vm72, %v2691
    %2694 = vst.msk [vmem:[#allocation9 + $0x8] sm:$0xff] %vm72, %v2692
    // Predicated region
    $region38: #{tpu_custom_call.1} parent=1 // pred_check
      _
    $region39: #{tpu_custom_call.1} parent=1 // pred_check_branch
      %2696 = sbr.rel (0) target = $region41
    $region40: #{tpu_custom_call.1} parent=1 // pred_region
      %s2698 = ssub.s32 256, 256
      %2699 = vsyncadd [#allocation6], %s2698
      %s2700 = sshll.u32 [#allocation9], 4
      %s2701 = int_to_ptr.vmem [resolvable:$true] %s2700
      %2706 = dma.vmem_to_hbm [thread:$0]  %s2701, 256, %s7, [#allocation6], 128, 128, 8
    $region41: #{tpu_custom_call.1} parent=1 // pred_fallthru
      _
    // Predicated region
    $region42: #{tpu_custom_call.1} parent=1 // pred_check
      _
    $region43: #{tpu_custom_call.1} parent=1 // pred_check_branch
      %2708 = sbr.rel (0) target = $region45
    $region44: #{tpu_custom_call.1} parent=1 // pred_region
      %2709 = dma.done [#allocation6], 256
    $region45: #{tpu_custom_call.1} parent=1 // pred_fallthru
      _
    %2710 = vsyncpa [#allocation5], 1
    %2711 = vsyncpa [#allocation8], 1
    %2712 = vsyncpa [#allocation6], 1

</llo_original>
